<compile_context>
chip_gen: v7x
topology: tpu7x:2x2x1
jax: 0.10.0
libtpu: 0.0.40
codegen_flags: <defaults>
</compile_context>

<pallas_src>
import functools

import jax
import jax.numpy as jnp
from jax import lax
from jax.experimental import pallas as pl
from jax.experimental.pallas import tpu as pltpu

# ---- small synthetic BERT config (shapes scaled down from bert-base-chinese) ----
VOCAB = 100
MAX_POS = 64
TYPE_VOCAB = 2
HIDDEN = 32          # 768 in bert-base
N_HEADS = 2          # 12 in bert-base
HEAD_DIM = HIDDEN // N_HEADS
INTERMEDIATE = 64    # 3072 in bert-base
N_LAYERS = 2         # 12 in bert-base
N_CLASSES = 2
LN_EPS = 1e-12


# ---------------------------- in-kernel helpers ----------------------------

def _ln(x, g, b):
    """fp32 LayerNorm over the last (lane) axis."""
    mean = jnp.mean(x, axis=-1, keepdims=True)
    var = jnp.mean(jnp.square(x - mean), axis=-1, keepdims=True)
    return (x - mean) * lax.rsqrt(var + LN_EPS) * g + b


def _softmax_lastdim(s):
    s = s - jnp.max(s, axis=-1, keepdims=True)
    p = jnp.exp(s)
    return p * pl.reciprocal(jnp.sum(p, axis=-1, keepdims=True), approx=True)


# ---------------------------- fused forward kernel ----------------------------

def _fused_bert_kernel(x_ref, mask_ref,
                       emb_g_ref, emb_b_ref,
                       wq_ref, wk_ref, wv_ref,
                       bq_ref, bk_ref, bv_ref,
                       wo_ref, bo_ref,
                       ln1_g_ref, ln1_b_ref,
                       w1_ref, b1_ref, w2_ref, b2_ref,
                       ln2_g_ref, ln2_b_ref,
                       cls_w_ref, cls_b_ref,
                       o_ref, *,
                       n_layers, n_heads, batch, seq, scale):
    f32 = jnp.float32
    bf16 = jnp.bfloat16

    # Embedding LayerNorm fused in (no standalone kernel / HBM round-trip).
    x = _ln(x_ref[...].astype(f32), emb_g_ref[...], emb_b_ref[...])     # (B*S, H) fp32

    # Additive attention-mask bias, built in-VMEM: (B, 1, S)
    mask = mask_ref[...].astype(f32)

    # Residual stream stays resident across all layers (pure values in VMEM/vregs).
    for l in range(n_layers):                       # static unroll, small fixed L
        x_bf = x.astype(bf16)
        attn_rows = []
        for b in range(batch):                      # static unroll, small fixed B
            xb = x_bf[b * seq:(b + 1) * seq, :]     # 8-aligned SUBLANE slice (S, H)
            bias = (mask[b] - 1.0) * 1e9            # (1, S)
            ob = jnp.zeros((seq, x.shape[-1]), f32)
            for h in range(n_heads):                # head-major weights: leading-axis
                                                    # indexing only, no lane slices
                qh = jnp.dot(xb, wq_ref[l, h],
                             preferred_element_type=f32) + bq_ref[l, h]        # (S, dH)
                kh = jnp.dot(xb, wk_ref[l, h],
                             preferred_element_type=f32) + bk_ref[l, h]        # (S, dH)
                vh = (jnp.dot(xb, wv_ref[l, h],
                              preferred_element_type=f32) + bv_ref[l, h]).astype(bf16)
                # q @ k^T contracting last axes (no explicit transpose)
                s = lax.dot_general(qh.astype(bf16), kh.astype(bf16),
                                    (((1,), (1,)), ((), ())),
                                    preferred_element_type=f32) * scale + bias
                p = _softmax_lastdim(s)                                         # (S, S) fp32
                ctx = jnp.dot(p.astype(bf16), vh, preferred_element_type=f32)   # (S, dH)
                # head-merge fused with output projection: sum_h ctx_h @ Wo_h
                ob = ob + jnp.dot(ctx.astype(bf16), wo_ref[l, h],
                                  preferred_element_type=f32)
            attn_rows.append(ob)
        attn = jnp.concatenate(attn_rows, axis=0) + bo_ref[l]                   # (B*S, H)

        # residual + LN, FFN(GELU), residual + LN  -- fp32 epilogue math
        x1 = _ln(x + attn, ln1_g_ref[l], ln1_b_ref[l])
        ffn = jnp.dot(x1.astype(bf16), w1_ref[l], preferred_element_type=f32) + b1_ref[l]
        # TODO(synk): HF BERT default is exact erf-GELU; tanh approximation is
        # EUP-friendly and numerically very close.
        ffn = jax.nn.gelu(ffn, approximate=True)
        ffn = jnp.dot(ffn.astype(bf16), w2_ref[l], preferred_element_type=f32) + b2_ref[l]
        x = _ln(x1 + ffn, ln2_g_ref[l], ln2_b_ref[l])

    # CLS rows (token 0 of each batch element) -> classifier, all in-kernel.
    cls = jnp.concatenate([x[b * seq:b * seq + 1, :] for b in range(batch)], axis=0)  # (B, H)
    # dropout(0.1) is identity in eval mode.
    o_ref[...] = jnp.dot(cls, cls_w_ref[...], preferred_element_type=f32) + cls_b_ref[...]


def _full_spec(shape):
    n = len(shape)
    return pl.BlockSpec(shape, lambda i, _n=n: (0,) * _n)


def fused_forward(x, mask, p):
    """x: [B*S, H] fp32 (summed embeddings, pre-LN), mask: [B, 1, S] int32 -> [B, 2] logits."""
    M, _ = x.shape
    B = mask.shape[0]
    S = M // B
    kernel = functools.partial(_fused_bert_kernel,
                               n_layers=N_LAYERS, n_heads=N_HEADS,
                               batch=B, seq=S, scale=1.0 / (HEAD_DIM ** 0.5))
    args = (x, mask,
            p["emb_ln_g"], p["emb_ln_b"],
            p["wq"], p["wk"], p["wv"], p["bq"], p["bk"], p["bv"],
            p["wo"], p["bo"], p["ln1_g"], p["ln1_b"],
            p["w1"], p["b1"], p["w2"], p["b2"], p["ln2_g"], p["ln2_b"],
            p["cls_w"], p["cls_b"])
    return pl.pallas_call(
        kernel,
        grid=(1,),                                   # single step: batch grid collapsed
        in_specs=[_full_spec(a.shape) for a in args],
        out_specs=pl.BlockSpec((B, N_CLASSES), lambda i: (0, 0)),
        out_shape=jax.ShapeDtypeStruct((B, N_CLASSES), jnp.float32),
        compiler_params=pltpu.CompilerParams(dimension_semantics=("arbitrary",)),
    )(*args)


# ---------------------------- parameters ----------------------------

def init_params(key):
    def normal(k, shape):
        return 0.02 * jax.random.normal(k, shape, dtype=jnp.float32)

    keys = iter(jax.random.split(key, 3 + 6 * N_LAYERS + 1))
    p = {
        "word_emb": normal(next(keys), (VOCAB, HIDDEN)),
        "pos_emb": normal(next(keys), (MAX_POS, HIDDEN)),
        "type_emb": normal(next(keys), (TYPE_VOCAB, HIDDEN)),
        "emb_ln_g": jnp.ones((1, HIDDEN), jnp.float32),
        "emb_ln_b": jnp.zeros((1, HIDDEN), jnp.float32),
    }
    wq, wk, wv, wo, w1, w2 = [], [], [], [], [], []
    for _ in range(N_LAYERS):
        wq.append(normal(next(keys), (HIDDEN, HIDDEN)))
        wk.append(normal(next(keys), (HIDDEN, HIDDEN)))
        wv.append(normal(next(keys), (HIDDEN, HIDDEN)))
        wo.append(normal(next(keys), (HIDDEN, HIDDEN)))
        w1.append(normal(next(keys), (HIDDEN, INTERMEDIATE)))
        w2.append(normal(next(keys), (INTERMEDIATE, HIDDEN)))

    # Stack per-layer weights; pre-permute Q/K/V/O offline into head-major layout so the
    # kernel only indexes leading axes (no in-kernel lane slices).  Pre-cast matmul
    # weights once to bf16 (native MXU path, half the DMA bytes); biases/LN stay fp32.
    def qkv_head_major(ws):   # [L,H,H] -> [L, nH, H, dH]
        return jnp.stack(ws).reshape(N_LAYERS, HIDDEN, N_HEADS, HEAD_DIM) \
                            .transpose(0, 2, 1, 3).astype(jnp.bfloat16)

    p["wq"] = qkv_head_major(wq)
    p["wk"] = qkv_head_major(wk)
    p["wv"] = qkv_head_major(wv)
    p["wo"] = jnp.stack(wo).reshape(N_LAYERS, N_HEADS, HEAD_DIM, HIDDEN).astype(jnp.bfloat16)
    p["bq"] = jnp.zeros((N_LAYERS, N_HEADS, 1, HEAD_DIM), jnp.float32)
    p["bk"] = jnp.zeros((N_LAYERS, N_HEADS, 1, HEAD_DIM), jnp.float32)
    p["bv"] = jnp.zeros((N_LAYERS, N_HEADS, 1, HEAD_DIM), jnp.float32)
    p["bo"] = jnp.zeros((N_LAYERS, 1, HIDDEN), jnp.float32)
    p["ln1_g"] = jnp.ones((N_LAYERS, 1, HIDDEN), jnp.float32)
    p["ln1_b"] = jnp.zeros((N_LAYERS, 1, HIDDEN), jnp.float32)
    p["w1"] = jnp.stack(w1).astype(jnp.bfloat16)                 # [L, H, F]
    p["b1"] = jnp.zeros((N_LAYERS, 1, INTERMEDIATE), jnp.float32)
    p["w2"] = jnp.stack(w2).astype(jnp.bfloat16)                 # [L, F, H]
    p["b2"] = jnp.zeros((N_LAYERS, 1, HIDDEN), jnp.float32)
    p["ln2_g"] = jnp.ones((N_LAYERS, 1, HIDDEN), jnp.float32)
    p["ln2_b"] = jnp.zeros((N_LAYERS, 1, HIDDEN), jnp.float32)
    p["cls_w"] = normal(next(keys), (HIDDEN, N_CLASSES))
    p["cls_b"] = jnp.zeros((1, N_CLASSES), jnp.float32)
    return p


# ---------------------------- forward pass ----------------------------

def bert_pairwise_cls_forward(params, input_ids, attention_mask, token_type_ids):
    B, S = input_ids.shape
    # Embedding gathers are glue (plain JAX, data-dependent); everything else is
    # one fused pallas_call (embed-LN -> layers -> CLS classifier).
    pos = jnp.arange(S)
    h = (params["word_emb"][input_ids]
         + params["pos_emb"][pos][None, :, :]
         + params["type_emb"][token_type_ids])                  # [B, S, H] fp32
    x = h.reshape(B * S, HIDDEN)
    mask = attention_mask.reshape(B, 1, S).astype(jnp.int32)
    return fused_forward(x, mask, params)                       # [B, 2] fp32 logits


if __name__ == "__main__":
    key = jax.random.PRNGKey(0)
    pkey, ikey, tkey = jax.random.split(key, 3)
    params = init_params(pkey)

    B, S = 2, 8
    input_ids = jax.random.randint(ikey, (B, S), 0, VOCAB, dtype=jnp.int32)
    token_type_ids = jax.random.randint(tkey, (B, S), 0, TYPE_VOCAB, dtype=jnp.int32)
    attention_mask = jnp.ones((B, S), dtype=jnp.int32).at[0, -2:].set(0)  # pad tail of ex. 0

    logits = jax.jit(bert_pairwise_cls_forward)(params, input_ids, attention_mask,
                                                token_type_ids)
    jax.block_until_ready(logits)
    assert logits.shape == (B, N_CLASSES) and logits.dtype == jnp.float32
    print("KERNEL_OK")
</pallas_src>

<mosaic_0001>
module attributes {stable_mosaic.version = 11 : i64} {
  func.func @_fused_bert_kernel(%arg0: i32, %arg1: memref<16x32xf32, #tpu.memory_space<vmem>>, %arg2: memref<2x1x8xi32, #tpu.memory_space<vmem>>, %arg3: memref<1x32xf32, #tpu.memory_space<vmem>>, %arg4: memref<1x32xf32, #tpu.memory_space<vmem>>, %arg5: memref<2x2x32x16xbf16, #tpu.memory_space<vmem>>, %arg6: memref<2x2x32x16xbf16, #tpu.memory_space<vmem>>, %arg7: memref<2x2x32x16xbf16, #tpu.memory_space<vmem>>, %arg8: memref<2x2x1x16xf32, #tpu.memory_space<vmem>>, %arg9: memref<2x2x1x16xf32, #tpu.memory_space<vmem>>, %arg10: memref<2x2x1x16xf32, #tpu.memory_space<vmem>>, %arg11: memref<2x2x16x32xbf16, #tpu.memory_space<vmem>>, %arg12: memref<2x1x32xf32, #tpu.memory_space<vmem>>, %arg13: memref<2x1x32xf32, #tpu.memory_space<vmem>>, %arg14: memref<2x1x32xf32, #tpu.memory_space<vmem>>, %arg15: memref<2x32x64xbf16, #tpu.memory_space<vmem>>, %arg16: memref<2x1x64xf32, #tpu.memory_space<vmem>>, %arg17: memref<2x64x32xbf16, #tpu.memory_space<vmem>>, %arg18: memref<2x1x32xf32, #tpu.memory_space<vmem>>, %arg19: memref<2x1x32xf32, #tpu.memory_space<vmem>>, %arg20: memref<2x1x32xf32, #tpu.memory_space<vmem>>, %arg21: memref<32x2xf32, #tpu.memory_space<vmem>>, %arg22: memref<1x2xf32, #tpu.memory_space<vmem>>, %arg23: memref<2x2xf32, #tpu.memory_space<vmem>>) attributes {dimension_semantics = [#tpu.dimension_semantics<arbitrary>], iteration_bounds = array<i64: 1>, scalar_prefetch = 0 : i64, scratch_operands = 0 : i64, tpu.core_type = #tpu.core_type<tc>, window_params = [{pipeline_mode = #tpu.pipeline_mode<synchronous>, transform_indices = @transform_0, window_bounds = array<i64: 16, 32>}, {pipeline_mode = #tpu.pipeline_mode<synchronous>, transform_indices = @transform_1, window_bounds = array<i64: 2, 1, 8>}, {pipeline_mode = #tpu.pipeline_mode<synchronous>, transform_indices = @transform_2, window_bounds = array<i64: 1, 32>}, {pipeline_mode = #tpu.pipeline_mode<synchronous>, transform_indices = @transform_3, window_bounds = array<i64: 1, 32>}, {pipeline_mode = #tpu.pipeline_mode<synchronous>, transform_indices = @transform_4, window_bounds = array<i64: 2, 2, 32, 16>}, {pipeline_mode = #tpu.pipeline_mode<synchronous>, transform_indices = @transform_5, window_bounds = array<i64: 2, 2, 32, 16>}, {pipeline_mode = #tpu.pipeline_mode<synchronous>, transform_indices = @transform_6, window_bounds = array<i64: 2, 2, 32, 16>}, {pipeline_mode = #tpu.pipeline_mode<synchronous>, transform_indices = @transform_7, window_bounds = array<i64: 2, 2, 1, 16>}, {pipeline_mode = #tpu.pipeline_mode<synchronous>, transform_indices = @transform_8, window_bounds = array<i64: 2, 2, 1, 16>}, {pipeline_mode = #tpu.pipeline_mode<synchronous>, transform_indices = @transform_9, window_bounds = array<i64: 2, 2, 1, 16>}, {pipeline_mode = #tpu.pipeline_mode<synchronous>, transform_indices = @transform_10, window_bounds = array<i64: 2, 2, 16, 32>}, {pipeline_mode = #tpu.pipeline_mode<synchronous>, transform_indices = @transform_11, window_bounds = array<i64: 2, 1, 32>}, {pipeline_mode = #tpu.pipeline_mode<synchronous>, transform_indices = @transform_12, window_bounds = array<i64: 2, 1, 32>}, {pipeline_mode = #tpu.pipeline_mode<synchronous>, transform_indices = @transform_13, window_bounds = array<i64: 2, 1, 32>}, {pipeline_mode = #tpu.pipeline_mode<synchronous>, transform_indices = @transform_14, window_bounds = array<i64: 2, 32, 64>}, {pipeline_mode = #tpu.pipeline_mode<synchronous>, transform_indices = @transform_15, window_bounds = array<i64: 2, 1, 64>}, {pipeline_mode = #tpu.pipeline_mode<synchronous>, transform_indices = @transform_16, window_bounds = array<i64: 2, 64, 32>}, {pipeline_mode = #tpu.pipeline_mode<synchronous>, transform_indices = @transform_17, window_bounds = array<i64: 2, 1, 32>}, {pipeline_mode = #tpu.pipeline_mode<synchronous>, transform_indices = @transform_18, window_bounds = array<i64: 2, 1, 32>}, {pipeline_mode = #tpu.pipeline_mode<synchronous>, transform_indices = @transform_19, window_bounds = array<i64: 2, 1, 32>}, {pipeline_mode = #tpu.pipeline_mode<synchronous>, transform_indices = @transform_20, window_bounds = array<i64: 32, 2>}, {pipeline_mode = #tpu.pipeline_mode<synchronous>, transform_indices = @transform_21, window_bounds = array<i64: 1, 2>}, {pipeline_mode = #tpu.pipeline_mode<synchronous>, transform_indices = @transform_22, window_bounds = array<i64: 2, 2>}]} {
    %c0 = arith.constant 0 : index
    %c0_0 = arith.constant 0 : index
    %0 = vector.load %arg1[%c0, %c0_0] : memref<16x32xf32, #tpu.memory_space<vmem>>, vector<16x32xf32>
    %c0_1 = arith.constant 0 : index
    %c0_2 = arith.constant 0 : index
    %1 = vector.load %arg3[%c0_1, %c0_2] : memref<1x32xf32, #tpu.memory_space<vmem>>, vector<1x32xf32>
    %c0_3 = arith.constant 0 : index
    %c0_4 = arith.constant 0 : index
    %2 = vector.load %arg4[%c0_3, %c0_4] : memref<1x32xf32, #tpu.memory_space<vmem>>, vector<1x32xf32>
    %cst = arith.constant dense<0.000000e+00> : vector<16xf32>
    %3 = vector.multi_reduction <add>, %0, %cst [1] : vector<16x32xf32> to vector<16xf32>
    %4 = vector.shape_cast %3 : vector<16xf32> to vector<16x1xf32>
    %cst_5 = arith.constant 3.200000e+01 : f32
    %5 = vector.broadcast %cst_5 : f32 to vector<16x1xf32>
    %6 = arith.divf %4, %5 : vector<16x1xf32>
    %7 = vector.broadcast %6 : vector<16x1xf32> to vector<16x32xf32>
    %8 = arith.subf %0, %7 : vector<16x32xf32>
    %9 = arith.mulf %8, %8 : vector<16x32xf32>
    %cst_6 = arith.constant dense<0.000000e+00> : vector<16xf32>
    %10 = vector.multi_reduction <add>, %9, %cst_6 [1] : vector<16x32xf32> to vector<16xf32>
    %11 = vector.shape_cast %10 : vector<16xf32> to vector<16x1xf32>
    %cst_7 = arith.constant 3.200000e+01 : f32
    %12 = vector.broadcast %cst_7 : f32 to vector<16x1xf32>
    %13 = arith.divf %11, %12 : vector<16x1xf32>
    %14 = vector.broadcast %6 : vector<16x1xf32> to vector<16x32xf32>
    %15 = arith.subf %0, %14 : vector<16x32xf32>
    %cst_8 = arith.constant 9.99999996E-13 : f32
    %16 = vector.broadcast %cst_8 : f32 to vector<16x1xf32>
    %17 = arith.addf %13, %16 : vector<16x1xf32>
    %18 = math.rsqrt %17 : vector<16x1xf32>
    %19 = vector.broadcast %18 : vector<16x1xf32> to vector<16x32xf32>
    %20 = arith.mulf %15, %19 : vector<16x32xf32>
    %21 = vector.broadcast %1 : vector<1x32xf32> to vector<16x32xf32>
    %22 = arith.mulf %20, %21 : vector<16x32xf32>
    %23 = vector.broadcast %2 : vector<1x32xf32> to vector<16x32xf32>
    %24 = arith.addf %22, %23 : vector<16x32xf32>
    %c0_9 = arith.constant 0 : index
    %c0_10 = arith.constant 0 : index
    %c0_11 = arith.constant 0 : index
    %25 = vector.load %arg2[%c0_9, %c0_10, %c0_11] : memref<2x1x8xi32, #tpu.memory_space<vmem>>, vector<2x1x8xi32>
    %26 = arith.sitofp %25 : vector<2x1x8xi32> to vector<2x1x8xf32>
    %27 = arith.truncf %24 : vector<16x32xf32> to vector<16x32xbf16>
    %28 = vector.extract_strided_slice %27 {offsets = [0, 0], sizes = [8, 32], strides = [1, 1]} : vector<16x32xbf16> to vector<8x32xbf16>
    %29 = vector.extract_strided_slice %26 {offsets = [0, 0, 0], sizes = [1, 1, 8], strides = [1, 1, 1]} : vector<2x1x8xf32> to vector<1x1x8xf32>
    %30 = vector.shape_cast %29 : vector<1x1x8xf32> to vector<1x8xf32>
    %cst_12 = arith.constant 1.000000e+00 : f32
    %31 = vector.broadcast %cst_12 : f32 to vector<1x8xf32>
    %32 = arith.subf %30, %31 : vector<1x8xf32>
    %cst_13 = arith.constant 1.000000e+09 : f32
    %33 = vector.broadcast %cst_13 : f32 to vector<1x8xf32>
    %34 = arith.mulf %32, %33 : vector<1x8xf32>
    %cst_14 = arith.constant 0.000000e+00 : f32
    %35 = vector.broadcast %cst_14 : f32 to vector<8x32xf32>
    %c0_15 = arith.constant 0 : index
    %c0_16 = arith.constant 0 : index
    %c0_17 = arith.constant 0 : index
    %c0_18 = arith.constant 0 : index
    %36 = vector.load %arg5[%c0_15, %c0_16, %c0_17, %c0_18] : memref<2x2x32x16xbf16, #tpu.memory_space<vmem>>, vector<1x1x32x16xbf16>
    %37 = vector.shape_cast %36 : vector<1x1x32x16xbf16> to vector<32x16xbf16>
    %cst_19 = arith.constant dense<0.000000e+00> : vector<8x16xf32>
    %38 = tpu.matmul %28, %37, %cst_19 {dimension_numbers = #tpu.dot_dimension_numbers<[1], [0], [0], [1], [0, 0, 1, 1], [], []>} : vector<8x32xbf16>, vector<32x16xbf16>, vector<8x16xf32> -> vector<8x16xf32>
    %c0_20 = arith.constant 0 : index
    %c0_21 = arith.constant 0 : index
    %c0_22 = arith.constant 0 : index
    %c0_23 = arith.constant 0 : index
    %39 = vector.load %arg8[%c0_20, %c0_21, %c0_22, %c0_23] : memref<2x2x1x16xf32, #tpu.memory_space<vmem>>, vector<1x1x1x16xf32>
    %40 = vector.shape_cast %39 : vector<1x1x1x16xf32> to vector<1x16xf32>
    %41 = vector.broadcast %40 : vector<1x16xf32> to vector<8x16xf32>
    %42 = arith.addf %38, %41 : vector<8x16xf32>
    %c0_24 = arith.constant 0 : index
    %c0_25 = arith.constant 0 : index
    %c0_26 = arith.constant 0 : index
    %c0_27 = arith.constant 0 : index
    %43 = vector.load %arg6[%c0_24, %c0_25, %c0_26, %c0_27] : memref<2x2x32x16xbf16, #tpu.memory_space<vmem>>, vector<1x1x32x16xbf16>
    %44 = vector.shape_cast %43 : vector<1x1x32x16xbf16> to vector<32x16xbf16>
    %cst_28 = arith.constant dense<0.000000e+00> : vector<8x16xf32>
    %45 = tpu.matmul %28, %44, %cst_28 {dimension_numbers = #tpu.dot_dimension_numbers<[1], [0], [0], [1], [0, 0, 1, 1], [], []>} : vector<8x32xbf16>, vector<32x16xbf16>, vector<8x16xf32> -> vector<8x16xf32>
    %c0_29 = arith.constant 0 : index
    %c0_30 = arith.constant 0 : index
    %c0_31 = arith.constant 0 : index
    %c0_32 = arith.constant 0 : index
    %46 = vector.load %arg9[%c0_29, %c0_30, %c0_31, %c0_32] : memref<2x2x1x16xf32, #tpu.memory_space<vmem>>, vector<1x1x1x16xf32>
    %47 = vector.shape_cast %46 : vector<1x1x1x16xf32> to vector<1x16xf32>
    %48 = vector.broadcast %47 : vector<1x16xf32> to vector<8x16xf32>
    %49 = arith.addf %45, %48 : vector<8x16xf32>
    %c0_33 = arith.constant 0 : index
    %c0_34 = arith.constant 0 : index
    %c0_35 = arith.constant 0 : index
    %c0_36 = arith.constant 0 : index
    %50 = vector.load %arg7[%c0_33, %c0_34, %c0_35, %c0_36] : memref<2x2x32x16xbf16, #tpu.memory_space<vmem>>, vector<1x1x32x16xbf16>
    %51 = vector.shape_cast %50 : vector<1x1x32x16xbf16> to vector<32x16xbf16>
    %cst_37 = arith.constant dense<0.000000e+00> : vector<8x16xf32>
    %52 = tpu.matmul %28, %51, %cst_37 {dimension_numbers = #tpu.dot_dimension_numbers<[1], [0], [0], [1], [0, 0, 1, 1], [], []>} : vector<8x32xbf16>, vector<32x16xbf16>, vector<8x16xf32> -> vector<8x16xf32>
    %c0_38 = arith.constant 0 : index
    %c0_39 = arith.constant 0 : index
    %c0_40 = arith.constant 0 : index
    %c0_41 = arith.constant 0 : index
    %53 = vector.load %arg10[%c0_38, %c0_39, %c0_40, %c0_41] : memref<2x2x1x16xf32, #tpu.memory_space<vmem>>, vector<1x1x1x16xf32>
    %54 = vector.shape_cast %53 : vector<1x1x1x16xf32> to vector<1x16xf32>
    %55 = vector.broadcast %54 : vector<1x16xf32> to vector<8x16xf32>
    %56 = arith.addf %52, %55 : vector<8x16xf32>
    %57 = arith.truncf %56 : vector<8x16xf32> to vector<8x16xbf16>
    %58 = arith.truncf %42 : vector<8x16xf32> to vector<8x16xbf16>
    %59 = arith.truncf %49 : vector<8x16xf32> to vector<8x16xbf16>
    %cst_42 = arith.constant dense<0.000000e+00> : vector<8x8xf32>
    %60 = tpu.matmul %58, %59, %cst_42 {dimension_numbers = #tpu.dot_dimension_numbers<[1], [1], [0], [0], [0, 0, 1, 0], [], []>} : vector<8x16xbf16>, vector<8x16xbf16>, vector<8x8xf32> -> vector<8x8xf32>
    %cst_43 = arith.constant 2.500000e-01 : f32
    %61 = vector.broadcast %cst_43 : f32 to vector<8x8xf32>
    %62 = arith.mulf %60, %61 : vector<8x8xf32>
    %63 = vector.broadcast %34 : vector<1x8xf32> to vector<8x8xf32>
    %64 = arith.addf %62, %63 : vector<8x8xf32>
    %cst_44 = arith.constant dense<0xFF800000> : vector<8xf32>
    %65 = vector.multi_reduction <maximumf>, %64, %cst_44 [1] : vector<8x8xf32> to vector<8xf32>
    %66 = vector.shape_cast %65 : vector<8xf32> to vector<8x1xf32>
    %67 = vector.broadcast %66 : vector<8x1xf32> to vector<8x8xf32>
    %68 = arith.subf %64, %67 : vector<8x8xf32>
    %69 = math.exp %68 : vector<8x8xf32>
    %cst_45 = arith.constant dense<0.000000e+00> : vector<8xf32>
    %70 = vector.multi_reduction <add>, %69, %cst_45 [1] : vector<8x8xf32> to vector<8xf32>
    %71 = vector.shape_cast %70 : vector<8xf32> to vector<8x1xf32>
    %72 = tpu.reciprocal %71 {approx = true} : vector<8x1xf32> -> vector<8x1xf32>
    %73 = vector.broadcast %72 : vector<8x1xf32> to vector<8x8xf32>
    %74 = arith.mulf %69, %73 : vector<8x8xf32>
    %75 = arith.truncf %74 : vector<8x8xf32> to vector<8x8xbf16>
    %cst_46 = arith.constant dense<0.000000e+00> : vector<8x16xf32>
    %76 = tpu.matmul %75, %57, %cst_46 {dimension_numbers = #tpu.dot_dimension_numbers<[1], [0], [0], [1], [0, 0, 1, 1], [], []>} : vector<8x8xbf16>, vector<8x16xbf16>, vector<8x16xf32> -> vector<8x16xf32>
    %77 = arith.truncf %76 : vector<8x16xf32> to vector<8x16xbf16>
    %c0_47 = arith.constant 0 : index
    %c0_48 = arith.constant 0 : index
    %c0_49 = arith.constant 0 : index
    %c0_50 = arith.constant 0 : index
    %78 = vector.load %arg11[%c0_47, %c0_48, %c0_49, %c0_50] : memref<2x2x16x32xbf16, #tpu.memory_space<vmem>>, vector<1x1x16x32xbf16>
    %79 = vector.shape_cast %78 : vector<1x1x16x32xbf16> to vector<16x32xbf16>
    %cst_51 = arith.constant dense<0.000000e+00> : vector<8x32xf32>
    %80 = tpu.matmul %77, %79, %cst_51 {dimension_numbers = #tpu.dot_dimension_numbers<[1], [0], [0], [1], [0, 0, 1, 1], [], []>} : vector<8x16xbf16>, vector<16x32xbf16>, vector<8x32xf32> -> vector<8x32xf32>
    %81 = arith.addf %35, %80 : vector<8x32xf32>
    %c0_52 = arith.constant 0 : index
    %c1 = arith.constant 1 : index
    %c0_53 = arith.constant 0 : index
    %c0_54 = arith.constant 0 : index
    %82 = vector.load %arg5[%c0_52, %c1, %c0_53, %c0_54] : memref<2x2x32x16xbf16, #tpu.memory_space<vmem>>, vector<1x1x32x16xbf16>
    %83 = vector.shape_cast %82 : vector<1x1x32x16xbf16> to vector<32x16xbf16>
    %cst_55 = arith.constant dense<0.000000e+00> : vector<8x16xf32>
    %84 = tpu.matmul %28, %83, %cst_55 {dimension_numbers = #tpu.dot_dimension_numbers<[1], [0], [0], [1], [0, 0, 1, 1], [], []>} : vector<8x32xbf16>, vector<32x16xbf16>, vector<8x16xf32> -> vector<8x16xf32>
    %c0_56 = arith.constant 0 : index
    %c1_57 = arith.constant 1 : index
    %c0_58 = arith.constant 0 : index
    %c0_59 = arith.constant 0 : index
    %85 = vector.load %arg8[%c0_56, %c1_57, %c0_58, %c0_59] : memref<2x2x1x16xf32, #tpu.memory_space<vmem>>, vector<1x1x1x16xf32>
    %86 = vector.shape_cast %85 : vector<1x1x1x16xf32> to vector<1x16xf32>
    %87 = vector.broadcast %86 : vector<1x16xf32> to vector<8x16xf32>
    %88 = arith.addf %84, %87 : vector<8x16xf32>
    %c0_60 = arith.constant 0 : index
    %c1_61 = arith.constant 1 : index
    %c0_62 = arith.constant 0 : index
    %c0_63 = arith.constant 0 : index
    %89 = vector.load %arg6[%c0_60, %c1_61, %c0_62, %c0_63] : memref<2x2x32x16xbf16, #tpu.memory_space<vmem>>, vector<1x1x32x16xbf16>
    %90 = vector.shape_cast %89 : vector<1x1x32x16xbf16> to vector<32x16xbf16>
    %cst_64 = arith.constant dense<0.000000e+00> : vector<8x16xf32>
    %91 = tpu.matmul %28, %90, %cst_64 {dimension_numbers = #tpu.dot_dimension_numbers<[1], [0], [0], [1], [0, 0, 1, 1], [], []>} : vector<8x32xbf16>, vector<32x16xbf16>, vector<8x16xf32> -> vector<8x16xf32>
    %c0_65 = arith.constant 0 : index
    %c1_66 = arith.constant 1 : index
    %c0_67 = arith.constant 0 : index
    %c0_68 = arith.constant 0 : index
    %92 = vector.load %arg9[%c0_65, %c1_66, %c0_67, %c0_68] : memref<2x2x1x16xf32, #tpu.memory_space<vmem>>, vector<1x1x1x16xf32>
    %93 = vector.shape_cast %92 : vector<1x1x1x16xf32> to vector<1x16xf32>
    %94 = vector.broadcast %93 : vector<1x16xf32> to vector<8x16xf32>
    %95 = arith.addf %91, %94 : vector<8x16xf32>
    %c0_69 = arith.constant 0 : index
    %c1_70 = arith.constant 1 : index
    %c0_71 = arith.constant 0 : index
    %c0_72 = arith.constant 0 : index
    %96 = vector.load %arg7[%c0_69, %c1_70, %c0_71, %c0_72] : memref<2x2x32x16xbf16, #tpu.memory_space<vmem>>, vector<1x1x32x16xbf16>
    %97 = vector.shape_cast %96 : vector<1x1x32x16xbf16> to vector<32x16xbf16>
    %cst_73 = arith.constant dense<0.000000e+00> : vector<8x16xf32>
    %98 = tpu.matmul %28, %97, %cst_73 {dimension_numbers = #tpu.dot_dimension_numbers<[1], [0], [0], [1], [0, 0, 1, 1], [], []>} : vector<8x32xbf16>, vector<32x16xbf16>, vector<8x16xf32> -> vector<8x16xf32>
    %c0_74 = arith.constant 0 : index
    %c1_75 = arith.constant 1 : index
    %c0_76 = arith.constant 0 : index
    %c0_77 = arith.constant 0 : index
    %99 = vector.load %arg10[%c0_74, %c1_75, %c0_76, %c0_77] : memref<2x2x1x16xf32, #tpu.memory_space<vmem>>, vector<1x1x1x16xf32>
    %100 = vector.shape_cast %99 : vector<1x1x1x16xf32> to vector<1x16xf32>
    %101 = vector.broadcast %100 : vector<1x16xf32> to vector<8x16xf32>
    %102 = arith.addf %98, %101 : vector<8x16xf32>
    %103 = arith.truncf %102 : vector<8x16xf32> to vector<8x16xbf16>
    %104 = arith.truncf %88 : vector<8x16xf32> to vector<8x16xbf16>
    %105 = arith.truncf %95 : vector<8x16xf32> to vector<8x16xbf16>
    %cst_78 = arith.constant dense<0.000000e+00> : vector<8x8xf32>
    %106 = tpu.matmul %104, %105, %cst_78 {dimension_numbers = #tpu.dot_dimension_numbers<[1], [1], [0], [0], [0, 0, 1, 0], [], []>} : vector<8x16xbf16>, vector<8x16xbf16>, vector<8x8xf32> -> vector<8x8xf32>
    %cst_79 = arith.constant 2.500000e-01 : f32
    %107 = vector.broadcast %cst_79 : f32 to vector<8x8xf32>
    %108 = arith.mulf %106, %107 : vector<8x8xf32>
    %109 = vector.broadcast %34 : vector<1x8xf32> to vector<8x8xf32>
    %110 = arith.addf %108, %109 : vector<8x8xf32>
    %cst_80 = arith.constant dense<0xFF800000> : vector<8xf32>
    %111 = vector.multi_reduction <maximumf>, %110, %cst_80 [1] : vector<8x8xf32> to vector<8xf32>
    %112 = vector.shape_cast %111 : vector<8xf32> to vector<8x1xf32>
    %113 = vector.broadcast %112 : vector<8x1xf32> to vector<8x8xf32>
    %114 = arith.subf %110, %113 : vector<8x8xf32>
    %115 = math.exp %114 : vector<8x8xf32>
    %cst_81 = arith.constant dense<0.000000e+00> : vector<8xf32>
    %116 = vector.multi_reduction <add>, %115, %cst_81 [1] : vector<8x8xf32> to vector<8xf32>
    %117 = vector.shape_cast %116 : vector<8xf32> to vector<8x1xf32>
    %118 = tpu.reciprocal %117 {approx = true} : vector<8x1xf32> -> vector<8x1xf32>
    %119 = vector.broadcast %118 : vector<8x1xf32> to vector<8x8xf32>
    %120 = arith.mulf %115, %119 : vector<8x8xf32>
    %121 = arith.truncf %120 : vector<8x8xf32> to vector<8x8xbf16>
    %cst_82 = arith.constant dense<0.000000e+00> : vector<8x16xf32>
    %122 = tpu.matmul %121, %103, %cst_82 {dimension_numbers = #tpu.dot_dimension_numbers<[1], [0], [0], [1], [0, 0, 1, 1], [], []>} : vector<8x8xbf16>, vector<8x16xbf16>, vector<8x16xf32> -> vector<8x16xf32>
    %123 = arith.truncf %122 : vector<8x16xf32> to vector<8x16xbf16>
    %c0_83 = arith.constant 0 : index
    %c1_84 = arith.constant 1 : index
    %c0_85 = arith.constant 0 : index
    %c0_86 = arith.constant 0 : index
    %124 = vector.load %arg11[%c0_83, %c1_84, %c0_85, %c0_86] : memref<2x2x16x32xbf16, #tpu.memory_space<vmem>>, vector<1x1x16x32xbf16>
    %125 = vector.shape_cast %124 : vector<1x1x16x32xbf16> to vector<16x32xbf16>
    %cst_87 = arith.constant dense<0.000000e+00> : vector<8x32xf32>
    %126 = tpu.matmul %123, %125, %cst_87 {dimension_numbers = #tpu.dot_dimension_numbers<[1], [0], [0], [1], [0, 0, 1, 1], [], []>} : vector<8x16xbf16>, vector<16x32xbf16>, vector<8x32xf32> -> vector<8x32xf32>
    %127 = arith.addf %81, %126 : vector<8x32xf32>
    %128 = vector.extract_strided_slice %27 {offsets = [8, 0], sizes = [8, 32], strides = [1, 1]} : vector<16x32xbf16> to vector<8x32xbf16>
    %129 = vector.extract_strided_slice %26 {offsets = [1, 0, 0], sizes = [1, 1, 8], strides = [1, 1, 1]} : vector<2x1x8xf32> to vector<1x1x8xf32>
    %130 = vector.shape_cast %129 : vector<1x1x8xf32> to vector<1x8xf32>
    %cst_88 = arith.constant 1.000000e+00 : f32
    %131 = vector.broadcast %cst_88 : f32 to vector<1x8xf32>
    %132 = arith.subf %130, %131 : vector<1x8xf32>
    %cst_89 = arith.constant 1.000000e+09 : f32
    %133 = vector.broadcast %cst_89 : f32 to vector<1x8xf32>
    %134 = arith.mulf %132, %133 : vector<1x8xf32>
    %cst_90 = arith.constant 0.000000e+00 : f32
    %135 = vector.broadcast %cst_90 : f32 to vector<8x32xf32>
    %c0_91 = arith.constant 0 : index
    %c0_92 = arith.constant 0 : index
    %c0_93 = arith.constant 0 : index
    %c0_94 = arith.constant 0 : index
    %136 = vector.load %arg5[%c0_91, %c0_92, %c0_93, %c0_94] : memref<2x2x32x16xbf16, #tpu.memory_space<vmem>>, vector<1x1x32x16xbf16>
    %137 = vector.shape_cast %136 : vector<1x1x32x16xbf16> to vector<32x16xbf16>
    %cst_95 = arith.constant dense<0.000000e+00> : vector<8x16xf32>
    %138 = tpu.matmul %128, %137, %cst_95 {dimension_numbers = #tpu.dot_dimension_numbers<[1], [0], [0], [1], [0, 0, 1, 1], [], []>} : vector<8x32xbf16>, vector<32x16xbf16>, vector<8x16xf32> -> vector<8x16xf32>
    %c0_96 = arith.constant 0 : index
    %c0_97 = arith.constant 0 : index
    %c0_98 = arith.constant 0 : index
    %c0_99 = arith.constant 0 : index
    %139 = vector.load %arg8[%c0_96, %c0_97, %c0_98, %c0_99] : memref<2x2x1x16xf32, #tpu.memory_space<vmem>>, vector<1x1x1x16xf32>
    %140 = vector.shape_cast %139 : vector<1x1x1x16xf32> to vector<1x16xf32>
    %141 = vector.broadcast %140 : vector<1x16xf32> to vector<8x16xf32>
    %142 = arith.addf %138, %141 : vector<8x16xf32>
    %c0_100 = arith.constant 0 : index
    %c0_101 = arith.constant 0 : index
    %c0_102 = arith.constant 0 : index
    %c0_103 = arith.constant 0 : index
    %143 = vector.load %arg6[%c0_100, %c0_101, %c0_102, %c0_103] : memref<2x2x32x16xbf16, #tpu.memory_space<vmem>>, vector<1x1x32x16xbf16>
    %144 = vector.shape_cast %143 : vector<1x1x32x16xbf16> to vector<32x16xbf16>
    %cst_104 = arith.constant dense<0.000000e+00> : vector<8x16xf32>
    %145 = tpu.matmul %128, %144, %cst_104 {dimension_numbers = #tpu.dot_dimension_numbers<[1], [0], [0], [1], [0, 0, 1, 1], [], []>} : vector<8x32xbf16>, vector<32x16xbf16>, vector<8x16xf32> -> vector<8x16xf32>
    %c0_105 = arith.constant 0 : index
    %c0_106 = arith.constant 0 : index
    %c0_107 = arith.constant 0 : index
    %c0_108 = arith.constant 0 : index
    %146 = vector.load %arg9[%c0_105, %c0_106, %c0_107, %c0_108] : memref<2x2x1x16xf32, #tpu.memory_space<vmem>>, vector<1x1x1x16xf32>
    %147 = vector.shape_cast %146 : vector<1x1x1x16xf32> to vector<1x16xf32>
    %148 = vector.broadcast %147 : vector<1x16xf32> to vector<8x16xf32>
    %149 = arith.addf %145, %148 : vector<8x16xf32>
    %c0_109 = arith.constant 0 : index
    %c0_110 = arith.constant 0 : index
    %c0_111 = arith.constant 0 : index
    %c0_112 = arith.constant 0 : index
    %150 = vector.load %arg7[%c0_109, %c0_110, %c0_111, %c0_112] : memref<2x2x32x16xbf16, #tpu.memory_space<vmem>>, vector<1x1x32x16xbf16>
    %151 = vector.shape_cast %150 : vector<1x1x32x16xbf16> to vector<32x16xbf16>
    %cst_113 = arith.constant dense<0.000000e+00> : vector<8x16xf32>
    %152 = tpu.matmul %128, %151, %cst_113 {dimension_numbers = #tpu.dot_dimension_numbers<[1], [0], [0], [1], [0, 0, 1, 1], [], []>} : vector<8x32xbf16>, vector<32x16xbf16>, vector<8x16xf32> -> vector<8x16xf32>
    %c0_114 = arith.constant 0 : index
    %c0_115 = arith.constant 0 : index
    %c0_116 = arith.constant 0 : index
    %c0_117 = arith.constant 0 : index
    %153 = vector.load %arg10[%c0_114, %c0_115, %c0_116, %c0_117] : memref<2x2x1x16xf32, #tpu.memory_space<vmem>>, vector<1x1x1x16xf32>
    %154 = vector.shape_cast %153 : vector<1x1x1x16xf32> to vector<1x16xf32>
    %155 = vector.broadcast %154 : vector<1x16xf32> to vector<8x16xf32>
    %156 = arith.addf %152, %155 : vector<8x16xf32>
    %157 = arith.truncf %156 : vector<8x16xf32> to vector<8x16xbf16>
    %158 = arith.truncf %142 : vector<8x16xf32> to vector<8x16xbf16>
    %159 = arith.truncf %149 : vector<8x16xf32> to vector<8x16xbf16>
    %cst_118 = arith.constant dense<0.000000e+00> : vector<8x8xf32>
    %160 = tpu.matmul %158, %159, %cst_118 {dimension_numbers = #tpu.dot_dimension_numbers<[1], [1], [0], [0], [0, 0, 1, 0], [], []>} : vector<8x16xbf16>, vector<8x16xbf16>, vector<8x8xf32> -> vector<8x8xf32>
    %cst_119 = arith.constant 2.500000e-01 : f32
    %161 = vector.broadcast %cst_119 : f32 to vector<8x8xf32>
    %162 = arith.mulf %160, %161 : vector<8x8xf32>
    %163 = vector.broadcast %134 : vector<1x8xf32> to vector<8x8xf32>
    %164 = arith.addf %162, %163 : vector<8x8xf32>
    %cst_120 = arith.constant dense<0xFF800000> : vector<8xf32>
    %165 = vector.multi_reduction <maximumf>, %164, %cst_120 [1] : vector<8x8xf32> to vector<8xf32>
    %166 = vector.shape_cast %165 : vector<8xf32> to vector<8x1xf32>
    %167 = vector.broadcast %166 : vector<8x1xf32> to vector<8x8xf32>
    %168 = arith.subf %164, %167 : vector<8x8xf32>
    %169 = math.exp %168 : vector<8x8xf32>
    %cst_121 = arith.constant dense<0.000000e+00> : vector<8xf32>
    %170 = vector.multi_reduction <add>, %169, %cst_121 [1] : vector<8x8xf32> to vector<8xf32>
    %171 = vector.shape_cast %170 : vector<8xf32> to vector<8x1xf32>
    %172 = tpu.reciprocal %171 {approx = true} : vector<8x1xf32> -> vector<8x1xf32>
    %173 = vector.broadcast %172 : vector<8x1xf32> to vector<8x8xf32>
    %174 = arith.mulf %169, %173 : vector<8x8xf32>
    %175 = arith.truncf %174 : vector<8x8xf32> to vector<8x8xbf16>
    %cst_122 = arith.constant dense<0.000000e+00> : vector<8x16xf32>
    %176 = tpu.matmul %175, %157, %cst_122 {dimension_numbers = #tpu.dot_dimension_numbers<[1], [0], [0], [1], [0, 0, 1, 1], [], []>} : vector<8x8xbf16>, vector<8x16xbf16>, vector<8x16xf32> -> vector<8x16xf32>
    %177 = arith.truncf %176 : vector<8x16xf32> to vector<8x16xbf16>
    %c0_123 = arith.constant 0 : index
    %c0_124 = arith.constant 0 : index
    %c0_125 = arith.constant 0 : index
    %c0_126 = arith.constant 0 : index
    %178 = vector.load %arg11[%c0_123, %c0_124, %c0_125, %c0_126] : memref<2x2x16x32xbf16, #tpu.memory_space<vmem>>, vector<1x1x16x32xbf16>
    %179 = vector.shape_cast %178 : vector<1x1x16x32xbf16> to vector<16x32xbf16>
    %cst_127 = arith.constant dense<0.000000e+00> : vector<8x32xf32>
    %180 = tpu.matmul %177, %179, %cst_127 {dimension_numbers = #tpu.dot_dimension_numbers<[1], [0], [0], [1], [0, 0, 1, 1], [], []>} : vector<8x16xbf16>, vector<16x32xbf16>, vector<8x32xf32> -> vector<8x32xf32>
    %181 = arith.addf %135, %180 : vector<8x32xf32>
    %c0_128 = arith.constant 0 : index
    %c1_129 = arith.constant 1 : index
    %c0_130 = arith.constant 0 : index
    %c0_131 = arith.constant 0 : index
    %182 = vector.load %arg5[%c0_128, %c1_129, %c0_130, %c0_131] : memref<2x2x32x16xbf16, #tpu.memory_space<vmem>>, vector<1x1x32x16xbf16>
    %183 = vector.shape_cast %182 : vector<1x1x32x16xbf16> to vector<32x16xbf16>
    %cst_132 = arith.constant dense<0.000000e+00> : vector<8x16xf32>
    %184 = tpu.matmul %128, %183, %cst_132 {dimension_numbers = #tpu.dot_dimension_numbers<[1], [0], [0], [1], [0, 0, 1, 1], [], []>} : vector<8x32xbf16>, vector<32x16xbf16>, vector<8x16xf32> -> vector<8x16xf32>
    %c0_133 = arith.constant 0 : index
    %c1_134 = arith.constant 1 : index
    %c0_135 = arith.constant 0 : index
    %c0_136 = arith.constant 0 : index
    %185 = vector.load %arg8[%c0_133, %c1_134, %c0_135, %c0_136] : memref<2x2x1x16xf32, #tpu.memory_space<vmem>>, vector<1x1x1x16xf32>
    %186 = vector.shape_cast %185 : vector<1x1x1x16xf32> to vector<1x16xf32>
    %187 = vector.broadcast %186 : vector<1x16xf32> to vector<8x16xf32>
    %188 = arith.addf %184, %187 : vector<8x16xf32>
    %c0_137 = arith.constant 0 : index
    %c1_138 = arith.constant 1 : index
    %c0_139 = arith.constant 0 : index
    %c0_140 = arith.constant 0 : index
    %189 = vector.load %arg6[%c0_137, %c1_138, %c0_139, %c0_140] : memref<2x2x32x16xbf16, #tpu.memory_space<vmem>>, vector<1x1x32x16xbf16>
    %190 = vector.shape_cast %189 : vector<1x1x32x16xbf16> to vector<32x16xbf16>
    %cst_141 = arith.constant dense<0.000000e+00> : vector<8x16xf32>
    %191 = tpu.matmul %128, %190, %cst_141 {dimension_numbers = #tpu.dot_dimension_numbers<[1], [0], [0], [1], [0, 0, 1, 1], [], []>} : vector<8x32xbf16>, vector<32x16xbf16>, vector<8x16xf32> -> vector<8x16xf32>
    %c0_142 = arith.constant 0 : index
    %c1_143 = arith.constant 1 : index
    %c0_144 = arith.constant 0 : index
    %c0_145 = arith.constant 0 : index
    %192 = vector.load %arg9[%c0_142, %c1_143, %c0_144, %c0_145] : memref<2x2x1x16xf32, #tpu.memory_space<vmem>>, vector<1x1x1x16xf32>
    %193 = vector.shape_cast %192 : vector<1x1x1x16xf32> to vector<1x16xf32>
    %194 = vector.broadcast %193 : vector<1x16xf32> to vector<8x16xf32>
    %195 = arith.addf %191, %194 : vector<8x16xf32>
    %c0_146 = arith.constant 0 : index
    %c1_147 = arith.constant 1 : index
    %c0_148 = arith.constant 0 : index
    %c0_149 = arith.constant 0 : index
    %196 = vector.load %arg7[%c0_146, %c1_147, %c0_148, %c0_149] : memref<2x2x32x16xbf16, #tpu.memory_space<vmem>>, vector<1x1x32x16xbf16>
    %197 = vector.shape_cast %196 : vector<1x1x32x16xbf16> to vector<32x16xbf16>
    %cst_150 = arith.constant dense<0.000000e+00> : vector<8x16xf32>
    %198 = tpu.matmul %128, %197, %cst_150 {dimension_numbers = #tpu.dot_dimension_numbers<[1], [0], [0], [1], [0, 0, 1, 1], [], []>} : vector<8x32xbf16>, vector<32x16xbf16>, vector<8x16xf32> -> vector<8x16xf32>
    %c0_151 = arith.constant 0 : index
    %c1_152 = arith.constant 1 : index
    %c0_153 = arith.constant 0 : index
    %c0_154 = arith.constant 0 : index
    %199 = vector.load %arg10[%c0_151, %c1_152, %c0_153, %c0_154] : memref<2x2x1x16xf32, #tpu.memory_space<vmem>>, vector<1x1x1x16xf32>
    %200 = vector.shape_cast %199 : vector<1x1x1x16xf32> to vector<1x16xf32>
    %201 = vector.broadcast %200 : vector<1x16xf32> to vector<8x16xf32>
    %202 = arith.addf %198, %201 : vector<8x16xf32>
    %203 = arith.truncf %202 : vector<8x16xf32> to vector<8x16xbf16>
    %204 = arith.truncf %188 : vector<8x16xf32> to vector<8x16xbf16>
    %205 = arith.truncf %195 : vector<8x16xf32> to vector<8x16xbf16>
    %cst_155 = arith.constant dense<0.000000e+00> : vector<8x8xf32>
    %206 = tpu.matmul %204, %205, %cst_155 {dimension_numbers = #tpu.dot_dimension_numbers<[1], [1], [0], [0], [0, 0, 1, 0], [], []>} : vector<8x16xbf16>, vector<8x16xbf16>, vector<8x8xf32> -> vector<8x8xf32>
    %cst_156 = arith.constant 2.500000e-01 : f32
    %207 = vector.broadcast %cst_156 : f32 to vector<8x8xf32>
    %208 = arith.mulf %206, %207 : vector<8x8xf32>
    %209 = vector.broadcast %134 : vector<1x8xf32> to vector<8x8xf32>
    %210 = arith.addf %208, %209 : vector<8x8xf32>
    %cst_157 = arith.constant dense<0xFF800000> : vector<8xf32>
    %211 = vector.multi_reduction <maximumf>, %210, %cst_157 [1] : vector<8x8xf32> to vector<8xf32>
    %212 = vector.shape_cast %211 : vector<8xf32> to vector<8x1xf32>
    %213 = vector.broadcast %212 : vector<8x1xf32> to vector<8x8xf32>
    %214 = arith.subf %210, %213 : vector<8x8xf32>
    %215 = math.exp %214 : vector<8x8xf32>
    %cst_158 = arith.constant dense<0.000000e+00> : vector<8xf32>
    %216 = vector.multi_reduction <add>, %215, %cst_158 [1] : vector<8x8xf32> to vector<8xf32>
    %217 = vector.shape_cast %216 : vector<8xf32> to vector<8x1xf32>
    %218 = tpu.reciprocal %217 {approx = true} : vector<8x1xf32> -> vector<8x1xf32>
    %219 = vector.broadcast %218 : vector<8x1xf32> to vector<8x8xf32>
    %220 = arith.mulf %215, %219 : vector<8x8xf32>
    %221 = arith.truncf %220 : vector<8x8xf32> to vector<8x8xbf16>
    %cst_159 = arith.constant dense<0.000000e+00> : vector<8x16xf32>
    %222 = tpu.matmul %221, %203, %cst_159 {dimension_numbers = #tpu.dot_dimension_numbers<[1], [0], [0], [1], [0, 0, 1, 1], [], []>} : vector<8x8xbf16>, vector<8x16xbf16>, vector<8x16xf32> -> vector<8x16xf32>
    %223 = arith.truncf %222 : vector<8x16xf32> to vector<8x16xbf16>
    %c0_160 = arith.constant 0 : index
    %c1_161 = arith.constant 1 : index
    %c0_162 = arith.constant 0 : index
    %c0_163 = arith.constant 0 : index
    %224 = vector.load %arg11[%c0_160, %c1_161, %c0_162, %c0_163] : memref<2x2x16x32xbf16, #tpu.memory_space<vmem>>, vector<1x1x16x32xbf16>
    %225 = vector.shape_cast %224 : vector<1x1x16x32xbf16> to vector<16x32xbf16>
    %cst_164 = arith.constant dense<0.000000e+00> : vector<8x32xf32>
    %226 = tpu.matmul %223, %225, %cst_164 {dimension_numbers = #tpu.dot_dimension_numbers<[1], [0], [0], [1], [0, 0, 1, 1], [], []>} : vector<8x16xbf16>, vector<16x32xbf16>, vector<8x32xf32> -> vector<8x32xf32>
    %227 = arith.addf %181, %226 : vector<8x32xf32>
    %228 = tpu.concatenate %127, %227 in 0 : vector<8x32xf32>, vector<8x32xf32> -> vector<16x32xf32>
    %c0_165 = arith.constant 0 : index
    %c0_166 = arith.constant 0 : index
    %c0_167 = arith.constant 0 : index
    %229 = vector.load %arg12[%c0_165, %c0_166, %c0_167] : memref<2x1x32xf32, #tpu.memory_space<vmem>>, vector<1x1x32xf32>
    %230 = vector.shape_cast %229 : vector<1x1x32xf32> to vector<1x32xf32>
    %231 = vector.broadcast %230 : vector<1x32xf32> to vector<16x32xf32>
    %232 = arith.addf %228, %231 : vector<16x32xf32>
    %233 = arith.addf %24, %232 : vector<16x32xf32>
    %c0_168 = arith.constant 0 : index
    %c0_169 = arith.constant 0 : index
    %c0_170 = arith.constant 0 : index
    %234 = vector.load %arg13[%c0_168, %c0_169, %c0_170] : memref<2x1x32xf32, #tpu.memory_space<vmem>>, vector<1x1x32xf32>
    %235 = vector.shape_cast %234 : vector<1x1x32xf32> to vector<1x32xf32>
    %c0_171 = arith.constant 0 : index
    %c0_172 = arith.constant 0 : index
    %c0_173 = arith.constant 0 : index
    %236 = vector.load %arg14[%c0_171, %c0_172, %c0_173] : memref<2x1x32xf32, #tpu.memory_space<vmem>>, vector<1x1x32xf32>
    %237 = vector.shape_cast %236 : vector<1x1x32xf32> to vector<1x32xf32>
    %cst_174 = arith.constant dense<0.000000e+00> : vector<16xf32>
    %238 = vector.multi_reduction <add>, %233, %cst_174 [1] : vector<16x32xf32> to vector<16xf32>
    %239 = vector.shape_cast %238 : vector<16xf32> to vector<16x1xf32>
    %cst_175 = arith.constant 3.200000e+01 : f32
    %240 = vector.broadcast %cst_175 : f32 to vector<16x1xf32>
    %241 = arith.divf %239, %240 : vector<16x1xf32>
    %242 = vector.broadcast %241 : vector<16x1xf32> to vector<16x32xf32>
    %243 = arith.subf %233, %242 : vector<16x32xf32>
    %244 = arith.mulf %243, %243 : vector<16x32xf32>
    %cst_176 = arith.constant dense<0.000000e+00> : vector<16xf32>
    %245 = vector.multi_reduction <add>, %244, %cst_176 [1] : vector<16x32xf32> to vector<16xf32>
    %246 = vector.shape_cast %245 : vector<16xf32> to vector<16x1xf32>
    %cst_177 = arith.constant 3.200000e+01 : f32
    %247 = vector.broadcast %cst_177 : f32 to vector<16x1xf32>
    %248 = arith.divf %246, %247 : vector<16x1xf32>
    %249 = vector.broadcast %241 : vector<16x1xf32> to vector<16x32xf32>
    %250 = arith.subf %233, %249 : vector<16x32xf32>
    %cst_178 = arith.constant 9.99999996E-13 : f32
    %251 = vector.broadcast %cst_178 : f32 to vector<16x1xf32>
    %252 = arith.addf %248, %251 : vector<16x1xf32>
    %253 = math.rsqrt %252 : vector<16x1xf32>
    %254 = vector.broadcast %253 : vector<16x1xf32> to vector<16x32xf32>
    %255 = arith.mulf %250, %254 : vector<16x32xf32>
    %256 = vector.broadcast %235 : vector<1x32xf32> to vector<16x32xf32>
    %257 = arith.mulf %255, %256 : vector<16x32xf32>
    %258 = vector.broadcast %237 : vector<1x32xf32> to vector<16x32xf32>
    %259 = arith.addf %257, %258 : vector<16x32xf32>
    %260 = arith.truncf %259 : vector<16x32xf32> to vector<16x32xbf16>
    %c0_179 = arith.constant 0 : index
    %c0_180 = arith.constant 0 : index
    %c0_181 = arith.constant 0 : index
    %261 = vector.load %arg15[%c0_179, %c0_180, %c0_181] : memref<2x32x64xbf16, #tpu.memory_space<vmem>>, vector<1x32x64xbf16>
    %262 = vector.shape_cast %261 : vector<1x32x64xbf16> to vector<32x64xbf16>
    %cst_182 = arith.constant dense<0.000000e+00> : vector<16x64xf32>
    %263 = tpu.matmul %260, %262, %cst_182 {dimension_numbers = #tpu.dot_dimension_numbers<[1], [0], [0], [1], [0, 0, 1, 1], [], []>} : vector<16x32xbf16>, vector<32x64xbf16>, vector<16x64xf32> -> vector<16x64xf32>
    %c0_183 = arith.constant 0 : index
    %c0_184 = arith.constant 0 : index
    %c0_185 = arith.constant 0 : index
    %264 = vector.load %arg16[%c0_183, %c0_184, %c0_185] : memref<2x1x64xf32, #tpu.memory_space<vmem>>, vector<1x1x64xf32>
    %265 = vector.shape_cast %264 : vector<1x1x64xf32> to vector<1x64xf32>
    %266 = vector.broadcast %265 : vector<1x64xf32> to vector<16x64xf32>
    %267 = arith.addf %263, %266 : vector<16x64xf32>
    %268 = arith.mulf %267, %267 : vector<16x64xf32>
    %269 = arith.mulf %267, %268 : vector<16x64xf32>
    %cst_186 = arith.constant 4.471500e-02 : f32
    %270 = vector.broadcast %cst_186 : f32 to vector<16x64xf32>
    %271 = arith.mulf %270, %269 : vector<16x64xf32>
    %272 = arith.addf %267, %271 : vector<16x64xf32>
    %cst_187 = arith.constant 0.797884583 : f32
    %273 = vector.broadcast %cst_187 : f32 to vector<16x64xf32>
    %274 = arith.mulf %273, %272 : vector<16x64xf32>
    %275 = math.tanh %274 : vector<16x64xf32>
    %cst_188 = arith.constant 1.000000e+00 : f32
    %276 = vector.broadcast %cst_188 : f32 to vector<16x64xf32>
    %277 = arith.addf %276, %275 : vector<16x64xf32>
    %cst_189 = arith.constant 5.000000e-01 : f32
    %278 = vector.broadcast %cst_189 : f32 to vector<16x64xf32>
    %279 = arith.mulf %278, %277 : vector<16x64xf32>
    %280 = arith.mulf %267, %279 : vector<16x64xf32>
    %281 = arith.truncf %280 : vector<16x64xf32> to vector<16x64xbf16>
    %c0_190 = arith.constant 0 : index
    %c0_191 = arith.constant 0 : index
    %c0_192 = arith.constant 0 : index
    %282 = vector.load %arg17[%c0_190, %c0_191, %c0_192] : memref<2x64x32xbf16, #tpu.memory_space<vmem>>, vector<1x64x32xbf16>
    %283 = vector.shape_cast %282 : vector<1x64x32xbf16> to vector<64x32xbf16>
    %cst_193 = arith.constant dense<0.000000e+00> : vector<16x32xf32>
    %284 = tpu.matmul %281, %283, %cst_193 {dimension_numbers = #tpu.dot_dimension_numbers<[1], [0], [0], [1], [0, 0, 1, 1], [], []>} : vector<16x64xbf16>, vector<64x32xbf16>, vector<16x32xf32> -> vector<16x32xf32>
    %c0_194 = arith.constant 0 : index
    %c0_195 = arith.constant 0 : index
    %c0_196 = arith.constant 0 : index
    %285 = vector.load %arg18[%c0_194, %c0_195, %c0_196] : memref<2x1x32xf32, #tpu.memory_space<vmem>>, vector<1x1x32xf32>
    %286 = vector.shape_cast %285 : vector<1x1x32xf32> to vector<1x32xf32>
    %287 = vector.broadcast %286 : vector<1x32xf32> to vector<16x32xf32>
    %288 = arith.addf %284, %287 : vector<16x32xf32>
    %289 = arith.addf %259, %288 : vector<16x32xf32>
    %c0_197 = arith.constant 0 : index
    %c0_198 = arith.constant 0 : index
    %c0_199 = arith.constant 0 : index
    %290 = vector.load %arg19[%c0_197, %c0_198, %c0_199] : memref<2x1x32xf32, #tpu.memory_space<vmem>>, vector<1x1x32xf32>
    %291 = vector.shape_cast %290 : vector<1x1x32xf32> to vector<1x32xf32>
    %c0_200 = arith.constant 0 : index
    %c0_201 = arith.constant 0 : index
    %c0_202 = arith.constant 0 : index
    %292 = vector.load %arg20[%c0_200, %c0_201, %c0_202] : memref<2x1x32xf32, #tpu.memory_space<vmem>>, vector<1x1x32xf32>
    %293 = vector.shape_cast %292 : vector<1x1x32xf32> to vector<1x32xf32>
    %cst_203 = arith.constant dense<0.000000e+00> : vector<16xf32>
    %294 = vector.multi_reduction <add>, %289, %cst_203 [1] : vector<16x32xf32> to vector<16xf32>
    %295 = vector.shape_cast %294 : vector<16xf32> to vector<16x1xf32>
    %cst_204 = arith.constant 3.200000e+01 : f32
    %296 = vector.broadcast %cst_204 : f32 to vector<16x1xf32>
    %297 = arith.divf %295, %296 : vector<16x1xf32>
    %298 = vector.broadcast %297 : vector<16x1xf32> to vector<16x32xf32>
    %299 = arith.subf %289, %298 : vector<16x32xf32>
    %300 = arith.mulf %299, %299 : vector<16x32xf32>
    %cst_205 = arith.constant dense<0.000000e+00> : vector<16xf32>
    %301 = vector.multi_reduction <add>, %300, %cst_205 [1] : vector<16x32xf32> to vector<16xf32>
    %302 = vector.shape_cast %301 : vector<16xf32> to vector<16x1xf32>
    %cst_206 = arith.constant 3.200000e+01 : f32
    %303 = vector.broadcast %cst_206 : f32 to vector<16x1xf32>
    %304 = arith.divf %302, %303 : vector<16x1xf32>
    %305 = vector.broadcast %297 : vector<16x1xf32> to vector<16x32xf32>
    %306 = arith.subf %289, %305 : vector<16x32xf32>
    %cst_207 = arith.constant 9.99999996E-13 : f32
    %307 = vector.broadcast %cst_207 : f32 to vector<16x1xf32>
    %308 = arith.addf %304, %307 : vector<16x1xf32>
    %309 = math.rsqrt %308 : vector<16x1xf32>
    %310 = vector.broadcast %309 : vector<16x1xf32> to vector<16x32xf32>
    %311 = arith.mulf %306, %310 : vector<16x32xf32>
    %312 = vector.broadcast %291 : vector<1x32xf32> to vector<16x32xf32>
    %313 = arith.mulf %311, %312 : vector<16x32xf32>
    %314 = vector.broadcast %293 : vector<1x32xf32> to vector<16x32xf32>
    %315 = arith.addf %313, %314 : vector<16x32xf32>
    %316 = arith.truncf %315 : vector<16x32xf32> to vector<16x32xbf16>
    %317 = vector.extract_strided_slice %316 {offsets = [0, 0], sizes = [8, 32], strides = [1, 1]} : vector<16x32xbf16> to vector<8x32xbf16>
    %318 = vector.extract_strided_slice %26 {offsets = [0, 0, 0], sizes = [1, 1, 8], strides = [1, 1, 1]} : vector<2x1x8xf32> to vector<1x1x8xf32>
    %319 = vector.shape_cast %318 : vector<1x1x8xf32> to vector<1x8xf32>
    %cst_208 = arith.constant 1.000000e+00 : f32
    %320 = vector.broadcast %cst_208 : f32 to vector<1x8xf32>
    %321 = arith.subf %319, %320 : vector<1x8xf32>
    %cst_209 = arith.constant 1.000000e+09 : f32
    %322 = vector.broadcast %cst_209 : f32 to vector<1x8xf32>
    %323 = arith.mulf %321, %322 : vector<1x8xf32>
    %cst_210 = arith.constant 0.000000e+00 : f32
    %324 = vector.broadcast %cst_210 : f32 to vector<8x32xf32>
    %c1_211 = arith.constant 1 : index
    %c0_212 = arith.constant 0 : index
    %c0_213 = arith.constant 0 : index
    %c0_214 = arith.constant 0 : index
    %325 = vector.load %arg5[%c1_211, %c0_212, %c0_213, %c0_214] : memref<2x2x32x16xbf16, #tpu.memory_space<vmem>>, vector<1x1x32x16xbf16>
    %326 = vector.shape_cast %325 : vector<1x1x32x16xbf16> to vector<32x16xbf16>
    %cst_215 = arith.constant dense<0.000000e+00> : vector<8x16xf32>
    %327 = tpu.matmul %317, %326, %cst_215 {dimension_numbers = #tpu.dot_dimension_numbers<[1], [0], [0], [1], [0, 0, 1, 1], [], []>} : vector<8x32xbf16>, vector<32x16xbf16>, vector<8x16xf32> -> vector<8x16xf32>
    %c1_216 = arith.constant 1 : index
    %c0_217 = arith.constant 0 : index
    %c0_218 = arith.constant 0 : index
    %c0_219 = arith.constant 0 : index
    %328 = vector.load %arg8[%c1_216, %c0_217, %c0_218, %c0_219] : memref<2x2x1x16xf32, #tpu.memory_space<vmem>>, vector<1x1x1x16xf32>
    %329 = vector.shape_cast %328 : vector<1x1x1x16xf32> to vector<1x16xf32>
    %330 = vector.broadcast %329 : vector<1x16xf32> to vector<8x16xf32>
    %331 = arith.addf %327, %330 : vector<8x16xf32>
    %c1_220 = arith.constant 1 : index
    %c0_221 = arith.constant 0 : index
    %c0_222 = arith.constant 0 : index
    %c0_223 = arith.constant 0 : index
    %332 = vector.load %arg6[%c1_220, %c0_221, %c0_222, %c0_223] : memref<2x2x32x16xbf16, #tpu.memory_space<vmem>>, vector<1x1x32x16xbf16>
    %333 = vector.shape_cast %332 : vector<1x1x32x16xbf16> to vector<32x16xbf16>
    %cst_224 = arith.constant dense<0.000000e+00> : vector<8x16xf32>
    %334 = tpu.matmul %317, %333, %cst_224 {dimension_numbers = #tpu.dot_dimension_numbers<[1], [0], [0], [1], [0, 0, 1, 1], [], []>} : vector<8x32xbf16>, vector<32x16xbf16>, vector<8x16xf32> -> vector<8x16xf32>
    %c1_225 = arith.constant 1 : index
    %c0_226 = arith.constant 0 : index
    %c0_227 = arith.constant 0 : index
    %c0_228 = arith.constant 0 : index
    %335 = vector.load %arg9[%c1_225, %c0_226, %c0_227, %c0_228] : memref<2x2x1x16xf32, #tpu.memory_space<vmem>>, vector<1x1x1x16xf32>
    %336 = vector.shape_cast %335 : vector<1x1x1x16xf32> to vector<1x16xf32>
    %337 = vector.broadcast %336 : vector<1x16xf32> to vector<8x16xf32>
    %338 = arith.addf %334, %337 : vector<8x16xf32>
    %c1_229 = arith.constant 1 : index
    %c0_230 = arith.constant 0 : index
    %c0_231 = arith.constant 0 : index
    %c0_232 = arith.constant 0 : index
    %339 = vector.load %arg7[%c1_229, %c0_230, %c0_231, %c0_232] : memref<2x2x32x16xbf16, #tpu.memory_space<vmem>>, vector<1x1x32x16xbf16>
    %340 = vector.shape_cast %339 : vector<1x1x32x16xbf16> to vector<32x16xbf16>
    %cst_233 = arith.constant dense<0.000000e+00> : vector<8x16xf32>
    %341 = tpu.matmul %317, %340, %cst_233 {dimension_numbers = #tpu.dot_dimension_numbers<[1], [0], [0], [1], [0, 0, 1, 1], [], []>} : vector<8x32xbf16>, vector<32x16xbf16>, vector<8x16xf32> -> vector<8x16xf32>
    %c1_234 = arith.constant 1 : index
    %c0_235 = arith.constant 0 : index
    %c0_236 = arith.constant 0 : index
    %c0_237 = arith.constant 0 : index
    %342 = vector.load %arg10[%c1_234, %c0_235, %c0_236, %c0_237] : memref<2x2x1x16xf32, #tpu.memory_space<vmem>>, vector<1x1x1x16xf32>
    %343 = vector.shape_cast %342 : vector<1x1x1x16xf32> to vector<1x16xf32>
    %344 = vector.broadcast %343 : vector<1x16xf32> to vector<8x16xf32>
    %345 = arith.addf %341, %344 : vector<8x16xf32>
    %346 = arith.truncf %345 : vector<8x16xf32> to vector<8x16xbf16>
    %347 = arith.truncf %331 : vector<8x16xf32> to vector<8x16xbf16>
    %348 = arith.truncf %338 : vector<8x16xf32> to vector<8x16xbf16>
    %cst_238 = arith.constant dense<0.000000e+00> : vector<8x8xf32>
    %349 = tpu.matmul %347, %348, %cst_238 {dimension_numbers = #tpu.dot_dimension_numbers<[1], [1], [0], [0], [0, 0, 1, 0], [], []>} : vector<8x16xbf16>, vector<8x16xbf16>, vector<8x8xf32> -> vector<8x8xf32>
    %cst_239 = arith.constant 2.500000e-01 : f32
    %350 = vector.broadcast %cst_239 : f32 to vector<8x8xf32>
    %351 = arith.mulf %349, %350 : vector<8x8xf32>
    %352 = vector.broadcast %323 : vector<1x8xf32> to vector<8x8xf32>
    %353 = arith.addf %351, %352 : vector<8x8xf32>
    %cst_240 = arith.constant dense<0xFF800000> : vector<8xf32>
    %354 = vector.multi_reduction <maximumf>, %353, %cst_240 [1] : vector<8x8xf32> to vector<8xf32>
    %355 = vector.shape_cast %354 : vector<8xf32> to vector<8x1xf32>
    %356 = vector.broadcast %355 : vector<8x1xf32> to vector<8x8xf32>
    %357 = arith.subf %353, %356 : vector<8x8xf32>
    %358 = math.exp %357 : vector<8x8xf32>
    %cst_241 = arith.constant dense<0.000000e+00> : vector<8xf32>
    %359 = vector.multi_reduction <add>, %358, %cst_241 [1] : vector<8x8xf32> to vector<8xf32>
    %360 = vector.shape_cast %359 : vector<8xf32> to vector<8x1xf32>
    %361 = tpu.reciprocal %360 {approx = true} : vector<8x1xf32> -> vector<8x1xf32>
    %362 = vector.broadcast %361 : vector<8x1xf32> to vector<8x8xf32>
    %363 = arith.mulf %358, %362 : vector<8x8xf32>
    %364 = arith.truncf %363 : vector<8x8xf32> to vector<8x8xbf16>
    %cst_242 = arith.constant dense<0.000000e+00> : vector<8x16xf32>
    %365 = tpu.matmul %364, %346, %cst_242 {dimension_numbers = #tpu.dot_dimension_numbers<[1], [0], [0], [1], [0, 0, 1, 1], [], []>} : vector<8x8xbf16>, vector<8x16xbf16>, vector<8x16xf32> -> vector<8x16xf32>
    %366 = arith.truncf %365 : vector<8x16xf32> to vector<8x16xbf16>
    %c1_243 = arith.constant 1 : index
    %c0_244 = arith.constant 0 : index
    %c0_245 = arith.constant 0 : index
    %c0_246 = arith.constant 0 : index
    %367 = vector.load %arg11[%c1_243, %c0_244, %c0_245, %c0_246] : memref<2x2x16x32xbf16, #tpu.memory_space<vmem>>, vector<1x1x16x32xbf16>
    %368 = vector.shape_cast %367 : vector<1x1x16x32xbf16> to vector<16x32xbf16>
    %cst_247 = arith.constant dense<0.000000e+00> : vector<8x32xf32>
    %369 = tpu.matmul %366, %368, %cst_247 {dimension_numbers = #tpu.dot_dimension_numbers<[1], [0], [0], [1], [0, 0, 1, 1], [], []>} : vector<8x16xbf16>, vector<16x32xbf16>, vector<8x32xf32> -> vector<8x32xf32>
    %370 = arith.addf %324, %369 : vector<8x32xf32>
    %c1_248 = arith.constant 1 : index
    %c1_249 = arith.constant 1 : index
    %c0_250 = arith.constant 0 : index
    %c0_251 = arith.constant 0 : index
    %371 = vector.load %arg5[%c1_248, %c1_249, %c0_250, %c0_251] : memref<2x2x32x16xbf16, #tpu.memory_space<vmem>>, vector<1x1x32x16xbf16>
    %372 = vector.shape_cast %371 : vector<1x1x32x16xbf16> to vector<32x16xbf16>
    %cst_252 = arith.constant dense<0.000000e+00> : vector<8x16xf32>
    %373 = tpu.matmul %317, %372, %cst_252 {dimension_numbers = #tpu.dot_dimension_numbers<[1], [0], [0], [1], [0, 0, 1, 1], [], []>} : vector<8x32xbf16>, vector<32x16xbf16>, vector<8x16xf32> -> vector<8x16xf32>
    %c1_253 = arith.constant 1 : index
    %c1_254 = arith.constant 1 : index
    %c0_255 = arith.constant 0 : index
    %c0_256 = arith.constant 0 : index
    %374 = vector.load %arg8[%c1_253, %c1_254, %c0_255, %c0_256] : memref<2x2x1x16xf32, #tpu.memory_space<vmem>>, vector<1x1x1x16xf32>
    %375 = vector.shape_cast %374 : vector<1x1x1x16xf32> to vector<1x16xf32>
    %376 = vector.broadcast %375 : vector<1x16xf32> to vector<8x16xf32>
    %377 = arith.addf %373, %376 : vector<8x16xf32>
    %c1_257 = arith.constant 1 : index
    %c1_258 = arith.constant 1 : index
    %c0_259 = arith.constant 0 : index
    %c0_260 = arith.constant 0 : index
    %378 = vector.load %arg6[%c1_257, %c1_258, %c0_259, %c0_260] : memref<2x2x32x16xbf16, #tpu.memory_space<vmem>>, vector<1x1x32x16xbf16>
    %379 = vector.shape_cast %378 : vector<1x1x32x16xbf16> to vector<32x16xbf16>
    %cst_261 = arith.constant dense<0.000000e+00> : vector<8x16xf32>
    %380 = tpu.matmul %317, %379, %cst_261 {dimension_numbers = #tpu.dot_dimension_numbers<[1], [0], [0], [1], [0, 0, 1, 1], [], []>} : vector<8x32xbf16>, vector<32x16xbf16>, vector<8x16xf32> -> vector<8x16xf32>
    %c1_262 = arith.constant 1 : index
    %c1_263 = arith.constant 1 : index
    %c0_264 = arith.constant 0 : index
    %c0_265 = arith.constant 0 : index
    %381 = vector.load %arg9[%c1_262, %c1_263, %c0_264, %c0_265] : memref<2x2x1x16xf32, #tpu.memory_space<vmem>>, vector<1x1x1x16xf32>
    %382 = vector.shape_cast %381 : vector<1x1x1x16xf32> to vector<1x16xf32>
    %383 = vector.broadcast %382 : vector<1x16xf32> to vector<8x16xf32>
    %384 = arith.addf %380, %383 : vector<8x16xf32>
    %c1_266 = arith.constant 1 : index
    %c1_267 = arith.constant 1 : index
    %c0_268 = arith.constant 0 : index
    %c0_269 = arith.constant 0 : index
    %385 = vector.load %arg7[%c1_266, %c1_267, %c0_268, %c0_269] : memref<2x2x32x16xbf16, #tpu.memory_space<vmem>>, vector<1x1x32x16xbf16>
    %386 = vector.shape_cast %385 : vector<1x1x32x16xbf16> to vector<32x16xbf16>
    %cst_270 = arith.constant dense<0.000000e+00> : vector<8x16xf32>
    %387 = tpu.matmul %317, %386, %cst_270 {dimension_numbers = #tpu.dot_dimension_numbers<[1], [0], [0], [1], [0, 0, 1, 1], [], []>} : vector<8x32xbf16>, vector<32x16xbf16>, vector<8x16xf32> -> vector<8x16xf32>
    %c1_271 = arith.constant 1 : index
    %c1_272 = arith.constant 1 : index
    %c0_273 = arith.constant 0 : index
    %c0_274 = arith.constant 0 : index
    %388 = vector.load %arg10[%c1_271, %c1_272, %c0_273, %c0_274] : memref<2x2x1x16xf32, #tpu.memory_space<vmem>>, vector<1x1x1x16xf32>
    %389 = vector.shape_cast %388 : vector<1x1x1x16xf32> to vector<1x16xf32>
    %390 = vector.broadcast %389 : vector<1x16xf32> to vector<8x16xf32>
    %391 = arith.addf %387, %390 : vector<8x16xf32>
    %392 = arith.truncf %391 : vector<8x16xf32> to vector<8x16xbf16>
    %393 = arith.truncf %377 : vector<8x16xf32> to vector<8x16xbf16>
    %394 = arith.truncf %384 : vector<8x16xf32> to vector<8x16xbf16>
    %cst_275 = arith.constant dense<0.000000e+00> : vector<8x8xf32>
    %395 = tpu.matmul %393, %394, %cst_275 {dimension_numbers = #tpu.dot_dimension_numbers<[1], [1], [0], [0], [0, 0, 1, 0], [], []>} : vector<8x16xbf16>, vector<8x16xbf16>, vector<8x8xf32> -> vector<8x8xf32>
    %cst_276 = arith.constant 2.500000e-01 : f32
    %396 = vector.broadcast %cst_276 : f32 to vector<8x8xf32>
    %397 = arith.mulf %395, %396 : vector<8x8xf32>
    %398 = vector.broadcast %323 : vector<1x8xf32> to vector<8x8xf32>
    %399 = arith.addf %397, %398 : vector<8x8xf32>
    %cst_277 = arith.constant dense<0xFF800000> : vector<8xf32>
    %400 = vector.multi_reduction <maximumf>, %399, %cst_277 [1] : vector<8x8xf32> to vector<8xf32>
    %401 = vector.shape_cast %400 : vector<8xf32> to vector<8x1xf32>
    %402 = vector.broadcast %401 : vector<8x1xf32> to vector<8x8xf32>
    %403 = arith.subf %399, %402 : vector<8x8xf32>
    %404 = math.exp %403 : vector<8x8xf32>
    %cst_278 = arith.constant dense<0.000000e+00> : vector<8xf32>
    %405 = vector.multi_reduction <add>, %404, %cst_278 [1] : vector<8x8xf32> to vector<8xf32>
    %406 = vector.shape_cast %405 : vector<8xf32> to vector<8x1xf32>
    %407 = tpu.reciprocal %406 {approx = true} : vector<8x1xf32> -> vector<8x1xf32>
    %408 = vector.broadcast %407 : vector<8x1xf32> to vector<8x8xf32>
    %409 = arith.mulf %404, %408 : vector<8x8xf32>
    %410 = arith.truncf %409 : vector<8x8xf32> to vector<8x8xbf16>
    %cst_279 = arith.constant dense<0.000000e+00> : vector<8x16xf32>
    %411 = tpu.matmul %410, %392, %cst_279 {dimension_numbers = #tpu.dot_dimension_numbers<[1], [0], [0], [1], [0, 0, 1, 1], [], []>} : vector<8x8xbf16>, vector<8x16xbf16>, vector<8x16xf32> -> vector<8x16xf32>
    %412 = arith.truncf %411 : vector<8x16xf32> to vector<8x16xbf16>
    %c1_280 = arith.constant 1 : index
    %c1_281 = arith.constant 1 : index
    %c0_282 = arith.constant 0 : index
    %c0_283 = arith.constant 0 : index
    %413 = vector.load %arg11[%c1_280, %c1_281, %c0_282, %c0_283] : memref<2x2x16x32xbf16, #tpu.memory_space<vmem>>, vector<1x1x16x32xbf16>
    %414 = vector.shape_cast %413 : vector<1x1x16x32xbf16> to vector<16x32xbf16>
    %cst_284 = arith.constant dense<0.000000e+00> : vector<8x32xf32>
    %415 = tpu.matmul %412, %414, %cst_284 {dimension_numbers = #tpu.dot_dimension_numbers<[1], [0], [0], [1], [0, 0, 1, 1], [], []>} : vector<8x16xbf16>, vector<16x32xbf16>, vector<8x32xf32> -> vector<8x32xf32>
    %416 = arith.addf %370, %415 : vector<8x32xf32>
    %417 = vector.extract_strided_slice %316 {offsets = [8, 0], sizes = [8, 32], strides = [1, 1]} : vector<16x32xbf16> to vector<8x32xbf16>
    %418 = vector.extract_strided_slice %26 {offsets = [1, 0, 0], sizes = [1, 1, 8], strides = [1, 1, 1]} : vector<2x1x8xf32> to vector<1x1x8xf32>
    %419 = vector.shape_cast %418 : vector<1x1x8xf32> to vector<1x8xf32>
    %cst_285 = arith.constant 1.000000e+00 : f32
    %420 = vector.broadcast %cst_285 : f32 to vector<1x8xf32>
    %421 = arith.subf %419, %420 : vector<1x8xf32>
    %cst_286 = arith.constant 1.000000e+09 : f32
    %422 = vector.broadcast %cst_286 : f32 to vector<1x8xf32>
    %423 = arith.mulf %421, %422 : vector<1x8xf32>
    %cst_287 = arith.constant 0.000000e+00 : f32
    %424 = vector.broadcast %cst_287 : f32 to vector<8x32xf32>
    %c1_288 = arith.constant 1 : index
    %c0_289 = arith.constant 0 : index
    %c0_290 = arith.constant 0 : index
    %c0_291 = arith.constant 0 : index
    %425 = vector.load %arg5[%c1_288, %c0_289, %c0_290, %c0_291] : memref<2x2x32x16xbf16, #tpu.memory_space<vmem>>, vector<1x1x32x16xbf16>
    %426 = vector.shape_cast %425 : vector<1x1x32x16xbf16> to vector<32x16xbf16>
    %cst_292 = arith.constant dense<0.000000e+00> : vector<8x16xf32>
    %427 = tpu.matmul %417, %426, %cst_292 {dimension_numbers = #tpu.dot_dimension_numbers<[1], [0], [0], [1], [0, 0, 1, 1], [], []>} : vector<8x32xbf16>, vector<32x16xbf16>, vector<8x16xf32> -> vector<8x16xf32>
    %c1_293 = arith.constant 1 : index
    %c0_294 = arith.constant 0 : index
    %c0_295 = arith.constant 0 : index
    %c0_296 = arith.constant 0 : index
    %428 = vector.load %arg8[%c1_293, %c0_294, %c0_295, %c0_296] : memref<2x2x1x16xf32, #tpu.memory_space<vmem>>, vector<1x1x1x16xf32>
    %429 = vector.shape_cast %428 : vector<1x1x1x16xf32> to vector<1x16xf32>
    %430 = vector.broadcast %429 : vector<1x16xf32> to vector<8x16xf32>
    %431 = arith.addf %427, %430 : vector<8x16xf32>
    %c1_297 = arith.constant 1 : index
    %c0_298 = arith.constant 0 : index
    %c0_299 = arith.constant 0 : index
    %c0_300 = arith.constant 0 : index
    %432 = vector.load %arg6[%c1_297, %c0_298, %c0_299, %c0_300] : memref<2x2x32x16xbf16, #tpu.memory_space<vmem>>, vector<1x1x32x16xbf16>
    %433 = vector.shape_cast %432 : vector<1x1x32x16xbf16> to vector<32x16xbf16>
    %cst_301 = arith.constant dense<0.000000e+00> : vector<8x16xf32>
    %434 = tpu.matmul %417, %433, %cst_301 {dimension_numbers = #tpu.dot_dimension_numbers<[1], [0], [0], [1], [0, 0, 1, 1], [], []>} : vector<8x32xbf16>, vector<32x16xbf16>, vector<8x16xf32> -> vector<8x16xf32>
    %c1_302 = arith.constant 1 : index
    %c0_303 = arith.constant 0 : index
    %c0_304 = arith.constant 0 : index
    %c0_305 = arith.constant 0 : index
    %435 = vector.load %arg9[%c1_302, %c0_303, %c0_304, %c0_305] : memref<2x2x1x16xf32, #tpu.memory_space<vmem>>, vector<1x1x1x16xf32>
    %436 = vector.shape_cast %435 : vector<1x1x1x16xf32> to vector<1x16xf32>
    %437 = vector.broadcast %436 : vector<1x16xf32> to vector<8x16xf32>
    %438 = arith.addf %434, %437 : vector<8x16xf32>
    %c1_306 = arith.constant 1 : index
    %c0_307 = arith.constant 0 : index
    %c0_308 = arith.constant 0 : index
    %c0_309 = arith.constant 0 : index
    %439 = vector.load %arg7[%c1_306, %c0_307, %c0_308, %c0_309] : memref<2x2x32x16xbf16, #tpu.memory_space<vmem>>, vector<1x1x32x16xbf16>
    %440 = vector.shape_cast %439 : vector<1x1x32x16xbf16> to vector<32x16xbf16>
    %cst_310 = arith.constant dense<0.000000e+00> : vector<8x16xf32>
    %441 = tpu.matmul %417, %440, %cst_310 {dimension_numbers = #tpu.dot_dimension_numbers<[1], [0], [0], [1], [0, 0, 1, 1], [], []>} : vector<8x32xbf16>, vector<32x16xbf16>, vector<8x16xf32> -> vector<8x16xf32>
    %c1_311 = arith.constant 1 : index
    %c0_312 = arith.constant 0 : index
    %c0_313 = arith.constant 0 : index
    %c0_314 = arith.constant 0 : index
    %442 = vector.load %arg10[%c1_311, %c0_312, %c0_313, %c0_314] : memref<2x2x1x16xf32, #tpu.memory_space<vmem>>, vector<1x1x1x16xf32>
    %443 = vector.shape_cast %442 : vector<1x1x1x16xf32> to vector<1x16xf32>
    %444 = vector.broadcast %443 : vector<1x16xf32> to vector<8x16xf32>
    %445 = arith.addf %441, %444 : vector<8x16xf32>
    %446 = arith.truncf %445 : vector<8x16xf32> to vector<8x16xbf16>
    %447 = arith.truncf %431 : vector<8x16xf32> to vector<8x16xbf16>
    %448 = arith.truncf %438 : vector<8x16xf32> to vector<8x16xbf16>
    %cst_315 = arith.constant dense<0.000000e+00> : vector<8x8xf32>
    %449 = tpu.matmul %447, %448, %cst_315 {dimension_numbers = #tpu.dot_dimension_numbers<[1], [1], [0], [0], [0, 0, 1, 0], [], []>} : vector<8x16xbf16>, vector<8x16xbf16>, vector<8x8xf32> -> vector<8x8xf32>
    %cst_316 = arith.constant 2.500000e-01 : f32
    %450 = vector.broadcast %cst_316 : f32 to vector<8x8xf32>
    %451 = arith.mulf %449, %450 : vector<8x8xf32>
    %452 = vector.broadcast %423 : vector<1x8xf32> to vector<8x8xf32>
    %453 = arith.addf %451, %452 : vector<8x8xf32>
    %cst_317 = arith.constant dense<0xFF800000> : vector<8xf32>
    %454 = vector.multi_reduction <maximumf>, %453, %cst_317 [1] : vector<8x8xf32> to vector<8xf32>
    %455 = vector.shape_cast %454 : vector<8xf32> to vector<8x1xf32>
    %456 = vector.broadcast %455 : vector<8x1xf32> to vector<8x8xf32>
    %457 = arith.subf %453, %456 : vector<8x8xf32>
    %458 = math.exp %457 : vector<8x8xf32>
    %cst_318 = arith.constant dense<0.000000e+00> : vector<8xf32>
    %459 = vector.multi_reduction <add>, %458, %cst_318 [1] : vector<8x8xf32> to vector<8xf32>
    %460 = vector.shape_cast %459 : vector<8xf32> to vector<8x1xf32>
    %461 = tpu.reciprocal %460 {approx = true} : vector<8x1xf32> -> vector<8x1xf32>
    %462 = vector.broadcast %461 : vector<8x1xf32> to vector<8x8xf32>
    %463 = arith.mulf %458, %462 : vector<8x8xf32>
    %464 = arith.truncf %463 : vector<8x8xf32> to vector<8x8xbf16>
    %cst_319 = arith.constant dense<0.000000e+00> : vector<8x16xf32>
    %465 = tpu.matmul %464, %446, %cst_319 {dimension_numbers = #tpu.dot_dimension_numbers<[1], [0], [0], [1], [0, 0, 1, 1], [], []>} : vector<8x8xbf16>, vector<8x16xbf16>, vector<8x16xf32> -> vector<8x16xf32>
    %466 = arith.truncf %465 : vector<8x16xf32> to vector<8x16xbf16>
    %c1_320 = arith.constant 1 : index
    %c0_321 = arith.constant 0 : index
    %c0_322 = arith.constant 0 : index
    %c0_323 = arith.constant 0 : index
    %467 = vector.load %arg11[%c1_320, %c0_321, %c0_322, %c0_323] : memref<2x2x16x32xbf16, #tpu.memory_space<vmem>>, vector<1x1x16x32xbf16>
    %468 = vector.shape_cast %467 : vector<1x1x16x32xbf16> to vector<16x32xbf16>
    %cst_324 = arith.constant dense<0.000000e+00> : vector<8x32xf32>
    %469 = tpu.matmul %466, %468, %cst_324 {dimension_numbers = #tpu.dot_dimension_numbers<[1], [0], [0], [1], [0, 0, 1, 1], [], []>} : vector<8x16xbf16>, vector<16x32xbf16>, vector<8x32xf32> -> vector<8x32xf32>
    %470 = arith.addf %424, %469 : vector<8x32xf32>
    %c1_325 = arith.constant 1 : index
    %c1_326 = arith.constant 1 : index
    %c0_327 = arith.constant 0 : index
    %c0_328 = arith.constant 0 : index
    %471 = vector.load %arg5[%c1_325, %c1_326, %c0_327, %c0_328] : memref<2x2x32x16xbf16, #tpu.memory_space<vmem>>, vector<1x1x32x16xbf16>
    %472 = vector.shape_cast %471 : vector<1x1x32x16xbf16> to vector<32x16xbf16>
    %cst_329 = arith.constant dense<0.000000e+00> : vector<8x16xf32>
    %473 = tpu.matmul %417, %472, %cst_329 {dimension_numbers = #tpu.dot_dimension_numbers<[1], [0], [0], [1], [0, 0, 1, 1], [], []>} : vector<8x32xbf16>, vector<32x16xbf16>, vector<8x16xf32> -> vector<8x16xf32>
    %c1_330 = arith.constant 1 : index
    %c1_331 = arith.constant 1 : index
    %c0_332 = arith.constant 0 : index
    %c0_333 = arith.constant 0 : index
    %474 = vector.load %arg8[%c1_330, %c1_331, %c0_332, %c0_333] : memref<2x2x1x16xf32, #tpu.memory_space<vmem>>, vector<1x1x1x16xf32>
    %475 = vector.shape_cast %474 : vector<1x1x1x16xf32> to vector<1x16xf32>
    %476 = vector.broadcast %475 : vector<1x16xf32> to vector<8x16xf32>
    %477 = arith.addf %473, %476 : vector<8x16xf32>
    %c1_334 = arith.constant 1 : index
    %c1_335 = arith.constant 1 : index
    %c0_336 = arith.constant 0 : index
    %c0_337 = arith.constant 0 : index
    %478 = vector.load %arg6[%c1_334, %c1_335, %c0_336, %c0_337] : memref<2x2x32x16xbf16, #tpu.memory_space<vmem>>, vector<1x1x32x16xbf16>
    %479 = vector.shape_cast %478 : vector<1x1x32x16xbf16> to vector<32x16xbf16>
    %cst_338 = arith.constant dense<0.000000e+00> : vector<8x16xf32>
    %480 = tpu.matmul %417, %479, %cst_338 {dimension_numbers = #tpu.dot_dimension_numbers<[1], [0], [0], [1], [0, 0, 1, 1], [], []>} : vector<8x32xbf16>, vector<32x16xbf16>, vector<8x16xf32> -> vector<8x16xf32>
    %c1_339 = arith.constant 1 : index
    %c1_340 = arith.constant 1 : index
    %c0_341 = arith.constant 0 : index
    %c0_342 = arith.constant 0 : index
    %481 = vector.load %arg9[%c1_339, %c1_340, %c0_341, %c0_342] : memref<2x2x1x16xf32, #tpu.memory_space<vmem>>, vector<1x1x1x16xf32>
    %482 = vector.shape_cast %481 : vector<1x1x1x16xf32> to vector<1x16xf32>
    %483 = vector.broadcast %482 : vector<1x16xf32> to vector<8x16xf32>
    %484 = arith.addf %480, %483 : vector<8x16xf32>
    %c1_343 = arith.constant 1 : index
    %c1_344 = arith.constant 1 : index
    %c0_345 = arith.constant 0 : index
    %c0_346 = arith.constant 0 : index
    %485 = vector.load %arg7[%c1_343, %c1_344, %c0_345, %c0_346] : memref<2x2x32x16xbf16, #tpu.memory_space<vmem>>, vector<1x1x32x16xbf16>
    %486 = vector.shape_cast %485 : vector<1x1x32x16xbf16> to vector<32x16xbf16>
    %cst_347 = arith.constant dense<0.000000e+00> : vector<8x16xf32>
    %487 = tpu.matmul %417, %486, %cst_347 {dimension_numbers = #tpu.dot_dimension_numbers<[1], [0], [0], [1], [0, 0, 1, 1], [], []>} : vector<8x32xbf16>, vector<32x16xbf16>, vector<8x16xf32> -> vector<8x16xf32>
    %c1_348 = arith.constant 1 : index
    %c1_349 = arith.constant 1 : index
    %c0_350 = arith.constant 0 : index
    %c0_351 = arith.constant 0 : index
    %488 = vector.load %arg10[%c1_348, %c1_349, %c0_350, %c0_351] : memref<2x2x1x16xf32, #tpu.memory_space<vmem>>, vector<1x1x1x16xf32>
    %489 = vector.shape_cast %488 : vector<1x1x1x16xf32> to vector<1x16xf32>
    %490 = vector.broadcast %489 : vector<1x16xf32> to vector<8x16xf32>
    %491 = arith.addf %487, %490 : vector<8x16xf32>
    %492 = arith.truncf %491 : vector<8x16xf32> to vector<8x16xbf16>
    %493 = arith.truncf %477 : vector<8x16xf32> to vector<8x16xbf16>
    %494 = arith.truncf %484 : vector<8x16xf32> to vector<8x16xbf16>
    %cst_352 = arith.constant dense<0.000000e+00> : vector<8x8xf32>
    %495 = tpu.matmul %493, %494, %cst_352 {dimension_numbers = #tpu.dot_dimension_numbers<[1], [1], [0], [0], [0, 0, 1, 0], [], []>} : vector<8x16xbf16>, vector<8x16xbf16>, vector<8x8xf32> -> vector<8x8xf32>
    %cst_353 = arith.constant 2.500000e-01 : f32
    %496 = vector.broadcast %cst_353 : f32 to vector<8x8xf32>
    %497 = arith.mulf %495, %496 : vector<8x8xf32>
    %498 = vector.broadcast %423 : vector<1x8xf32> to vector<8x8xf32>
    %499 = arith.addf %497, %498 : vector<8x8xf32>
    %cst_354 = arith.constant dense<0xFF800000> : vector<8xf32>
    %500 = vector.multi_reduction <maximumf>, %499, %cst_354 [1] : vector<8x8xf32> to vector<8xf32>
    %501 = vector.shape_cast %500 : vector<8xf32> to vector<8x1xf32>
    %502 = vector.broadcast %501 : vector<8x1xf32> to vector<8x8xf32>
    %503 = arith.subf %499, %502 : vector<8x8xf32>
    %504 = math.exp %503 : vector<8x8xf32>
    %cst_355 = arith.constant dense<0.000000e+00> : vector<8xf32>
    %505 = vector.multi_reduction <add>, %504, %cst_355 [1] : vector<8x8xf32> to vector<8xf32>
    %506 = vector.shape_cast %505 : vector<8xf32> to vector<8x1xf32>
    %507 = tpu.reciprocal %506 {approx = true} : vector<8x1xf32> -> vector<8x1xf32>
    %508 = vector.broadcast %507 : vector<8x1xf32> to vector<8x8xf32>
    %509 = arith.mulf %504, %508 : vector<8x8xf32>
    %510 = arith.truncf %509 : vector<8x8xf32> to vector<8x8xbf16>
    %cst_356 = arith.constant dense<0.000000e+00> : vector<8x16xf32>
    %511 = tpu.matmul %510, %492, %cst_356 {dimension_numbers = #tpu.dot_dimension_numbers<[1], [0], [0], [1], [0, 0, 1, 1], [], []>} : vector<8x8xbf16>, vector<8x16xbf16>, vector<8x16xf32> -> vector<8x16xf32>
    %512 = arith.truncf %511 : vector<8x16xf32> to vector<8x16xbf16>
    %c1_357 = arith.constant 1 : index
    %c1_358 = arith.constant 1 : index
    %c0_359 = arith.constant 0 : index
    %c0_360 = arith.constant 0 : index
    %513 = vector.load %arg11[%c1_357, %c1_358, %c0_359, %c0_360] : memref<2x2x16x32xbf16, #tpu.memory_space<vmem>>, vector<1x1x16x32xbf16>
    %514 = vector.shape_cast %513 : vector<1x1x16x32xbf16> to vector<16x32xbf16>
    %cst_361 = arith.constant dense<0.000000e+00> : vector<8x32xf32>
    %515 = tpu.matmul %512, %514, %cst_361 {dimension_numbers = #tpu.dot_dimension_numbers<[1], [0], [0], [1], [0, 0, 1, 1], [], []>} : vector<8x16xbf16>, vector<16x32xbf16>, vector<8x32xf32> -> vector<8x32xf32>
    %516 = arith.addf %470, %515 : vector<8x32xf32>
    %517 = tpu.concatenate %416, %516 in 0 : vector<8x32xf32>, vector<8x32xf32> -> vector<16x32xf32>
    %c1_362 = arith.constant 1 : index
    %c0_363 = arith.constant 0 : index
    %c0_364 = arith.constant 0 : index
    %518 = vector.load %arg12[%c1_362, %c0_363, %c0_364] : memref<2x1x32xf32, #tpu.memory_space<vmem>>, vector<1x1x32xf32>
    %519 = vector.shape_cast %518 : vector<1x1x32xf32> to vector<1x32xf32>
    %520 = vector.broadcast %519 : vector<1x32xf32> to vector<16x32xf32>
    %521 = arith.addf %517, %520 : vector<16x32xf32>
    %522 = arith.addf %315, %521 : vector<16x32xf32>
    %c1_365 = arith.constant 1 : index
    %c0_366 = arith.constant 0 : index
    %c0_367 = arith.constant 0 : index
    %523 = vector.load %arg13[%c1_365, %c0_366, %c0_367] : memref<2x1x32xf32, #tpu.memory_space<vmem>>, vector<1x1x32xf32>
    %524 = vector.shape_cast %523 : vector<1x1x32xf32> to vector<1x32xf32>
    %c1_368 = arith.constant 1 : index
    %c0_369 = arith.constant 0 : index
    %c0_370 = arith.constant 0 : index
    %525 = vector.load %arg14[%c1_368, %c0_369, %c0_370] : memref<2x1x32xf32, #tpu.memory_space<vmem>>, vector<1x1x32xf32>
    %526 = vector.shape_cast %525 : vector<1x1x32xf32> to vector<1x32xf32>
    %cst_371 = arith.constant dense<0.000000e+00> : vector<16xf32>
    %527 = vector.multi_reduction <add>, %522, %cst_371 [1] : vector<16x32xf32> to vector<16xf32>
    %528 = vector.shape_cast %527 : vector<16xf32> to vector<16x1xf32>
    %cst_372 = arith.constant 3.200000e+01 : f32
    %529 = vector.broadcast %cst_372 : f32 to vector<16x1xf32>
    %530 = arith.divf %528, %529 : vector<16x1xf32>
    %531 = vector.broadcast %530 : vector<16x1xf32> to vector<16x32xf32>
    %532 = arith.subf %522, %531 : vector<16x32xf32>
    %533 = arith.mulf %532, %532 : vector<16x32xf32>
    %cst_373 = arith.constant dense<0.000000e+00> : vector<16xf32>
    %534 = vector.multi_reduction <add>, %533, %cst_373 [1] : vector<16x32xf32> to vector<16xf32>
    %535 = vector.shape_cast %534 : vector<16xf32> to vector<16x1xf32>
    %cst_374 = arith.constant 3.200000e+01 : f32
    %536 = vector.broadcast %cst_374 : f32 to vector<16x1xf32>
    %537 = arith.divf %535, %536 : vector<16x1xf32>
    %538 = vector.broadcast %530 : vector<16x1xf32> to vector<16x32xf32>
    %539 = arith.subf %522, %538 : vector<16x32xf32>
    %cst_375 = arith.constant 9.99999996E-13 : f32
    %540 = vector.broadcast %cst_375 : f32 to vector<16x1xf32>
    %541 = arith.addf %537, %540 : vector<16x1xf32>
    %542 = math.rsqrt %541 : vector<16x1xf32>
    %543 = vector.broadcast %542 : vector<16x1xf32> to vector<16x32xf32>
    %544 = arith.mulf %539, %543 : vector<16x32xf32>
    %545 = vector.broadcast %524 : vector<1x32xf32> to vector<16x32xf32>
    %546 = arith.mulf %544, %545 : vector<16x32xf32>
    %547 = vector.broadcast %526 : vector<1x32xf32> to vector<16x32xf32>
    %548 = arith.addf %546, %547 : vector<16x32xf32>
    %549 = arith.truncf %548 : vector<16x32xf32> to vector<16x32xbf16>
    %c1_376 = arith.constant 1 : index
    %c0_377 = arith.constant 0 : index
    %c0_378 = arith.constant 0 : index
    %550 = vector.load %arg15[%c1_376, %c0_377, %c0_378] : memref<2x32x64xbf16, #tpu.memory_space<vmem>>, vector<1x32x64xbf16>
    %551 = vector.shape_cast %550 : vector<1x32x64xbf16> to vector<32x64xbf16>
    %cst_379 = arith.constant dense<0.000000e+00> : vector<16x64xf32>
    %552 = tpu.matmul %549, %551, %cst_379 {dimension_numbers = #tpu.dot_dimension_numbers<[1], [0], [0], [1], [0, 0, 1, 1], [], []>} : vector<16x32xbf16>, vector<32x64xbf16>, vector<16x64xf32> -> vector<16x64xf32>
    %c1_380 = arith.constant 1 : index
    %c0_381 = arith.constant 0 : index
    %c0_382 = arith.constant 0 : index
    %553 = vector.load %arg16[%c1_380, %c0_381, %c0_382] : memref<2x1x64xf32, #tpu.memory_space<vmem>>, vector<1x1x64xf32>
    %554 = vector.shape_cast %553 : vector<1x1x64xf32> to vector<1x64xf32>
    %555 = vector.broadcast %554 : vector<1x64xf32> to vector<16x64xf32>
    %556 = arith.addf %552, %555 : vector<16x64xf32>
    %557 = arith.mulf %556, %556 : vector<16x64xf32>
    %558 = arith.mulf %556, %557 : vector<16x64xf32>
    %cst_383 = arith.constant 4.471500e-02 : f32
    %559 = vector.broadcast %cst_383 : f32 to vector<16x64xf32>
    %560 = arith.mulf %559, %558 : vector<16x64xf32>
    %561 = arith.addf %556, %560 : vector<16x64xf32>
    %cst_384 = arith.constant 0.797884583 : f32
    %562 = vector.broadcast %cst_384 : f32 to vector<16x64xf32>
    %563 = arith.mulf %562, %561 : vector<16x64xf32>
    %564 = math.tanh %563 : vector<16x64xf32>
    %cst_385 = arith.constant 1.000000e+00 : f32
    %565 = vector.broadcast %cst_385 : f32 to vector<16x64xf32>
    %566 = arith.addf %565, %564 : vector<16x64xf32>
    %cst_386 = arith.constant 5.000000e-01 : f32
    %567 = vector.broadcast %cst_386 : f32 to vector<16x64xf32>
    %568 = arith.mulf %567, %566 : vector<16x64xf32>
    %569 = arith.mulf %556, %568 : vector<16x64xf32>
    %570 = arith.truncf %569 : vector<16x64xf32> to vector<16x64xbf16>
    %c1_387 = arith.constant 1 : index
    %c0_388 = arith.constant 0 : index
    %c0_389 = arith.constant 0 : index
    %571 = vector.load %arg17[%c1_387, %c0_388, %c0_389] : memref<2x64x32xbf16, #tpu.memory_space<vmem>>, vector<1x64x32xbf16>
    %572 = vector.shape_cast %571 : vector<1x64x32xbf16> to vector<64x32xbf16>
    %cst_390 = arith.constant dense<0.000000e+00> : vector<16x32xf32>
    %573 = tpu.matmul %570, %572, %cst_390 {dimension_numbers = #tpu.dot_dimension_numbers<[1], [0], [0], [1], [0, 0, 1, 1], [], []>} : vector<16x64xbf16>, vector<64x32xbf16>, vector<16x32xf32> -> vector<16x32xf32>
    %c1_391 = arith.constant 1 : index
    %c0_392 = arith.constant 0 : index
    %c0_393 = arith.constant 0 : index
    %574 = vector.load %arg18[%c1_391, %c0_392, %c0_393] : memref<2x1x32xf32, #tpu.memory_space<vmem>>, vector<1x1x32xf32>
    %575 = vector.shape_cast %574 : vector<1x1x32xf32> to vector<1x32xf32>
    %576 = vector.broadcast %575 : vector<1x32xf32> to vector<16x32xf32>
    %577 = arith.addf %573, %576 : vector<16x32xf32>
    %578 = arith.addf %548, %577 : vector<16x32xf32>
    %c1_394 = arith.constant 1 : index
    %c0_395 = arith.constant 0 : index
    %c0_396 = arith.constant 0 : index
    %579 = vector.load %arg19[%c1_394, %c0_395, %c0_396] : memref<2x1x32xf32, #tpu.memory_space<vmem>>, vector<1x1x32xf32>
    %580 = vector.shape_cast %579 : vector<1x1x32xf32> to vector<1x32xf32>
    %c1_397 = arith.constant 1 : index
    %c0_398 = arith.constant 0 : index
    %c0_399 = arith.constant 0 : index
    %581 = vector.load %arg20[%c1_397, %c0_398, %c0_399] : memref<2x1x32xf32, #tpu.memory_space<vmem>>, vector<1x1x32xf32>
    %582 = vector.shape_cast %581 : vector<1x1x32xf32> to vector<1x32xf32>
    %cst_400 = arith.constant dense<0.000000e+00> : vector<16xf32>
    %583 = vector.multi_reduction <add>, %578, %cst_400 [1] : vector<16x32xf32> to vector<16xf32>
    %584 = vector.shape_cast %583 : vector<16xf32> to vector<16x1xf32>
    %cst_401 = arith.constant 3.200000e+01 : f32
    %585 = vector.broadcast %cst_401 : f32 to vector<16x1xf32>
    %586 = arith.divf %584, %585 : vector<16x1xf32>
    %587 = vector.broadcast %586 : vector<16x1xf32> to vector<16x32xf32>
    %588 = arith.subf %578, %587 : vector<16x32xf32>
    %589 = arith.mulf %588, %588 : vector<16x32xf32>
    %cst_402 = arith.constant dense<0.000000e+00> : vector<16xf32>
    %590 = vector.multi_reduction <add>, %589, %cst_402 [1] : vector<16x32xf32> to vector<16xf32>
    %591 = vector.shape_cast %590 : vector<16xf32> to vector<16x1xf32>
    %cst_403 = arith.constant 3.200000e+01 : f32
    %592 = vector.broadcast %cst_403 : f32 to vector<16x1xf32>
    %593 = arith.divf %591, %592 : vector<16x1xf32>
    %594 = vector.broadcast %586 : vector<16x1xf32> to vector<16x32xf32>
    %595 = arith.subf %578, %594 : vector<16x32xf32>
    %cst_404 = arith.constant 9.99999996E-13 : f32
    %596 = vector.broadcast %cst_404 : f32 to vector<16x1xf32>
    %597 = arith.addf %593, %596 : vector<16x1xf32>
    %598 = math.rsqrt %597 : vector<16x1xf32>
    %599 = vector.broadcast %598 : vector<16x1xf32> to vector<16x32xf32>
    %600 = arith.mulf %595, %599 : vector<16x32xf32>
    %601 = vector.broadcast %580 : vector<1x32xf32> to vector<16x32xf32>
    %602 = arith.mulf %600, %601 : vector<16x32xf32>
    %603 = vector.broadcast %582 : vector<1x32xf32> to vector<16x32xf32>
    %604 = arith.addf %602, %603 : vector<16x32xf32>
    %605 = vector.extract_strided_slice %604 {offsets = [0, 0], sizes = [1, 32], strides = [1, 1]} : vector<16x32xf32> to vector<1x32xf32>
    %606 = vector.extract_strided_slice %604 {offsets = [8, 0], sizes = [1, 32], strides = [1, 1]} : vector<16x32xf32> to vector<1x32xf32>
    %607 = tpu.concatenate %605, %606 in 0 : vector<1x32xf32>, vector<1x32xf32> -> vector<2x32xf32>
    %c0_405 = arith.constant 0 : index
    %c0_406 = arith.constant 0 : index
    %608 = vector.load %arg21[%c0_405, %c0_406] : memref<32x2xf32, #tpu.memory_space<vmem>>, vector<32x2xf32>
    %cst_407 = arith.constant dense<0.000000e+00> : vector<2x2xf32>
    %609 = tpu.matmul %607, %608, %cst_407 {dimension_numbers = #tpu.dot_dimension_numbers<[1], [0], [0], [1], [0, 0, 1, 1], [], []>} : vector<2x32xf32>, vector<32x2xf32>, vector<2x2xf32> -> vector<2x2xf32>
    %c0_408 = arith.constant 0 : index
    %c0_409 = arith.constant 0 : index
    %610 = vector.load %arg22[%c0_408, %c0_409] : memref<1x2xf32, #tpu.memory_space<vmem>>, vector<1x2xf32>
    %611 = vector.broadcast %610 : vector<1x2xf32> to vector<2x2xf32>
    %612 = arith.addf %609, %611 : vector<2x2xf32>
    %c0_410 = arith.constant 0 : index
    %c0_411 = arith.constant 0 : index
    %613 = vector.load %arg23[%c0_410, %c0_411] : memref<2x2xf32, #tpu.memory_space<vmem>>, vector<2x2xf32>
    tpu.vector_store %arg23[%c0_410, %c0_411], %612 {strides = array<i32>} : memref<2x2xf32, #tpu.memory_space<vmem>>, vector<2x2xf32>,
    return
  }
  func.func @transform_0(%arg0: i32) -> (i32, i32) {
    %c0_i32 = arith.constant 0 : i32
    %c0_i32_0 = arith.constant 0 : i32
    %c0_i32_1 = arith.constant 0 : i32
    return %c0_i32, %c0_i32_0 : i32, i32
  }
  func.func @transform_1(%arg0: i32) -> (i32, i32, i32) {
    %c0_i32 = arith.constant 0 : i32
    %c0_i32_0 = arith.constant 0 : i32
    %c0_i32_1 = arith.constant 0 : i32
    %c0_i32_2 = arith.constant 0 : i32
    return %c0_i32, %c0_i32_0, %c0_i32_1 : i32, i32, i32
  }
  func.func @transform_2(%arg0: i32) -> (i32, i32) {
    %c0_i32 = arith.constant 0 : i32
    %c0_i32_0 = arith.constant 0 : i32
    %c0_i32_1 = arith.constant 0 : i32
    return %c0_i32, %c0_i32_0 : i32, i32
  }
  func.func @transform_3(%arg0: i32) -> (i32, i32) {
    %c0_i32 = arith.constant 0 : i32
    %c0_i32_0 = arith.constant 0 : i32
    %c0_i32_1 = arith.constant 0 : i32
    return %c0_i32, %c0_i32_0 : i32, i32
  }
  func.func @transform_4(%arg0: i32) -> (i32, i32, i32, i32) {
    %c0_i32 = arith.constant 0 : i32
    %c0_i32_0 = arith.constant 0 : i32
    %c0_i32_1 = arith.constant 0 : i32
    %c0_i32_2 = arith.constant 0 : i32
    %c0_i32_3 = arith.constant 0 : i32
    return %c0_i32, %c0_i32_0, %c0_i32_1, %c0_i32_2 : i32, i32, i32, i32
  }
  func.func @transform_5(%arg0: i32) -> (i32, i32, i32, i32) {
    %c0_i32 = arith.constant 0 : i32
    %c0_i32_0 = arith.constant 0 : i32
    %c0_i32_1 = arith.constant 0 : i32
    %c0_i32_2 = arith.constant 0 : i32
    %c0_i32_3 = arith.constant 0 : i32
    return %c0_i32, %c0_i32_0, %c0_i32_1, %c0_i32_2 : i32, i32, i32, i32
  }
  func.func @transform_6(%arg0: i32) -> (i32, i32, i32, i32) {
    %c0_i32 = arith.constant 0 : i32
    %c0_i32_0 = arith.constant 0 : i32
    %c0_i32_1 = arith.constant 0 : i32
    %c0_i32_2 = arith.constant 0 : i32
    %c0_i32_3 = arith.constant 0 : i32
    return %c0_i32, %c0_i32_0, %c0_i32_1, %c0_i32_2 : i32, i32, i32, i32
  }
  func.func @transform_7(%arg0: i32) -> (i32, i32, i32, i32) {
    %c0_i32 = arith.constant 0 : i32
    %c0_i32_0 = arith.constant 0 : i32
    %c0_i32_1 = arith.constant 0 : i32
    %c0_i32_2 = arith.constant 0 : i32
    %c0_i32_3 = arith.constant 0 : i32
    return %c0_i32, %c0_i32_0, %c0_i32_1, %c0_i32_2 : i32, i32, i32, i32
  }
  func.func @transform_8(%arg0: i32) -> (i32, i32, i32, i32) {
    %c0_i32 = arith.constant 0 : i32
    %c0_i32_0 = arith.constant 0 : i32
    %c0_i32_1 = arith.constant 0 : i32
    %c0_i32_2 = arith.constant 0 : i32
    %c0_i32_3 = arith.constant 0 : i32
    return %c0_i32, %c0_i32_0, %c0_i32_1, %c0_i32_2 : i32, i32, i32, i32
  }
  func.func @transform_9(%arg0: i32) -> (i32, i32, i32, i32) {
    %c0_i32 = arith.constant 0 : i32
    %c0_i32_0 = arith.constant 0 : i32
    %c0_i32_1 = arith.constant 0 : i32
    %c0_i32_2 = arith.constant 0 : i32
    %c0_i32_3 = arith.constant 0 : i32
    return %c0_i32, %c0_i32_0, %c0_i32_1, %c0_i32_2 : i32, i32, i32, i32
  }
  func.func @transform_10(%arg0: i32) -> (i32, i32, i32, i32) {
    %c0_i32 = arith.constant 0 : i32
    %c0_i32_0 = arith.constant 0 : i32
    %c0_i32_1 = arith.constant 0 : i32
    %c0_i32_2 = arith.constant 0 : i32
    %c0_i32_3 = arith.constant 0 : i32
    return %c0_i32, %c0_i32_0, %c0_i32_1, %c0_i32_2 : i32, i32, i32, i32
  }
  func.func @transform_11(%arg0: i32) -> (i32, i32, i32) {
    %c0_i32 = arith.constant 0 : i32
    %c0_i32_0 = arith.constant 0 : i32
    %c0_i32_1 = arith.constant 0 : i32
    %c0_i32_2 = arith.constant 0 : i32
    return %c0_i32, %c0_i32_0, %c0_i32_1 : i32, i32, i32
  }
  func.func @transform_12(%arg0: i32) -> (i32, i32, i32) {
    %c0_i32 = arith.constant 0 : i32
    %c0_i32_0 = arith.constant 0 : i32
    %c0_i32_1 = arith.constant 0 : i32
    %c0_i32_2 = arith.constant 0 : i32
    return %c0_i32, %c0_i32_0, %c0_i32_1 : i32, i32, i32
  }
  func.func @transform_13(%arg0: i32) -> (i32, i32, i32) {
    %c0_i32 = arith.constant 0 : i32
    %c0_i32_0 = arith.constant 0 : i32
    %c0_i32_1 = arith.constant 0 : i32
    %c0_i32_2 = arith.constant 0 : i32
    return %c0_i32, %c0_i32_0, %c0_i32_1 : i32, i32, i32
  }
  func.func @transform_14(%arg0: i32) -> (i32, i32, i32) {
    %c0_i32 = arith.constant 0 : i32
    %c0_i32_0 = arith.constant 0 : i32
    %c0_i32_1 = arith.constant 0 : i32
    %c0_i32_2 = arith.constant 0 : i32
    return %c0_i32, %c0_i32_0, %c0_i32_1 : i32, i32, i32
  }
  func.func @transform_15(%arg0: i32) -> (i32, i32, i32) {
    %c0_i32 = arith.constant 0 : i32
    %c0_i32_0 = arith.constant 0 : i32
    %c0_i32_1 = arith.constant 0 : i32
    %c0_i32_2 = arith.constant 0 : i32
    return %c0_i32, %c0_i32_0, %c0_i32_1 : i32, i32, i32
  }
  func.func @transform_16(%arg0: i32) -> (i32, i32, i32) {
    %c0_i32 = arith.constant 0 : i32
    %c0_i32_0 = arith.constant 0 : i32
    %c0_i32_1 = arith.constant 0 : i32
    %c0_i32_2 = arith.constant 0 : i32
    return %c0_i32, %c0_i32_0, %c0_i32_1 : i32, i32, i32
  }
  func.func @transform_17(%arg0: i32) -> (i32, i32, i32) {
    %c0_i32 = arith.constant 0 : i32
    %c0_i32_0 = arith.constant 0 : i32
    %c0_i32_1 = arith.constant 0 : i32
    %c0_i32_2 = arith.constant 0 : i32
    return %c0_i32, %c0_i32_0, %c0_i32_1 : i32, i32, i32
  }
  func.func @transform_18(%arg0: i32) -> (i32, i32, i32) {
    %c0_i32 = arith.constant 0 : i32
    %c0_i32_0 = arith.constant 0 : i32
    %c0_i32_1 = arith.constant 0 : i32
    %c0_i32_2 = arith.constant 0 : i32
    return %c0_i32, %c0_i32_0, %c0_i32_1 : i32, i32, i32
  }
  func.func @transform_19(%arg0: i32) -> (i32, i32, i32) {
    %c0_i32 = arith.constant 0 : i32
    %c0_i32_0 = arith.constant 0 : i32
    %c0_i32_1 = arith.constant 0 : i32
    %c0_i32_2 = arith.constant 0 : i32
    return %c0_i32, %c0_i32_0, %c0_i32_1 : i32, i32, i32
  }
  func.func @transform_20(%arg0: i32) -> (i32, i32) {
    %c0_i32 = arith.constant 0 : i32
    %c0_i32_0 = arith.constant 0 : i32
    %c0_i32_1 = arith.constant 0 : i32
    return %c0_i32, %c0_i32_0 : i32, i32
  }
  func.func @transform_21(%arg0: i32) -> (i32, i32) {
    %c0_i32 = arith.constant 0 : i32
    %c0_i32_0 = arith.constant 0 : i32
    %c0_i32_1 = arith.constant 0 : i32
    return %c0_i32, %c0_i32_0 : i32, i32
  }
  func.func @transform_22(%arg0: i32) -> (i32, i32) {
    %c0_i32 = arith.constant 0 : i32
    %c0_i32_0 = arith.constant 0 : i32
    %c0_i32_1 = arith.constant 0 : i32
    return %c0_i32, %c0_i32_0 : i32, i32
  }
}

</mosaic_0001>

<llo_original>
// kernel: bert_pairwise_cls_forward.1
$region0: #{bert_pairwise_cls_forward.1}
  #allocation0 [shape = 'u32[]', space=smem, size = 0x4, offset = 0x4, fixed_abs, tag = 'smem constant byte address 0x4 - core index']
  #allocation1 [shape = 'u32[144,128]{1,0:T(1,128)}', space=vmem, size = 0x12000, scoped, tag = 'internal scratch']
  %s0 = inlined_call_operand.vmem [shape: f32[16,32], index: 0, kind: input, shape index: {}]
  %s1 = inlined_call_operand.vmem [shape: s32[2,1,8], index: 1, kind: input, shape index: {}]
  %s2 = inlined_call_operand.vmem [shape: f32[1,32], index: 2, kind: input, shape index: {}]
  %s3 = inlined_call_operand.vmem [shape: f32[1,32], index: 3, kind: input, shape index: {}]
  %s4 = inlined_call_operand.vmem [shape: bf16[2,2,32,16], index: 4, kind: input, shape index: {}]
  %s5 = inlined_call_operand.vmem [shape: bf16[2,2,32,16], index: 5, kind: input, shape index: {}]
  %s6 = inlined_call_operand.vmem [shape: bf16[2,2,32,16], index: 6, kind: input, shape index: {}]
  %s7 = inlined_call_operand.vmem [shape: f32[2,2,1,16], index: 7, kind: input, shape index: {}]
  %s8 = inlined_call_operand.vmem [shape: f32[2,2,1,16], index: 8, kind: input, shape index: {}]
  %s9 = inlined_call_operand.vmem [shape: f32[2,2,1,16], index: 9, kind: input, shape index: {}]
  %s10 = inlined_call_operand.vmem [shape: bf16[2,2,16,32], index: 10, kind: input, shape index: {}]
  %s11 = inlined_call_operand.vmem [shape: f32[2,1,32], index: 11, kind: input, shape index: {}]
  %s12 = inlined_call_operand.vmem [shape: f32[2,1,32], index: 12, kind: input, shape index: {}]
  %s13 = inlined_call_operand.vmem [shape: f32[2,1,32], index: 13, kind: input, shape index: {}]
  %s14 = inlined_call_operand.vmem [shape: bf16[2,32,64], index: 14, kind: input, shape index: {}]
  %s15 = inlined_call_operand.vmem [shape: f32[2,1,64], index: 15, kind: input, shape index: {}]
  %s16 = inlined_call_operand.vmem [shape: bf16[2,64,32], index: 16, kind: input, shape index: {}]
  %s17 = inlined_call_operand.vmem [shape: f32[2,1,32], index: 17, kind: input, shape index: {}]
  %s18 = inlined_call_operand.vmem [shape: f32[2,1,32], index: 18, kind: input, shape index: {}]
  %s19 = inlined_call_operand.vmem [shape: f32[2,1,32], index: 19, kind: input, shape index: {}]
  %s20 = inlined_call_operand.vmem [shape: f32[32,2], index: 20, kind: input, shape index: {}]
  %s21 = inlined_call_operand.vmem [shape: f32[1,2], index: 21, kind: input, shape index: {}]
  %s22 = inlined_call_operand.hbm [shape: f32[2,2], index: 22, kind: output, shape index: {}]
  %s23 = sld [smem:[#allocation0]]
  $region98: #{bert_pairwise_cls_forward.1} parent=0
    _
  %s25 = ssub.s32 1, %s23
  %s26 = scalar_select 0, %s25, %s23
  $region1: #{bert_pairwise_cls_forward.1} parent=0
    #allocation2 [shape = 'u8[1024]{0}', space=vmem, size = 0x400, scoped, tag = 'output window, operand 0, single buffered']
    #allocation3 [shape = 's32[1]{0}', space=sflag, size = 0x4, scoped, tag = 'scoped memory for bert_pairwise_cls_forward.1']
    %27 = vsyncpa [#allocation3], 0
    // Predicated region
    $region2: #{bert_pairwise_cls_forward.1} parent=1 // pred_check
      _
    $region3: #{bert_pairwise_cls_forward.1} parent=1 // pred_check_branch
      %29 = sbr.rel (0) target = $region5
    $region4: #{bert_pairwise_cls_forward.1} parent=1 // pred_region
      _
    $region5: #{bert_pairwise_cls_forward.1} parent=1 // pred_fallthru
      _
    // Predicated region
    $region6: #{bert_pairwise_cls_forward.1} parent=1 // pred_check
      _
    $region7: #{bert_pairwise_cls_forward.1} parent=1 // pred_check_branch
      %31 = sbr.rel (0) target = $region9
    $region8: #{bert_pairwise_cls_forward.1} parent=1 // pred_region
      _
    $region9: #{bert_pairwise_cls_forward.1} parent=1 // pred_fallthru
      _
    // Predicated region
    $region10: #{bert_pairwise_cls_forward.1} parent=1 // pred_check
      _
    $region11: #{bert_pairwise_cls_forward.1} parent=1 // pred_check_branch
      %33 = sbr.rel (0) target = $region13
    $region12: #{bert_pairwise_cls_forward.1} parent=1 // pred_region
      _
    $region13: #{bert_pairwise_cls_forward.1} parent=1 // pred_fallthru
      _
    // Predicated region
    $region14: #{bert_pairwise_cls_forward.1} parent=1 // pred_check
      _
    $region15: #{bert_pairwise_cls_forward.1} parent=1 // pred_check_branch
      %35 = sbr.rel (0) target = $region17
    $region16: #{bert_pairwise_cls_forward.1} parent=1 // pred_region
      _
    $region17: #{bert_pairwise_cls_forward.1} parent=1 // pred_fallthru
      _
    // Predicated region
    $region18: #{bert_pairwise_cls_forward.1} parent=1 // pred_check
      _
    $region19: #{bert_pairwise_cls_forward.1} parent=1 // pred_check_branch
      %37 = sbr.rel (0) target = $region21
    $region20: #{bert_pairwise_cls_forward.1} parent=1 // pred_region
      _
    $region21: #{bert_pairwise_cls_forward.1} parent=1 // pred_fallthru
      _
    // Predicated region
    $region22: #{bert_pairwise_cls_forward.1} parent=1 // pred_check
      _
    $region23: #{bert_pairwise_cls_forward.1} parent=1 // pred_check_branch
      %39 = sbr.rel (0) target = $region25
    $region24: #{bert_pairwise_cls_forward.1} parent=1 // pred_region
      _
    $region25: #{bert_pairwise_cls_forward.1} parent=1 // pred_fallthru
      _
    // Predicated region
    $region26: #{bert_pairwise_cls_forward.1} parent=1 // pred_check
      _
    $region27: #{bert_pairwise_cls_forward.1} parent=1 // pred_check_branch
      %41 = sbr.rel (0) target = $region29
    $region28: #{bert_pairwise_cls_forward.1} parent=1 // pred_region
      _
    $region29: #{bert_pairwise_cls_forward.1} parent=1 // pred_fallthru
      _
    // Predicated region
    $region30: #{bert_pairwise_cls_forward.1} parent=1 // pred_check
      _
    $region31: #{bert_pairwise_cls_forward.1} parent=1 // pred_check_branch
      %43 = sbr.rel (0) target = $region33
    $region32: #{bert_pairwise_cls_forward.1} parent=1 // pred_region
      _
    $region33: #{bert_pairwise_cls_forward.1} parent=1 // pred_fallthru
      _
    // Predicated region
    $region34: #{bert_pairwise_cls_forward.1} parent=1 // pred_check
      _
    $region35: #{bert_pairwise_cls_forward.1} parent=1 // pred_check_branch
      %45 = sbr.rel (0) target = $region37
    $region36: #{bert_pairwise_cls_forward.1} parent=1 // pred_region
      _
    $region37: #{bert_pairwise_cls_forward.1} parent=1 // pred_fallthru
      _
    // Predicated region
    $region38: #{bert_pairwise_cls_forward.1} parent=1 // pred_check
      _
    $region39: #{bert_pairwise_cls_forward.1} parent=1 // pred_check_branch
      %47 = sbr.rel (0) target = $region41
    $region40: #{bert_pairwise_cls_forward.1} parent=1 // pred_region
      _
    $region41: #{bert_pairwise_cls_forward.1} parent=1 // pred_fallthru
      _
    // Predicated region
    $region42: #{bert_pairwise_cls_forward.1} parent=1 // pred_check
      _
    $region43: #{bert_pairwise_cls_forward.1} parent=1 // pred_check_branch
      %49 = sbr.rel (0) target = $region45
    $region44: #{bert_pairwise_cls_forward.1} parent=1 // pred_region
      _
    $region45: #{bert_pairwise_cls_forward.1} parent=1 // pred_fallthru
      _
    // Predicated region
    $region46: #{bert_pairwise_cls_forward.1} parent=1 // pred_check
      _
    $region47: #{bert_pairwise_cls_forward.1} parent=1 // pred_check_branch
      %51 = sbr.rel (0) target = $region49
    $region48: #{bert_pairwise_cls_forward.1} parent=1 // pred_region
      _
    $region49: #{bert_pairwise_cls_forward.1} parent=1 // pred_fallthru
      _
    // Predicated region
    $region50: #{bert_pairwise_cls_forward.1} parent=1 // pred_check
      _
    $region51: #{bert_pairwise_cls_forward.1} parent=1 // pred_check_branch
      %53 = sbr.rel (0) target = $region53
    $region52: #{bert_pairwise_cls_forward.1} parent=1 // pred_region
      _
    $region53: #{bert_pairwise_cls_forward.1} parent=1 // pred_fallthru
      _
    // Predicated region
    $region54: #{bert_pairwise_cls_forward.1} parent=1 // pred_check
      _
    $region55: #{bert_pairwise_cls_forward.1} parent=1 // pred_check_branch
      %55 = sbr.rel (0) target = $region57
    $region56: #{bert_pairwise_cls_forward.1} parent=1 // pred_region
      _
    $region57: #{bert_pairwise_cls_forward.1} parent=1 // pred_fallthru
      _
    // Predicated region
    $region58: #{bert_pairwise_cls_forward.1} parent=1 // pred_check
      _
    $region59: #{bert_pairwise_cls_forward.1} parent=1 // pred_check_branch
      %57 = sbr.rel (0) target = $region61
    $region60: #{bert_pairwise_cls_forward.1} parent=1 // pred_region
      _
    $region61: #{bert_pairwise_cls_forward.1} parent=1 // pred_fallthru
      _
    // Predicated region
    $region62: #{bert_pairwise_cls_forward.1} parent=1 // pred_check
      _
    $region63: #{bert_pairwise_cls_forward.1} parent=1 // pred_check_branch
      %59 = sbr.rel (0) target = $region65
    $region64: #{bert_pairwise_cls_forward.1} parent=1 // pred_region
      _
    $region65: #{bert_pairwise_cls_forward.1} parent=1 // pred_fallthru
      _
    // Predicated region
    $region66: #{bert_pairwise_cls_forward.1} parent=1 // pred_check
      _
    $region67: #{bert_pairwise_cls_forward.1} parent=1 // pred_check_branch
      %61 = sbr.rel (0) target = $region69
    $region68: #{bert_pairwise_cls_forward.1} parent=1 // pred_region
      _
    $region69: #{bert_pairwise_cls_forward.1} parent=1 // pred_fallthru
      _
    // Predicated region
    $region70: #{bert_pairwise_cls_forward.1} parent=1 // pred_check
      _
    $region71: #{bert_pairwise_cls_forward.1} parent=1 // pred_check_branch
      %63 = sbr.rel (0) target = $region73
    $region72: #{bert_pairwise_cls_forward.1} parent=1 // pred_region
      _
    $region73: #{bert_pairwise_cls_forward.1} parent=1 // pred_fallthru
      _
    // Predicated region
    $region74: #{bert_pairwise_cls_forward.1} parent=1 // pred_check
      _
    $region75: #{bert_pairwise_cls_forward.1} parent=1 // pred_check_branch
      %65 = sbr.rel (0) target = $region77
    $region76: #{bert_pairwise_cls_forward.1} parent=1 // pred_region
      _
    $region77: #{bert_pairwise_cls_forward.1} parent=1 // pred_fallthru
      _
    // Predicated region
    $region78: #{bert_pairwise_cls_forward.1} parent=1 // pred_check
      _
    $region79: #{bert_pairwise_cls_forward.1} parent=1 // pred_check_branch
      %67 = sbr.rel (0) target = $region81
    $region80: #{bert_pairwise_cls_forward.1} parent=1 // pred_region
      _
    $region81: #{bert_pairwise_cls_forward.1} parent=1 // pred_fallthru
      _
    // Predicated region
    $region82: #{bert_pairwise_cls_forward.1} parent=1 // pred_check
      _
    $region83: #{bert_pairwise_cls_forward.1} parent=1 // pred_check_branch
      %69 = sbr.rel (0) target = $region85
    $region84: #{bert_pairwise_cls_forward.1} parent=1 // pred_region
      _
    $region85: #{bert_pairwise_cls_forward.1} parent=1 // pred_fallthru
      _
    // Predicated region
    $region86: #{bert_pairwise_cls_forward.1} parent=1 // pred_check
      _
    $region87: #{bert_pairwise_cls_forward.1} parent=1 // pred_check_branch
      %71 = sbr.rel (0) target = $region89
    $region88: #{bert_pairwise_cls_forward.1} parent=1 // pred_region
      _
    $region89: #{bert_pairwise_cls_forward.1} parent=1 // pred_fallthru
      _
    %v73 = vld [vmem:[%s0] sm:$0xff]
    %v74 = vld [vmem:[%s0 + $0x8] sm:$0xff]
    %v75 = vld [vmem:[%s2] sm:$0x1]
    %v76 = vld [vmem:[%s3] sm:$0x1]
    %vm77 = vcmask 261120
    %v78 = vsel %vm77, %v73, 0.0
    %79 = vadd.xlane.f32.xlu0 %v78
    %v80 = vpop.xlane.xlu0 %79
    %v81 = vsel %vm77, %v74, 0.0
    %82 = vadd.xlane.f32.xlu0 %v81
    %v83 = vpop.xlane.xlu0 %82
    %v84 = vrcp.pop 32.0
    %v85 = vmul.f32 %v80, %v84
    %v86 = vmul.f32 %v83, %v84
    %v87 = vsub.f32 %v73, %v85
    %v88 = vsub.f32 %v74, %v86
    %v89 = vmul.f32 %v87, %v87
    %v90 = vmul.f32 %v88, %v88
    %v91 = vsel %vm77, %v89, 0.0
    %92 = vadd.xlane.f32.xlu0 %v91
    %v93 = vpop.xlane.xlu0 %92
    %v94 = vsel %vm77, %v90, 0.0
    %95 = vadd.xlane.f32.xlu0 %v94
    %v96 = vpop.xlane.xlu0 %95
    %v97 = vmul.f32 %v93, %v84
    %v98 = vmul.f32 %v96, %v84
    %v99 = vadd.f32 %v97, 1e-12
    %v100 = vadd.f32 %v98, 1e-12
    %v101 = vrsqrt.pop %v99
    %v102 = vrsqrt.pop %v100
    %v103 = vmul.f32 %v87, %v101
    %v104 = vmul.f32 %v88, %v102
    %v106 = vlaneseq
    %v107 = vshrl.u32 %v106, 7
    %v108 = vsub.s32 0, %v107
    %v109 = vrot.slane %v75, %v108
    %v111 = vmul.f32 %v103, %v109
    %v112 = vmul.f32 %v104, %v109
    %v114 = vlaneseq
    %v115 = vshrl.u32 %v114, 7
    %v116 = vsub.s32 0, %v115
    %v117 = vrot.slane %v76, %v116
    %v119 = vadd.f32 %v111, %v117
    %v120 = vadd.f32 %v112, %v117
    %v121 = vld [vmem:[%s1] sm:$0x1]
    %v122 = vld [vmem:[%s1 + $0x1] sm:$0x1]
    %v123 = vcvt.s32.f32 %v121
    %v124 = vcvt.s32.f32 %v122
    %v125 = vpack.c.bf16 %v120, %v119
    %v126 = vsub.f32 %v123, 1.0
    %v127 = vmul.f32 %v126, 1e+09
    %v128 = vld [vmem:[%s4] sm:$0xf]
    %v129 = vld [vmem:[%s4 + $0x4] sm:$0xf]
    %v130 = vld [vmem:[%s4 + $0x8] sm:$0xf]
    %v131 = vld [vmem:[%s4 + $0xc] sm:$0xf]
    %v132 = vld [vmem:[%s7] sm:$0x1]
    %v134 = vlaneseq
    %v135 = vshrl.u32 %v134, 7
    %v136 = vsub.s32 0, %v135
    %v137 = vrot.slane %v132, %v136
    %v143 = vunpack.c.l.b16 %v128
    %v144 = vunpack.c.l.b16 %v129
    %v145 = vunpack.c.l.b16 %v130
    %v146 = vunpack.c.l.b16 %v131
    %v147 = vpack.c.b16 %v144, %v143
    %v148 = vpack.c.b16 %v146, %v145
    %v152 = vsel %vm77, %v125, 0
    %154 = vmatprep.subr.bf16.mxu0 0
    %155 = vmatpush1.bf16.msra.mxu0 %v147
    %156 = vmatprep.subr.bf16.mxu0 0
    %157 = vmatpush1.bf16.msra.mxu0 %v148
    %158 = vmatprep.subr.bf16.mxu0 0
    %159 = vmatpush1.bf16.msra.mxu0 0
    %160 = vmatprep.subr.bf16.mxu0 0
    %161 = vmatpush1.bf16.msra.mxu0 0
    %162 = vmatprep.subr.bf16.mxu0 0
    %163 = vmatpush1.bf16.msra.mxu0 0
    %164 = vmatprep.subr.bf16.mxu0 0
    %165 = vmatpush1.bf16.msra.mxu0 0
    %166 = vmatprep.subr.bf16.mxu0 0
    %167 = vmatpush1.bf16.msra.mxu0 0
    %168 = vmatprep.subr.bf16.mxu0 0
    %169 = vmatpush1.bf16.msra.mxu0 0
    %170 = vmatprep.subr.bf16.mxu0 0
    %171 = vmatpush1.bf16.msra.mxu0 0
    %172 = vmatprep.subr.bf16.mxu0 0
    %173 = vmatpush1.bf16.msra.mxu0 0
    %174 = vmatprep.subr.bf16.mxu0 0
    %175 = vmatpush1.bf16.msra.mxu0 0
    %176 = vmatprep.subr.bf16.mxu0 0
    %177 = vmatpush1.bf16.msra.mxu0 0
    %178 = vmatprep.subr.bf16.mxu0 0
    %179 = vmatpush1.bf16.msra.mxu0 0
    %180 = vmatprep.subr.bf16.mxu0 0
    %181 = vmatpush1.bf16.msra.mxu0 0
    %182 = vmatprep.subr.bf16.mxu0 0
    %183 = vmatpush1.bf16.msra.mxu0 0
    %184 = vmatprep.subr.bf16.mxu0 0
    %185 = vmatpush1.bf16.msra.mxu0 0
    %186 = vmatprep.mubr.bf16.mxu0 0
    %187 = vmatmul.mubr.bf16.gmra.mrb[0].mxu0 %v152
    %v188 = vpop.f32.mrb[0].mxu0
    %v189 = vadd.f32 %v137, %v188
    %v190 = vpop.f32.mrb[0].mxu0
    %v191 = vpop.f32.mrb[0].mxu0
    %v192 = vpop.f32.mrb[0].mxu0
    %193 = vdwg.mxu0
    %v194 = vld [vmem:[%s5] sm:$0xf]
    %v195 = vld [vmem:[%s5 + $0x4] sm:$0xf]
    %v196 = vld [vmem:[%s5 + $0x8] sm:$0xf]
    %v197 = vld [vmem:[%s5 + $0xc] sm:$0xf]
    %v198 = vld [vmem:[%s8] sm:$0x1]
    %v200 = vlaneseq
    %v201 = vshrl.u32 %v200, 7
    %v202 = vsub.s32 0, %v201
    %v203 = vrot.slane %v198, %v202
    %v209 = vunpack.c.l.b16 %v194
    %v210 = vunpack.c.l.b16 %v195
    %v211 = vunpack.c.l.b16 %v196
    %v212 = vunpack.c.l.b16 %v197
    %v213 = vpack.c.b16 %v210, %v209
    %v214 = vpack.c.b16 %v212, %v211
    %217 = vmatprep.subr.bf16.mxu0 0
    %218 = vmatpush1.bf16.msra.mxu0 %v213
    %219 = vmatprep.subr.bf16.mxu0 0
    %220 = vmatpush1.bf16.msra.mxu0 %v214
    %221 = vmatprep.subr.bf16.mxu0 0
    %222 = vmatpush1.bf16.msra.mxu0 0
    %223 = vmatprep.subr.bf16.mxu0 0
    %224 = vmatpush1.bf16.msra.mxu0 0
    %225 = vmatprep.subr.bf16.mxu0 0
    %226 = vmatpush1.bf16.msra.mxu0 0
    %227 = vmatprep.subr.bf16.mxu0 0
    %228 = vmatpush1.bf16.msra.mxu0 0
    %229 = vmatprep.subr.bf16.mxu0 0
    %230 = vmatpush1.bf16.msra.mxu0 0
    %231 = vmatprep.subr.bf16.mxu0 0
    %232 = vmatpush1.bf16.msra.mxu0 0
    %233 = vmatprep.subr.bf16.mxu0 0
    %234 = vmatpush1.bf16.msra.mxu0 0
    %235 = vmatprep.subr.bf16.mxu0 0
    %236 = vmatpush1.bf16.msra.mxu0 0
    %237 = vmatprep.subr.bf16.mxu0 0
    %238 = vmatpush1.bf16.msra.mxu0 0
    %239 = vmatprep.subr.bf16.mxu0 0
    %240 = vmatpush1.bf16.msra.mxu0 0
    %241 = vmatprep.subr.bf16.mxu0 0
    %242 = vmatpush1.bf16.msra.mxu0 0
    %243 = vmatprep.subr.bf16.mxu0 0
    %244 = vmatpush1.bf16.msra.mxu0 0
    %245 = vmatprep.subr.bf16.mxu0 0
    %246 = vmatpush1.bf16.msra.mxu0 0
    %247 = vmatprep.subr.bf16.mxu0 0
    %248 = vmatpush1.bf16.msra.mxu0 0
    %249 = vmatprep.mubr.bf16.mxu0 0
    %250 = vmatmul.mubr.bf16.gmra.mrb[0].mxu0 %v152
    %v251 = vpop.f32.mrb[0].mxu0
    %v252 = vadd.f32 %v203, %v251
    %v253 = vpop.f32.mrb[0].mxu0
    %v254 = vpop.f32.mrb[0].mxu0
    %v255 = vpop.f32.mrb[0].mxu0
    %256 = vdwg.mxu0
    %v257 = vld [vmem:[%s6] sm:$0xf]
    %v258 = vld [vmem:[%s6 + $0x4] sm:$0xf]
    %v259 = vld [vmem:[%s6 + $0x8] sm:$0xf]
    %v260 = vld [vmem:[%s6 + $0xc] sm:$0xf]
    %v261 = vld [vmem:[%s9] sm:$0x1]
    %v263 = vlaneseq
    %v264 = vshrl.u32 %v263, 7
    %v265 = vsub.s32 0, %v264
    %v266 = vrot.slane %v261, %v265
    %v272 = vunpack.c.l.b16 %v257
    %v273 = vunpack.c.l.b16 %v258
    %v274 = vunpack.c.l.b16 %v259
    %v275 = vunpack.c.l.b16 %v260
    %v276 = vpack.c.b16 %v273, %v272
    %v277 = vpack.c.b16 %v275, %v274
    %280 = vmatprep.subr.bf16.mxu0 0
    %281 = vmatpush1.bf16.msra.mxu0 %v276
    %282 = vmatprep.subr.bf16.mxu0 0
    %283 = vmatpush1.bf16.msra.mxu0 %v277
    %284 = vmatprep.subr.bf16.mxu0 0
    %285 = vmatpush1.bf16.msra.mxu0 0
    %286 = vmatprep.subr.bf16.mxu0 0
    %287 = vmatpush1.bf16.msra.mxu0 0
    %288 = vmatprep.subr.bf16.mxu0 0
    %289 = vmatpush1.bf16.msra.mxu0 0
    %290 = vmatprep.subr.bf16.mxu0 0
    %291 = vmatpush1.bf16.msra.mxu0 0
    %292 = vmatprep.subr.bf16.mxu0 0
    %293 = vmatpush1.bf16.msra.mxu0 0
    %294 = vmatprep.subr.bf16.mxu0 0
    %295 = vmatpush1.bf16.msra.mxu0 0
    %296 = vmatprep.subr.bf16.mxu0 0
    %297 = vmatpush1.bf16.msra.mxu0 0
    %298 = vmatprep.subr.bf16.mxu0 0
    %299 = vmatpush1.bf16.msra.mxu0 0
    %300 = vmatprep.subr.bf16.mxu0 0
    %301 = vmatpush1.bf16.msra.mxu0 0
    %302 = vmatprep.subr.bf16.mxu0 0
    %303 = vmatpush1.bf16.msra.mxu0 0
    %304 = vmatprep.subr.bf16.mxu0 0
    %305 = vmatpush1.bf16.msra.mxu0 0
    %306 = vmatprep.subr.bf16.mxu0 0
    %307 = vmatpush1.bf16.msra.mxu0 0
    %308 = vmatprep.subr.bf16.mxu0 0
    %309 = vmatpush1.bf16.msra.mxu0 0
    %310 = vmatprep.subr.bf16.mxu0 0
    %311 = vmatpush1.bf16.msra.mxu0 0
    %312 = vmatprep.mubr.bf16.mxu0 0
    %313 = vmatmul.mubr.bf16.gmra.mrb[0].mxu0 %v152
    %v314 = vpop.f32.mrb[0].mxu0
    %v315 = vadd.f32 %v266, %v314
    %v316 = vpop.f32.mrb[0].mxu0
    %v317 = vpop.f32.mrb[0].mxu0
    %v318 = vpop.f32.mrb[0].mxu0
    %319 = vdwg.mxu0
    %v320 = vpack.c.bf16 %v315, %v315
    %v321 = vpack.c.bf16 %v189, %v189
    %v322 = vpack.c.bf16 %v252, %v252
    %vm323 = vcmask 130048
    %v325 = vsel %vm323, %v321, 0
    %v328 = vsel %vm323, %v322, 0
    %330 = vmatprep.subr.bf16.mxu0 0
    %331 = vmatpush1.bf16.xpose.msra.mxu0 %v328
    %332 = vmatprep.subr.bf16.mxu0 0
    %333 = vmatpush1.bf16.xpose.msra.mxu0 0
    %334 = vmatprep.subr.bf16.mxu0 0
    %335 = vmatpush1.bf16.xpose.msra.mxu0 0
    %336 = vmatprep.subr.bf16.mxu0 0
    %337 = vmatpush1.bf16.xpose.msra.mxu0 0
    %338 = vmatprep.subr.bf16.mxu0 0
    %339 = vmatpush1.bf16.xpose.msra.mxu0 0
    %340 = vmatprep.subr.bf16.mxu0 0
    %341 = vmatpush1.bf16.xpose.msra.mxu0 0
    %342 = vmatprep.subr.bf16.mxu0 0
    %343 = vmatpush1.bf16.xpose.msra.mxu0 0
    %344 = vmatprep.subr.bf16.mxu0 0
    %345 = vmatpush1.bf16.xpose.msra.mxu0 0
    %346 = vmatprep.subr.bf16.mxu0 0
    %347 = vmatpush1.bf16.xpose.msra.mxu0 0
    %348 = vmatprep.subr.bf16.mxu0 0
    %349 = vmatpush1.bf16.xpose.msra.mxu0 0
    %350 = vmatprep.subr.bf16.mxu0 0
    %351 = vmatpush1.bf16.xpose.msra.mxu0 0
    %352 = vmatprep.subr.bf16.mxu0 0
    %353 = vmatpush1.bf16.xpose.msra.mxu0 0
    %354 = vmatprep.subr.bf16.mxu0 0
    %355 = vmatpush1.bf16.xpose.msra.mxu0 0
    %356 = vmatprep.subr.bf16.mxu0 0
    %357 = vmatpush1.bf16.xpose.msra.mxu0 0
    %358 = vmatprep.subr.bf16.mxu0 0
    %359 = vmatpush1.bf16.xpose.msra.mxu0 0
    %360 = vmatprep.subr.bf16.mxu0 0
    %361 = vmatpush1.bf16.xpose.msra.mxu0 0
    %362 = vmatprep.mubr.bf16.mxu0 0
    %363 = vmatmul.mubr.bf16.gmra.mrb[0].mxu0 %v325
    %v364 = vpop.f32.mrb[0].mxu0
    %v365 = vadd.f32 0.0, %v364
    %v366 = vpop.f32.mrb[0].mxu0
    %v367 = vpop.f32.mrb[0].mxu0
    %v368 = vpop.f32.mrb[0].mxu0
    %369 = vdwg.mxu0
    %v370 = vmul.f32 %v365, 0.25
    %v372 = vlaneseq
    %v373 = vshrl.u32 %v372, 7
    %v374 = vsub.s32 0, %v373
    %v375 = vrot.slane %v127, %v374
    %v377 = vadd.f32 %v370, %v375
    %vm378 = vcmask 64512
    %v379 = vsel %vm378, %v377, -inf
    %380 = vmax.xlane.f32.xlu0 %v379
    %v381 = vpop.xlane.xlu0 %380
    %v382 = vsub.f32 %v377, %v381
    %v383 = vmul.f32 %v382, 1.442695
    %v384 = vpow.pop %v383
    %v385 = vsel %vm378, %v384, 0.0
    %386 = vadd.xlane.f32.xlu0 %v385
    %v387 = vpop.xlane.xlu0 %386
    %v388 = vrcp.pop %v387
    %v389 = vmul.f32 %v384, %v388
    %v390 = vpack.c.bf16 %v389, %v389
    %v392 = vsel %vm378, %v390, 0
    %vm394 = vcmask 1043456
    %v396 = vsel %vm394, %v320, 0
    %398 = vmatprep.subr.bf16.mxu0 0
    %399 = vmatpush1.bf16.msra.mxu0 %v396
    %400 = vmatprep.subr.bf16.mxu0 0
    %401 = vmatpush1.bf16.msra.mxu0 0
    %402 = vmatprep.subr.bf16.mxu0 0
    %403 = vmatpush1.bf16.msra.mxu0 0
    %404 = vmatprep.subr.bf16.mxu0 0
    %405 = vmatpush1.bf16.msra.mxu0 0
    %406 = vmatprep.subr.bf16.mxu0 0
    %407 = vmatpush1.bf16.msra.mxu0 0
    %408 = vmatprep.subr.bf16.mxu0 0
    %409 = vmatpush1.bf16.msra.mxu0 0
    %410 = vmatprep.subr.bf16.mxu0 0
    %411 = vmatpush1.bf16.msra.mxu0 0
    %412 = vmatprep.subr.bf16.mxu0 0
    %413 = vmatpush1.bf16.msra.mxu0 0
    %414 = vmatprep.subr.bf16.mxu0 0
    %415 = vmatpush1.bf16.msra.mxu0 0
    %416 = vmatprep.subr.bf16.mxu0 0
    %417 = vmatpush1.bf16.msra.mxu0 0
    %418 = vmatprep.subr.bf16.mxu0 0
    %419 = vmatpush1.bf16.msra.mxu0 0
    %420 = vmatprep.subr.bf16.mxu0 0
    %421 = vmatpush1.bf16.msra.mxu0 0
    %422 = vmatprep.subr.bf16.mxu0 0
    %423 = vmatpush1.bf16.msra.mxu0 0
    %424 = vmatprep.subr.bf16.mxu0 0
    %425 = vmatpush1.bf16.msra.mxu0 0
    %426 = vmatprep.subr.bf16.mxu0 0
    %427 = vmatpush1.bf16.msra.mxu0 0
    %428 = vmatprep.subr.bf16.mxu0 0
    %429 = vmatpush1.bf16.msra.mxu0 0
    %430 = vmatprep.mubr.bf16.mxu0 0
    %431 = vmatmul.mubr.bf16.gmra.mrb[0].mxu0 %v392
    %v432 = vpop.f32.mrb[0].mxu0
    %v433 = vadd.f32 0.0, %v432
    %v434 = vpop.f32.mrb[0].mxu0
    %v435 = vpop.f32.mrb[0].mxu0
    %v436 = vpop.f32.mrb[0].mxu0
    %437 = vdwg.mxu0
    %v438 = vpack.c.bf16 %v433, %v433
    %v439 = vld [vmem:[%s10] sm:$0xf]
    %v440 = vld [vmem:[%s10 + $0x4] sm:$0xf]
    %s441 = scalar_lea.vmem %s4, 16
    %v442 = vld [vmem:[%s441] sm:$0xf]
    %v443 = vld [vmem:[%s441 + $0x4] sm:$0xf]
    %v444 = vld [vmem:[%s441 + $0x8] sm:$0xf]
    %v445 = vld [vmem:[%s441 + $0xc] sm:$0xf]
    %s446 = scalar_lea.vmem %s7, 1
    %v447 = vld [vmem:[%s446] sm:$0x1]
    %v449 = vlaneseq
    %v450 = vshrl.u32 %v449, 7
    %v451 = vsub.s32 0, %v450
    %v452 = vrot.slane %v447, %v451
    %v458 = vunpack.c.l.b16 %v442
    %v459 = vunpack.c.l.b16 %v443
    %v460 = vunpack.c.l.b16 %v444
    %v461 = vunpack.c.l.b16 %v445
    %v462 = vpack.c.b16 %v459, %v458
    %v463 = vpack.c.b16 %v461, %v460
    %466 = vmatprep.subr.bf16.mxu0 0
    %467 = vmatpush1.bf16.msra.mxu0 %v462
    %468 = vmatprep.subr.bf16.mxu0 0
    %469 = vmatpush1.bf16.msra.mxu0 %v463
    %470 = vmatprep.subr.bf16.mxu0 0
    %471 = vmatpush1.bf16.msra.mxu0 0
    %472 = vmatprep.subr.bf16.mxu0 0
    %473 = vmatpush1.bf16.msra.mxu0 0
    %474 = vmatprep.subr.bf16.mxu0 0
    %475 = vmatpush1.bf16.msra.mxu0 0
    %476 = vmatprep.subr.bf16.mxu0 0
    %477 = vmatpush1.bf16.msra.mxu0 0
    %478 = vmatprep.subr.bf16.mxu0 0
    %479 = vmatpush1.bf16.msra.mxu0 0
    %480 = vmatprep.subr.bf16.mxu0 0
    %481 = vmatpush1.bf16.msra.mxu0 0
    %482 = vmatprep.subr.bf16.mxu0 0
    %483 = vmatpush1.bf16.msra.mxu0 0
    %484 = vmatprep.subr.bf16.mxu0 0
    %485 = vmatpush1.bf16.msra.mxu0 0
    %486 = vmatprep.subr.bf16.mxu0 0
    %487 = vmatpush1.bf16.msra.mxu0 0
    %488 = vmatprep.subr.bf16.mxu0 0
    %489 = vmatpush1.bf16.msra.mxu0 0
    %490 = vmatprep.subr.bf16.mxu0 0
    %491 = vmatpush1.bf16.msra.mxu0 0
    %492 = vmatprep.subr.bf16.mxu0 0
    %493 = vmatpush1.bf16.msra.mxu0 0
    %494 = vmatprep.subr.bf16.mxu0 0
    %495 = vmatpush1.bf16.msra.mxu0 0
    %496 = vmatprep.subr.bf16.mxu0 0
    %497 = vmatpush1.bf16.msra.mxu0 0
    %498 = vmatprep.mubr.bf16.mxu0 0
    %499 = vmatmul.mubr.bf16.gmra.mrb[0].mxu0 %v152
    %v500 = vpop.f32.mrb[0].mxu0
    %v501 = vadd.f32 %v452, %v500
    %v502 = vpop.f32.mrb[0].mxu0
    %v503 = vpop.f32.mrb[0].mxu0
    %v504 = vpop.f32.mrb[0].mxu0
    %505 = vdwg.mxu0
    %s506 = scalar_lea.vmem %s5, 16
    %v507 = vld [vmem:[%s506] sm:$0xf]
    %v508 = vld [vmem:[%s506 + $0x4] sm:$0xf]
    %v509 = vld [vmem:[%s506 + $0x8] sm:$0xf]
    %v510 = vld [vmem:[%s506 + $0xc] sm:$0xf]
    %s511 = scalar_lea.vmem %s8, 1
    %v512 = vld [vmem:[%s511] sm:$0x1]
    %v514 = vlaneseq
    %v515 = vshrl.u32 %v514, 7
    %v516 = vsub.s32 0, %v515
    %v517 = vrot.slane %v512, %v516
    %v523 = vunpack.c.l.b16 %v507
    %v524 = vunpack.c.l.b16 %v508
    %v525 = vunpack.c.l.b16 %v509
    %v526 = vunpack.c.l.b16 %v510
    %v527 = vpack.c.b16 %v524, %v523
    %v528 = vpack.c.b16 %v526, %v525
    %531 = vmatprep.subr.bf16.mxu0 0
    %532 = vmatpush1.bf16.msra.mxu0 %v527
    %533 = vmatprep.subr.bf16.mxu0 0
    %534 = vmatpush1.bf16.msra.mxu0 %v528
    %535 = vmatprep.subr.bf16.mxu0 0
    %536 = vmatpush1.bf16.msra.mxu0 0
    %537 = vmatprep.subr.bf16.mxu0 0
    %538 = vmatpush1.bf16.msra.mxu0 0
    %539 = vmatprep.subr.bf16.mxu0 0
    %540 = vmatpush1.bf16.msra.mxu0 0
    %541 = vmatprep.subr.bf16.mxu0 0
    %542 = vmatpush1.bf16.msra.mxu0 0
    %543 = vmatprep.subr.bf16.mxu0 0
    %544 = vmatpush1.bf16.msra.mxu0 0
    %545 = vmatprep.subr.bf16.mxu0 0
    %546 = vmatpush1.bf16.msra.mxu0 0
    %547 = vmatprep.subr.bf16.mxu0 0
    %548 = vmatpush1.bf16.msra.mxu0 0
    %549 = vmatprep.subr.bf16.mxu0 0
    %550 = vmatpush1.bf16.msra.mxu0 0
    %551 = vmatprep.subr.bf16.mxu0 0
    %552 = vmatpush1.bf16.msra.mxu0 0
    %553 = vmatprep.subr.bf16.mxu0 0
    %554 = vmatpush1.bf16.msra.mxu0 0
    %555 = vmatprep.subr.bf16.mxu0 0
    %556 = vmatpush1.bf16.msra.mxu0 0
    %557 = vmatprep.subr.bf16.mxu0 0
    %558 = vmatpush1.bf16.msra.mxu0 0
    %559 = vmatprep.subr.bf16.mxu0 0
    %560 = vmatpush1.bf16.msra.mxu0 0
    %561 = vmatprep.subr.bf16.mxu0 0
    %562 = vmatpush1.bf16.msra.mxu0 0
    %563 = vmatprep.mubr.bf16.mxu0 0
    %564 = vmatmul.mubr.bf16.gmra.mrb[0].mxu0 %v152
    %v565 = vpop.f32.mrb[0].mxu0
    %v566 = vadd.f32 %v517, %v565
    %v567 = vpop.f32.mrb[0].mxu0
    %v568 = vpop.f32.mrb[0].mxu0
    %v569 = vpop.f32.mrb[0].mxu0
    %570 = vdwg.mxu0
    %s571 = scalar_lea.vmem %s6, 16
    %v572 = vld [vmem:[%s571] sm:$0xf]
    %v573 = vld [vmem:[%s571 + $0x4] sm:$0xf]
    %v574 = vld [vmem:[%s571 + $0x8] sm:$0xf]
    %v575 = vld [vmem:[%s571 + $0xc] sm:$0xf]
    %s576 = scalar_lea.vmem %s9, 1
    %v577 = vld [vmem:[%s576] sm:$0x1]
    %v579 = vlaneseq
    %v580 = vshrl.u32 %v579, 7
    %v581 = vsub.s32 0, %v580
    %v582 = vrot.slane %v577, %v581
    %v588 = vunpack.c.l.b16 %v572
    %v589 = vunpack.c.l.b16 %v573
    %v590 = vunpack.c.l.b16 %v574
    %v591 = vunpack.c.l.b16 %v575
    %v592 = vpack.c.b16 %v589, %v588
    %v593 = vpack.c.b16 %v591, %v590
    %596 = vmatprep.subr.bf16.mxu0 0
    %597 = vmatpush1.bf16.msra.mxu0 %v592
    %598 = vmatprep.subr.bf16.mxu0 0
    %599 = vmatpush1.bf16.msra.mxu0 %v593
    %600 = vmatprep.subr.bf16.mxu0 0
    %601 = vmatpush1.bf16.msra.mxu0 0
    %602 = vmatprep.subr.bf16.mxu0 0
    %603 = vmatpush1.bf16.msra.mxu0 0
    %604 = vmatprep.subr.bf16.mxu0 0
    %605 = vmatpush1.bf16.msra.mxu0 0
    %606 = vmatprep.subr.bf16.mxu0 0
    %607 = vmatpush1.bf16.msra.mxu0 0
    %608 = vmatprep.subr.bf16.mxu0 0
    %609 = vmatpush1.bf16.msra.mxu0 0
    %610 = vmatprep.subr.bf16.mxu0 0
    %611 = vmatpush1.bf16.msra.mxu0 0
    %612 = vmatprep.subr.bf16.mxu0 0
    %613 = vmatpush1.bf16.msra.mxu0 0
    %614 = vmatprep.subr.bf16.mxu0 0
    %615 = vmatpush1.bf16.msra.mxu0 0
    %616 = vmatprep.subr.bf16.mxu0 0
    %617 = vmatpush1.bf16.msra.mxu0 0
    %618 = vmatprep.subr.bf16.mxu0 0
    %619 = vmatpush1.bf16.msra.mxu0 0
    %620 = vmatprep.subr.bf16.mxu0 0
    %621 = vmatpush1.bf16.msra.mxu0 0
    %622 = vmatprep.subr.bf16.mxu0 0
    %623 = vmatpush1.bf16.msra.mxu0 0
    %624 = vmatprep.subr.bf16.mxu0 0
    %625 = vmatpush1.bf16.msra.mxu0 0
    %626 = vmatprep.subr.bf16.mxu0 0
    %627 = vmatpush1.bf16.msra.mxu0 0
    %628 = vmatprep.mubr.bf16.mxu0 0
    %629 = vmatmul.mubr.bf16.gmra.mrb[0].mxu0 %v152
    %v630 = vpop.f32.mrb[0].mxu0
    %v631 = vadd.f32 %v582, %v630
    %v632 = vpop.f32.mrb[0].mxu0
    %v633 = vpop.f32.mrb[0].mxu0
    %v634 = vpop.f32.mrb[0].mxu0
    %635 = vdwg.mxu0
    %v636 = vpack.c.bf16 %v631, %v631
    %v637 = vpack.c.bf16 %v501, %v501
    %v638 = vpack.c.bf16 %v566, %v566
    %v640 = vsel %vm323, %v637, 0
    %v643 = vsel %vm323, %v638, 0
    %645 = vmatprep.subr.bf16.mxu0 0
    %646 = vmatpush1.bf16.xpose.msra.mxu0 %v643
    %647 = vmatprep.subr.bf16.mxu0 0
    %648 = vmatpush1.bf16.xpose.msra.mxu0 0
    %649 = vmatprep.subr.bf16.mxu0 0
    %650 = vmatpush1.bf16.xpose.msra.mxu0 0
    %651 = vmatprep.subr.bf16.mxu0 0
    %652 = vmatpush1.bf16.xpose.msra.mxu0 0
    %653 = vmatprep.subr.bf16.mxu0 0
    %654 = vmatpush1.bf16.xpose.msra.mxu0 0
    %655 = vmatprep.subr.bf16.mxu0 0
    %656 = vmatpush1.bf16.xpose.msra.mxu0 0
    %657 = vmatprep.subr.bf16.mxu0 0
    %658 = vmatpush1.bf16.xpose.msra.mxu0 0
    %659 = vmatprep.subr.bf16.mxu0 0
    %660 = vmatpush1.bf16.xpose.msra.mxu0 0
    %661 = vmatprep.subr.bf16.mxu0 0
    %662 = vmatpush1.bf16.xpose.msra.mxu0 0
    %663 = vmatprep.subr.bf16.mxu0 0
    %664 = vmatpush1.bf16.xpose.msra.mxu0 0
    %665 = vmatprep.subr.bf16.mxu0 0
    %666 = vmatpush1.bf16.xpose.msra.mxu0 0
    %667 = vmatprep.subr.bf16.mxu0 0
    %668 = vmatpush1.bf16.xpose.msra.mxu0 0
    %669 = vmatprep.subr.bf16.mxu0 0
    %670 = vmatpush1.bf16.xpose.msra.mxu0 0
    %671 = vmatprep.subr.bf16.mxu0 0
    %672 = vmatpush1.bf16.xpose.msra.mxu0 0
    %673 = vmatprep.subr.bf16.mxu0 0
    %674 = vmatpush1.bf16.xpose.msra.mxu0 0
    %675 = vmatprep.subr.bf16.mxu0 0
    %676 = vmatpush1.bf16.xpose.msra.mxu0 0
    %677 = vmatprep.mubr.bf16.mxu0 0
    %678 = vmatmul.mubr.bf16.gmra.mrb[0].mxu0 %v640
    %v679 = vpop.f32.mrb[0].mxu0
    %v680 = vadd.f32 0.0, %v679
    %v681 = vpop.f32.mrb[0].mxu0
    %v682 = vpop.f32.mrb[0].mxu0
    %v683 = vpop.f32.mrb[0].mxu0
    %684 = vdwg.mxu0
    %v685 = vmul.f32 %v680, 0.25
    %v686 = vadd.f32 %v685, %v375
    %v687 = vsel %vm378, %v686, -inf
    %688 = vmax.xlane.f32.xlu0 %v687
    %v689 = vpop.xlane.xlu0 %688
    %v690 = vsub.f32 %v686, %v689
    %v691 = vmul.f32 %v690, 1.442695
    %v692 = vpow.pop %v691
    %v693 = vsel %vm378, %v692, 0.0
    %694 = vadd.xlane.f32.xlu0 %v693
    %v695 = vpop.xlane.xlu0 %694
    %v696 = vrcp.pop %v695
    %v697 = vmul.f32 %v692, %v696
    %v698 = vpack.c.bf16 %v697, %v697
    %v700 = vsel %vm378, %v698, 0
    %v703 = vsel %vm394, %v636, 0
    %705 = vmatprep.subr.bf16.mxu0 0
    %706 = vmatpush1.bf16.msra.mxu0 %v703
    %707 = vmatprep.subr.bf16.mxu0 0
    %708 = vmatpush1.bf16.msra.mxu0 0
    %709 = vmatprep.subr.bf16.mxu0 0
    %710 = vmatpush1.bf16.msra.mxu0 0
    %711 = vmatprep.subr.bf16.mxu0 0
    %712 = vmatpush1.bf16.msra.mxu0 0
    %713 = vmatprep.subr.bf16.mxu0 0
    %714 = vmatpush1.bf16.msra.mxu0 0
    %715 = vmatprep.subr.bf16.mxu0 0
    %716 = vmatpush1.bf16.msra.mxu0 0
    %717 = vmatprep.subr.bf16.mxu0 0
    %718 = vmatpush1.bf16.msra.mxu0 0
    %719 = vmatprep.subr.bf16.mxu0 0
    %720 = vmatpush1.bf16.msra.mxu0 0
    %721 = vmatprep.subr.bf16.mxu0 0
    %722 = vmatpush1.bf16.msra.mxu0 0
    %723 = vmatprep.subr.bf16.mxu0 0
    %724 = vmatpush1.bf16.msra.mxu0 0
    %725 = vmatprep.subr.bf16.mxu0 0
    %726 = vmatpush1.bf16.msra.mxu0 0
    %727 = vmatprep.subr.bf16.mxu0 0
    %728 = vmatpush1.bf16.msra.mxu0 0
    %729 = vmatprep.subr.bf16.mxu0 0
    %730 = vmatpush1.bf16.msra.mxu0 0
    %731 = vmatprep.subr.bf16.mxu0 0
    %732 = vmatpush1.bf16.msra.mxu0 0
    %733 = vmatprep.subr.bf16.mxu0 0
    %734 = vmatpush1.bf16.msra.mxu0 0
    %735 = vmatprep.subr.bf16.mxu0 0
    %736 = vmatpush1.bf16.msra.mxu0 0
    %737 = vmatprep.mubr.bf16.mxu0 0
    %738 = vmatmul.mubr.bf16.gmra.mrb[0].mxu0 %v700
    %v739 = vpop.f32.mrb[0].mxu0
    %v740 = vadd.f32 0.0, %v739
    %v741 = vpop.f32.mrb[0].mxu0
    %v742 = vpop.f32.mrb[0].mxu0
    %v743 = vpop.f32.mrb[0].mxu0
    %744 = vdwg.mxu0
    %v745 = vpack.c.bf16 %v740, %v740
    %s746 = scalar_lea.vmem %s10, 8
    %v747 = vld [vmem:[%s746] sm:$0xf]
    %v748 = vld [vmem:[%s746 + $0x4] sm:$0xf]
    %v751 = vunpack.c.l.b16 %v747
    %v752 = vunpack.c.l.b16 %v748
    %v753 = vpack.c.b16 %v752, %v751
    %v756 = vsel %vm323, %v745, 0
    %758 = vmatprep.subr.bf16.mxu0 0
    %759 = vmatpush1.bf16.msra.mxu0 %v753
    %760 = vmatprep.subr.bf16.mxu0 0
    %761 = vmatpush1.bf16.msra.mxu0 0
    %762 = vmatprep.subr.bf16.mxu0 0
    %763 = vmatpush1.bf16.msra.mxu0 0
    %764 = vmatprep.subr.bf16.mxu0 0
    %765 = vmatpush1.bf16.msra.mxu0 0
    %766 = vmatprep.subr.bf16.mxu0 0
    %767 = vmatpush1.bf16.msra.mxu0 0
    %768 = vmatprep.subr.bf16.mxu0 0
    %769 = vmatpush1.bf16.msra.mxu0 0
    %770 = vmatprep.subr.bf16.mxu0 0
    %771 = vmatpush1.bf16.msra.mxu0 0
    %772 = vmatprep.subr.bf16.mxu0 0
    %773 = vmatpush1.bf16.msra.mxu0 0
    %774 = vmatprep.subr.bf16.mxu0 0
    %775 = vmatpush1.bf16.msra.mxu0 0
    %776 = vmatprep.subr.bf16.mxu0 0
    %777 = vmatpush1.bf16.msra.mxu0 0
    %778 = vmatprep.subr.bf16.mxu0 0
    %779 = vmatpush1.bf16.msra.mxu0 0
    %780 = vmatprep.subr.bf16.mxu0 0
    %781 = vmatpush1.bf16.msra.mxu0 0
    %782 = vmatprep.subr.bf16.mxu0 0
    %783 = vmatpush1.bf16.msra.mxu0 0
    %784 = vmatprep.subr.bf16.mxu0 0
    %785 = vmatpush1.bf16.msra.mxu0 0
    %786 = vmatprep.subr.bf16.mxu0 0
    %787 = vmatpush1.bf16.msra.mxu0 0
    %788 = vmatprep.subr.bf16.mxu0 0
    %789 = vmatpush1.bf16.msra.mxu0 0
    %790 = vmatprep.mubr.bf16.mxu0 0
    %791 = vmatmul.mubr.bf16.gmra.mrb[0].mxu0 %v756
    %v792 = vpop.f32.mrb[0].mxu0
    %v793 = vadd.f32 0.0, %v792
    %v794 = vpop.f32.mrb[0].mxu0
    %v795 = vpop.f32.mrb[0].mxu0
    %v796 = vpop.f32.mrb[0].mxu0
    %797 = vdwg.mxu0
    %v800 = vunpack.c.l.b16 %v439
    %v801 = vunpack.c.l.b16 %v440
    %v802 = vpack.c.b16 %v801, %v800
    %v805 = vsel %vm323, %v438, 0
    %807 = vmatprep.subr.bf16.mxu0 0
    %808 = vmatpush1.bf16.msra.mxu0 %v802
    %809 = vmatprep.subr.bf16.mxu0 0
    %810 = vmatpush1.bf16.msra.mxu0 0
    %811 = vmatprep.subr.bf16.mxu0 0
    %812 = vmatpush1.bf16.msra.mxu0 0
    %813 = vmatprep.subr.bf16.mxu0 0
    %814 = vmatpush1.bf16.msra.mxu0 0
    %815 = vmatprep.subr.bf16.mxu0 0
    %816 = vmatpush1.bf16.msra.mxu0 0
    %817 = vmatprep.subr.bf16.mxu0 0
    %818 = vmatpush1.bf16.msra.mxu0 0
    %819 = vmatprep.subr.bf16.mxu0 0
    %820 = vmatpush1.bf16.msra.mxu0 0
    %821 = vmatprep.subr.bf16.mxu0 0
    %822 = vmatpush1.bf16.msra.mxu0 0
    %823 = vmatprep.subr.bf16.mxu0 0
    %824 = vmatpush1.bf16.msra.mxu0 0
    %825 = vmatprep.subr.bf16.mxu0 0
    %826 = vmatpush1.bf16.msra.mxu0 0
    %827 = vmatprep.subr.bf16.mxu0 0
    %828 = vmatpush1.bf16.msra.mxu0 0
    %829 = vmatprep.subr.bf16.mxu0 0
    %830 = vmatpush1.bf16.msra.mxu0 0
    %831 = vmatprep.subr.bf16.mxu0 0
    %832 = vmatpush1.bf16.msra.mxu0 0
    %833 = vmatprep.subr.bf16.mxu0 0
    %834 = vmatpush1.bf16.msra.mxu0 0
    %835 = vmatprep.subr.bf16.mxu0 0
    %836 = vmatpush1.bf16.msra.mxu0 0
    %837 = vmatprep.subr.bf16.mxu0 0
    %838 = vmatpush1.bf16.msra.mxu0 0
    %839 = vmatprep.mubr.bf16.mxu0 0
    %840 = vmatmul.mubr.bf16.gmra.mrb[0].mxu0 %v805
    %v841 = vpop.f32.mrb[0].mxu0
    %v842 = vadd.f32 %v793, %v841
    %v843 = vpop.f32.mrb[0].mxu0
    %v844 = vpop.f32.mrb[0].mxu0
    %v845 = vpop.f32.mrb[0].mxu0
    %846 = vdwg.mxu0
    %v847 = vsub.f32 %v124, 1.0
    %v848 = vmul.f32 %v847, 1e+09
    %v850 = vrot.slane %v125, 4
    %v852 = vsel %vm77, %v850, 0
    %854 = vmatprep.subr.bf16.mxu0 0
    %855 = vmatpush1.bf16.msra.mxu0 %v147
    %856 = vmatprep.subr.bf16.mxu0 0
    %857 = vmatpush1.bf16.msra.mxu0 %v148
    %858 = vmatprep.subr.bf16.mxu0 0
    %859 = vmatpush1.bf16.msra.mxu0 0
    %860 = vmatprep.subr.bf16.mxu0 0
    %861 = vmatpush1.bf16.msra.mxu0 0
    %862 = vmatprep.subr.bf16.mxu0 0
    %863 = vmatpush1.bf16.msra.mxu0 0
    %864 = vmatprep.subr.bf16.mxu0 0
    %865 = vmatpush1.bf16.msra.mxu0 0
    %866 = vmatprep.subr.bf16.mxu0 0
    %867 = vmatpush1.bf16.msra.mxu0 0
    %868 = vmatprep.subr.bf16.mxu0 0
    %869 = vmatpush1.bf16.msra.mxu0 0
    %870 = vmatprep.subr.bf16.mxu0 0
    %871 = vmatpush1.bf16.msra.mxu0 0
    %872 = vmatprep.subr.bf16.mxu0 0
    %873 = vmatpush1.bf16.msra.mxu0 0
    %874 = vmatprep.subr.bf16.mxu0 0
    %875 = vmatpush1.bf16.msra.mxu0 0
    %876 = vmatprep.subr.bf16.mxu0 0
    %877 = vmatpush1.bf16.msra.mxu0 0
    %878 = vmatprep.subr.bf16.mxu0 0
    %879 = vmatpush1.bf16.msra.mxu0 0
    %880 = vmatprep.subr.bf16.mxu0 0
    %881 = vmatpush1.bf16.msra.mxu0 0
    %882 = vmatprep.subr.bf16.mxu0 0
    %883 = vmatpush1.bf16.msra.mxu0 0
    %884 = vmatprep.subr.bf16.mxu0 0
    %885 = vmatpush1.bf16.msra.mxu0 0
    %886 = vmatprep.mubr.bf16.mxu0 0
    %887 = vmatmul.mubr.bf16.gmra.mrb[0].mxu0 %v852
    %v888 = vpop.f32.mrb[0].mxu0
    %v889 = vadd.f32 %v137, %v888
    %v890 = vpop.f32.mrb[0].mxu0
    %v891 = vpop.f32.mrb[0].mxu0
    %v892 = vpop.f32.mrb[0].mxu0
    %893 = vdwg.mxu0
    %894 = vmatprep.subr.bf16.mxu0 0
    %895 = vmatpush1.bf16.msra.mxu0 %v213
    %896 = vmatprep.subr.bf16.mxu0 0
    %897 = vmatpush1.bf16.msra.mxu0 %v214
    %898 = vmatprep.subr.bf16.mxu0 0
    %899 = vmatpush1.bf16.msra.mxu0 0
    %900 = vmatprep.subr.bf16.mxu0 0
    %901 = vmatpush1.bf16.msra.mxu0 0
    %902 = vmatprep.subr.bf16.mxu0 0
    %903 = vmatpush1.bf16.msra.mxu0 0
    %904 = vmatprep.subr.bf16.mxu0 0
    %905 = vmatpush1.bf16.msra.mxu0 0
    %906 = vmatprep.subr.bf16.mxu0 0
    %907 = vmatpush1.bf16.msra.mxu0 0
    %908 = vmatprep.subr.bf16.mxu0 0
    %909 = vmatpush1.bf16.msra.mxu0 0
    %910 = vmatprep.subr.bf16.mxu0 0
    %911 = vmatpush1.bf16.msra.mxu0 0
    %912 = vmatprep.subr.bf16.mxu0 0
    %913 = vmatpush1.bf16.msra.mxu0 0
    %914 = vmatprep.subr.bf16.mxu0 0
    %915 = vmatpush1.bf16.msra.mxu0 0
    %916 = vmatprep.subr.bf16.mxu0 0
    %917 = vmatpush1.bf16.msra.mxu0 0
    %918 = vmatprep.subr.bf16.mxu0 0
    %919 = vmatpush1.bf16.msra.mxu0 0
    %920 = vmatprep.subr.bf16.mxu0 0
    %921 = vmatpush1.bf16.msra.mxu0 0
    %922 = vmatprep.subr.bf16.mxu0 0
    %923 = vmatpush1.bf16.msra.mxu0 0
    %924 = vmatprep.subr.bf16.mxu0 0
    %925 = vmatpush1.bf16.msra.mxu0 0
    %926 = vmatprep.mubr.bf16.mxu0 0
    %927 = vmatmul.mubr.bf16.gmra.mrb[0].mxu0 %v852
    %v928 = vpop.f32.mrb[0].mxu0
    %v929 = vadd.f32 %v203, %v928
    %v930 = vpop.f32.mrb[0].mxu0
    %v931 = vpop.f32.mrb[0].mxu0
    %v932 = vpop.f32.mrb[0].mxu0
    %933 = vdwg.mxu0
    %934 = vmatprep.subr.bf16.mxu0 0
    %935 = vmatpush1.bf16.msra.mxu0 %v276
    %936 = vmatprep.subr.bf16.mxu0 0
    %937 = vmatpush1.bf16.msra.mxu0 %v277
    %938 = vmatprep.subr.bf16.mxu0 0
    %939 = vmatpush1.bf16.msra.mxu0 0
    %940 = vmatprep.subr.bf16.mxu0 0
    %941 = vmatpush1.bf16.msra.mxu0 0
    %942 = vmatprep.subr.bf16.mxu0 0
    %943 = vmatpush1.bf16.msra.mxu0 0
    %944 = vmatprep.subr.bf16.mxu0 0
    %945 = vmatpush1.bf16.msra.mxu0 0
    %946 = vmatprep.subr.bf16.mxu0 0
    %947 = vmatpush1.bf16.msra.mxu0 0
    %948 = vmatprep.subr.bf16.mxu0 0
    %949 = vmatpush1.bf16.msra.mxu0 0
    %950 = vmatprep.subr.bf16.mxu0 0
    %951 = vmatpush1.bf16.msra.mxu0 0
    %952 = vmatprep.subr.bf16.mxu0 0
    %953 = vmatpush1.bf16.msra.mxu0 0
    %954 = vmatprep.subr.bf16.mxu0 0
    %955 = vmatpush1.bf16.msra.mxu0 0
    %956 = vmatprep.subr.bf16.mxu0 0
    %957 = vmatpush1.bf16.msra.mxu0 0
    %958 = vmatprep.subr.bf16.mxu0 0
    %959 = vmatpush1.bf16.msra.mxu0 0
    %960 = vmatprep.subr.bf16.mxu0 0
    %961 = vmatpush1.bf16.msra.mxu0 0
    %962 = vmatprep.subr.bf16.mxu0 0
    %963 = vmatpush1.bf16.msra.mxu0 0
    %964 = vmatprep.subr.bf16.mxu0 0
    %965 = vmatpush1.bf16.msra.mxu0 0
    %966 = vmatprep.mubr.bf16.mxu0 0
    %967 = vmatmul.mubr.bf16.gmra.mrb[0].mxu0 %v852
    %v968 = vpop.f32.mrb[0].mxu0
    %v969 = vadd.f32 %v266, %v968
    %v970 = vpop.f32.mrb[0].mxu0
    %v971 = vpop.f32.mrb[0].mxu0
    %v972 = vpop.f32.mrb[0].mxu0
    %973 = vdwg.mxu0
    %v974 = vpack.c.bf16 %v969, %v969
    %v975 = vpack.c.bf16 %v889, %v889
    %v976 = vpack.c.bf16 %v929, %v929
    %v978 = vsel %vm323, %v975, 0
    %v981 = vsel %vm323, %v976, 0
    %983 = vmatprep.subr.bf16.mxu0 0
    %984 = vmatpush1.bf16.xpose.msra.mxu0 %v981
    %985 = vmatprep.subr.bf16.mxu0 0
    %986 = vmatpush1.bf16.xpose.msra.mxu0 0
    %987 = vmatprep.subr.bf16.mxu0 0
    %988 = vmatpush1.bf16.xpose.msra.mxu0 0
    %989 = vmatprep.subr.bf16.mxu0 0
    %990 = vmatpush1.bf16.xpose.msra.mxu0 0
    %991 = vmatprep.subr.bf16.mxu0 0
    %992 = vmatpush1.bf16.xpose.msra.mxu0 0
    %993 = vmatprep.subr.bf16.mxu0 0
    %994 = vmatpush1.bf16.xpose.msra.mxu0 0
    %995 = vmatprep.subr.bf16.mxu0 0
    %996 = vmatpush1.bf16.xpose.msra.mxu0 0
    %997 = vmatprep.subr.bf16.mxu0 0
    %998 = vmatpush1.bf16.xpose.msra.mxu0 0
    %999 = vmatprep.subr.bf16.mxu0 0
    %1000 = vmatpush1.bf16.xpose.msra.mxu0 0
    %1001 = vmatprep.subr.bf16.mxu0 0
    %1002 = vmatpush1.bf16.xpose.msra.mxu0 0
    %1003 = vmatprep.subr.bf16.mxu0 0
    %1004 = vmatpush1.bf16.xpose.msra.mxu0 0
    %1005 = vmatprep.subr.bf16.mxu0 0
    %1006 = vmatpush1.bf16.xpose.msra.mxu0 0
    %1007 = vmatprep.subr.bf16.mxu0 0
    %1008 = vmatpush1.bf16.xpose.msra.mxu0 0
    %1009 = vmatprep.subr.bf16.mxu0 0
    %1010 = vmatpush1.bf16.xpose.msra.mxu0 0
    %1011 = vmatprep.subr.bf16.mxu0 0
    %1012 = vmatpush1.bf16.xpose.msra.mxu0 0
    %1013 = vmatprep.subr.bf16.mxu0 0
    %1014 = vmatpush1.bf16.xpose.msra.mxu0 0
    %1015 = vmatprep.mubr.bf16.mxu0 0
    %1016 = vmatmul.mubr.bf16.gmra.mrb[0].mxu0 %v978
    %v1017 = vpop.f32.mrb[0].mxu0
    %v1018 = vadd.f32 0.0, %v1017
    %v1019 = vpop.f32.mrb[0].mxu0
    %v1020 = vpop.f32.mrb[0].mxu0
    %v1021 = vpop.f32.mrb[0].mxu0
    %1022 = vdwg.mxu0
    %v1023 = vmul.f32 %v1018, 0.25
    %v1025 = vlaneseq
    %v1026 = vshrl.u32 %v1025, 7
    %v1027 = vsub.s32 0, %v1026
    %v1028 = vrot.slane %v848, %v1027
    %v1030 = vadd.f32 %v1023, %v1028
    %v1031 = vsel %vm378, %v1030, -inf
    %1032 = vmax.xlane.f32.xlu0 %v1031
    %v1033 = vpop.xlane.xlu0 %1032
    %v1034 = vsub.f32 %v1030, %v1033
    %v1035 = vmul.f32 %v1034, 1.442695
    %v1036 = vpow.pop %v1035
    %v1037 = vsel %vm378, %v1036, 0.0
    %1038 = vadd.xlane.f32.xlu0 %v1037
    %v1039 = vpop.xlane.xlu0 %1038
    %v1040 = vrcp.pop %v1039
    %v1041 = vmul.f32 %v1036, %v1040
    %v1042 = vpack.c.bf16 %v1041, %v1041
    %v1044 = vsel %vm378, %v1042, 0
    %v1047 = vsel %vm394, %v974, 0
    %1049 = vmatprep.subr.bf16.mxu0 0
    %1050 = vmatpush1.bf16.msra.mxu0 %v1047
    %1051 = vmatprep.subr.bf16.mxu0 0
    %1052 = vmatpush1.bf16.msra.mxu0 0
    %1053 = vmatprep.subr.bf16.mxu0 0
    %1054 = vmatpush1.bf16.msra.mxu0 0
    %1055 = vmatprep.subr.bf16.mxu0 0
    %1056 = vmatpush1.bf16.msra.mxu0 0
    %1057 = vmatprep.subr.bf16.mxu0 0
    %1058 = vmatpush1.bf16.msra.mxu0 0
    %1059 = vmatprep.subr.bf16.mxu0 0
    %1060 = vmatpush1.bf16.msra.mxu0 0
    %1061 = vmatprep.subr.bf16.mxu0 0
    %1062 = vmatpush1.bf16.msra.mxu0 0
    %1063 = vmatprep.subr.bf16.mxu0 0
    %1064 = vmatpush1.bf16.msra.mxu0 0
    %1065 = vmatprep.subr.bf16.mxu0 0
    %1066 = vmatpush1.bf16.msra.mxu0 0
    %1067 = vmatprep.subr.bf16.mxu0 0
    %1068 = vmatpush1.bf16.msra.mxu0 0
    %1069 = vmatprep.subr.bf16.mxu0 0
    %1070 = vmatpush1.bf16.msra.mxu0 0
    %1071 = vmatprep.subr.bf16.mxu0 0
    %1072 = vmatpush1.bf16.msra.mxu0 0
    %1073 = vmatprep.subr.bf16.mxu0 0
    %1074 = vmatpush1.bf16.msra.mxu0 0
    %1075 = vmatprep.subr.bf16.mxu0 0
    %1076 = vmatpush1.bf16.msra.mxu0 0
    %1077 = vmatprep.subr.bf16.mxu0 0
    %1078 = vmatpush1.bf16.msra.mxu0 0
    %1079 = vmatprep.subr.bf16.mxu0 0
    %1080 = vmatpush1.bf16.msra.mxu0 0
    %1081 = vmatprep.mubr.bf16.mxu0 0
    %1082 = vmatmul.mubr.bf16.gmra.mrb[0].mxu0 %v1044
    %v1083 = vpop.f32.mrb[0].mxu0
    %v1084 = vadd.f32 0.0, %v1083
    %v1085 = vpop.f32.mrb[0].mxu0
    %v1086 = vpop.f32.mrb[0].mxu0
    %v1087 = vpop.f32.mrb[0].mxu0
    %1088 = vdwg.mxu0
    %v1089 = vpack.c.bf16 %v1084, %v1084
    %1090 = vmatprep.subr.bf16.mxu0 0
    %1091 = vmatpush1.bf16.msra.mxu0 %v462
    %1092 = vmatprep.subr.bf16.mxu0 0
    %1093 = vmatpush1.bf16.msra.mxu0 %v463
    %1094 = vmatprep.subr.bf16.mxu0 0
    %1095 = vmatpush1.bf16.msra.mxu0 0
    %1096 = vmatprep.subr.bf16.mxu0 0
    %1097 = vmatpush1.bf16.msra.mxu0 0
    %1098 = vmatprep.subr.bf16.mxu0 0
    %1099 = vmatpush1.bf16.msra.mxu0 0
    %1100 = vmatprep.subr.bf16.mxu0 0
    %1101 = vmatpush1.bf16.msra.mxu0 0
    %1102 = vmatprep.subr.bf16.mxu0 0
    %1103 = vmatpush1.bf16.msra.mxu0 0
    %1104 = vmatprep.subr.bf16.mxu0 0
    %1105 = vmatpush1.bf16.msra.mxu0 0
    %1106 = vmatprep.subr.bf16.mxu0 0
    %1107 = vmatpush1.bf16.msra.mxu0 0
    %1108 = vmatprep.subr.bf16.mxu0 0
    %1109 = vmatpush1.bf16.msra.mxu0 0
    %1110 = vmatprep.subr.bf16.mxu0 0
    %1111 = vmatpush1.bf16.msra.mxu0 0
    %1112 = vmatprep.subr.bf16.mxu0 0
    %1113 = vmatpush1.bf16.msra.mxu0 0
    %1114 = vmatprep.subr.bf16.mxu0 0
    %1115 = vmatpush1.bf16.msra.mxu0 0
    %1116 = vmatprep.subr.bf16.mxu0 0
    %1117 = vmatpush1.bf16.msra.mxu0 0
    %1118 = vmatprep.subr.bf16.mxu0 0
    %1119 = vmatpush1.bf16.msra.mxu0 0
    %1120 = vmatprep.subr.bf16.mxu0 0
    %1121 = vmatpush1.bf16.msra.mxu0 0
    %1122 = vmatprep.mubr.bf16.mxu0 0
    %1123 = vmatmul.mubr.bf16.gmra.mrb[0].mxu0 %v852
    %v1124 = vpop.f32.mrb[0].mxu0
    %v1125 = vadd.f32 %v452, %v1124
    %v1126 = vpop.f32.mrb[0].mxu0
    %v1127 = vpop.f32.mrb[0].mxu0
    %v1128 = vpop.f32.mrb[0].mxu0
    %1129 = vdwg.mxu0
    %1130 = vmatprep.subr.bf16.mxu0 0
    %1131 = vmatpush1.bf16.msra.mxu0 %v527
    %1132 = vmatprep.subr.bf16.mxu0 0
    %1133 = vmatpush1.bf16.msra.mxu0 %v528
    %1134 = vmatprep.subr.bf16.mxu0 0
    %1135 = vmatpush1.bf16.msra.mxu0 0
    %1136 = vmatprep.subr.bf16.mxu0 0
    %1137 = vmatpush1.bf16.msra.mxu0 0
    %1138 = vmatprep.subr.bf16.mxu0 0
    %1139 = vmatpush1.bf16.msra.mxu0 0
    %1140 = vmatprep.subr.bf16.mxu0 0
    %1141 = vmatpush1.bf16.msra.mxu0 0
    %1142 = vmatprep.subr.bf16.mxu0 0
    %1143 = vmatpush1.bf16.msra.mxu0 0
    %1144 = vmatprep.subr.bf16.mxu0 0
    %1145 = vmatpush1.bf16.msra.mxu0 0
    %1146 = vmatprep.subr.bf16.mxu0 0
    %1147 = vmatpush1.bf16.msra.mxu0 0
    %1148 = vmatprep.subr.bf16.mxu0 0
    %1149 = vmatpush1.bf16.msra.mxu0 0
    %1150 = vmatprep.subr.bf16.mxu0 0
    %1151 = vmatpush1.bf16.msra.mxu0 0
    %1152 = vmatprep.subr.bf16.mxu0 0
    %1153 = vmatpush1.bf16.msra.mxu0 0
    %1154 = vmatprep.subr.bf16.mxu0 0
    %1155 = vmatpush1.bf16.msra.mxu0 0
    %1156 = vmatprep.subr.bf16.mxu0 0
    %1157 = vmatpush1.bf16.msra.mxu0 0
    %1158 = vmatprep.subr.bf16.mxu0 0
    %1159 = vmatpush1.bf16.msra.mxu0 0
    %1160 = vmatprep.subr.bf16.mxu0 0
    %1161 = vmatpush1.bf16.msra.mxu0 0
    %1162 = vmatprep.mubr.bf16.mxu0 0
    %1163 = vmatmul.mubr.bf16.gmra.mrb[0].mxu0 %v852
    %v1164 = vpop.f32.mrb[0].mxu0
    %v1165 = vadd.f32 %v517, %v1164
    %v1166 = vpop.f32.mrb[0].mxu0
    %v1167 = vpop.f32.mrb[0].mxu0
    %v1168 = vpop.f32.mrb[0].mxu0
    %1169 = vdwg.mxu0
    %1170 = vmatprep.subr.bf16.mxu0 0
    %1171 = vmatpush1.bf16.msra.mxu0 %v592
    %1172 = vmatprep.subr.bf16.mxu0 0
    %1173 = vmatpush1.bf16.msra.mxu0 %v593
    %1174 = vmatprep.subr.bf16.mxu0 0
    %1175 = vmatpush1.bf16.msra.mxu0 0
    %1176 = vmatprep.subr.bf16.mxu0 0
    %1177 = vmatpush1.bf16.msra.mxu0 0
    %1178 = vmatprep.subr.bf16.mxu0 0
    %1179 = vmatpush1.bf16.msra.mxu0 0
    %1180 = vmatprep.subr.bf16.mxu0 0
    %1181 = vmatpush1.bf16.msra.mxu0 0
    %1182 = vmatprep.subr.bf16.mxu0 0
    %1183 = vmatpush1.bf16.msra.mxu0 0
    %1184 = vmatprep.subr.bf16.mxu0 0
    %1185 = vmatpush1.bf16.msra.mxu0 0
    %1186 = vmatprep.subr.bf16.mxu0 0
    %1187 = vmatpush1.bf16.msra.mxu0 0
    %1188 = vmatprep.subr.bf16.mxu0 0
    %1189 = vmatpush1.bf16.msra.mxu0 0
    %1190 = vmatprep.subr.bf16.mxu0 0
    %1191 = vmatpush1.bf16.msra.mxu0 0
    %1192 = vmatprep.subr.bf16.mxu0 0
    %1193 = vmatpush1.bf16.msra.mxu0 0
    %1194 = vmatprep.subr.bf16.mxu0 0
    %1195 = vmatpush1.bf16.msra.mxu0 0
    %1196 = vmatprep.subr.bf16.mxu0 0
    %1197 = vmatpush1.bf16.msra.mxu0 0
    %1198 = vmatprep.subr.bf16.mxu0 0
    %1199 = vmatpush1.bf16.msra.mxu0 0
    %1200 = vmatprep.subr.bf16.mxu0 0
    %1201 = vmatpush1.bf16.msra.mxu0 0
    %1202 = vmatprep.mubr.bf16.mxu0 0
    %1203 = vmatmul.mubr.bf16.gmra.mrb[0].mxu0 %v852
    %v1204 = vpop.f32.mrb[0].mxu0
    %v1205 = vadd.f32 %v582, %v1204
    %v1206 = vpop.f32.mrb[0].mxu0
    %v1207 = vpop.f32.mrb[0].mxu0
    %v1208 = vpop.f32.mrb[0].mxu0
    %1209 = vdwg.mxu0
    %v1210 = vpack.c.bf16 %v1205, %v1205
    %v1211 = vpack.c.bf16 %v1125, %v1125
    %v1212 = vpack.c.bf16 %v1165, %v1165
    %v1214 = vsel %vm323, %v1211, 0
    %v1217 = vsel %vm323, %v1212, 0
    %1219 = vmatprep.subr.bf16.mxu0 0
    %1220 = vmatpush1.bf16.xpose.msra.mxu0 %v1217
    %1221 = vmatprep.subr.bf16.mxu0 0
    %1222 = vmatpush1.bf16.xpose.msra.mxu0 0
    %1223 = vmatprep.subr.bf16.mxu0 0
    %1224 = vmatpush1.bf16.xpose.msra.mxu0 0
    %1225 = vmatprep.subr.bf16.mxu0 0
    %1226 = vmatpush1.bf16.xpose.msra.mxu0 0
    %1227 = vmatprep.subr.bf16.mxu0 0
    %1228 = vmatpush1.bf16.xpose.msra.mxu0 0
    %1229 = vmatprep.subr.bf16.mxu0 0
    %1230 = vmatpush1.bf16.xpose.msra.mxu0 0
    %1231 = vmatprep.subr.bf16.mxu0 0
    %1232 = vmatpush1.bf16.xpose.msra.mxu0 0
    %1233 = vmatprep.subr.bf16.mxu0 0
    %1234 = vmatpush1.bf16.xpose.msra.mxu0 0
    %1235 = vmatprep.subr.bf16.mxu0 0
    %1236 = vmatpush1.bf16.xpose.msra.mxu0 0
    %1237 = vmatprep.subr.bf16.mxu0 0
    %1238 = vmatpush1.bf16.xpose.msra.mxu0 0
    %1239 = vmatprep.subr.bf16.mxu0 0
    %1240 = vmatpush1.bf16.xpose.msra.mxu0 0
    %1241 = vmatprep.subr.bf16.mxu0 0
    %1242 = vmatpush1.bf16.xpose.msra.mxu0 0
    %1243 = vmatprep.subr.bf16.mxu0 0
    %1244 = vmatpush1.bf16.xpose.msra.mxu0 0
    %1245 = vmatprep.subr.bf16.mxu0 0
    %1246 = vmatpush1.bf16.xpose.msra.mxu0 0
    %1247 = vmatprep.subr.bf16.mxu0 0
    %1248 = vmatpush1.bf16.xpose.msra.mxu0 0
    %1249 = vmatprep.subr.bf16.mxu0 0
    %1250 = vmatpush1.bf16.xpose.msra.mxu0 0
    %1251 = vmatprep.mubr.bf16.mxu0 0
    %1252 = vmatmul.mubr.bf16.gmra.mrb[0].mxu0 %v1214
    %v1253 = vpop.f32.mrb[0].mxu0
    %v1254 = vadd.f32 0.0, %v1253
    %v1255 = vpop.f32.mrb[0].mxu0
    %v1256 = vpop.f32.mrb[0].mxu0
    %v1257 = vpop.f32.mrb[0].mxu0
    %1258 = vdwg.mxu0
    %v1259 = vmul.f32 %v1254, 0.25
    %v1260 = vadd.f32 %v1259, %v1028
    %v1261 = vsel %vm378, %v1260, -inf
    %1262 = vmax.xlane.f32.xlu0 %v1261
    %v1263 = vpop.xlane.xlu0 %1262
    %v1264 = vsub.f32 %v1260, %v1263
    %v1265 = vmul.f32 %v1264, 1.442695
    %v1266 = vpow.pop %v1265
    %v1267 = vsel %vm378, %v1266, 0.0
    %1268 = vadd.xlane.f32.xlu0 %v1267
    %v1269 = vpop.xlane.xlu0 %1268
    %v1270 = vrcp.pop %v1269
    %v1271 = vmul.f32 %v1266, %v1270
    %v1272 = vpack.c.bf16 %v1271, %v1271
    %v1274 = vsel %vm378, %v1272, 0
    %v1277 = vsel %vm394, %v1210, 0
    %1279 = vmatprep.subr.bf16.mxu0 0
    %1280 = vmatpush1.bf16.msra.mxu0 %v1277
    %1281 = vmatprep.subr.bf16.mxu0 0
    %1282 = vmatpush1.bf16.msra.mxu0 0
    %1283 = vmatprep.subr.bf16.mxu0 0
    %1284 = vmatpush1.bf16.msra.mxu0 0
    %1285 = vmatprep.subr.bf16.mxu0 0
    %1286 = vmatpush1.bf16.msra.mxu0 0
    %1287 = vmatprep.subr.bf16.mxu0 0
    %1288 = vmatpush1.bf16.msra.mxu0 0
    %1289 = vmatprep.subr.bf16.mxu0 0
    %1290 = vmatpush1.bf16.msra.mxu0 0
    %1291 = vmatprep.subr.bf16.mxu0 0
    %1292 = vmatpush1.bf16.msra.mxu0 0
    %1293 = vmatprep.subr.bf16.mxu0 0
    %1294 = vmatpush1.bf16.msra.mxu0 0
    %1295 = vmatprep.subr.bf16.mxu0 0
    %1296 = vmatpush1.bf16.msra.mxu0 0
    %1297 = vmatprep.subr.bf16.mxu0 0
    %1298 = vmatpush1.bf16.msra.mxu0 0
    %1299 = vmatprep.subr.bf16.mxu0 0
    %1300 = vmatpush1.bf16.msra.mxu0 0
    %1301 = vmatprep.subr.bf16.mxu0 0
    %1302 = vmatpush1.bf16.msra.mxu0 0
    %1303 = vmatprep.subr.bf16.mxu0 0
    %1304 = vmatpush1.bf16.msra.mxu0 0
    %1305 = vmatprep.subr.bf16.mxu0 0
    %1306 = vmatpush1.bf16.msra.mxu0 0
    %1307 = vmatprep.subr.bf16.mxu0 0
    %1308 = vmatpush1.bf16.msra.mxu0 0
    %1309 = vmatprep.subr.bf16.mxu0 0
    %1310 = vmatpush1.bf16.msra.mxu0 0
    %1311 = vmatprep.mubr.bf16.mxu0 0
    %1312 = vmatmul.mubr.bf16.gmra.mrb[0].mxu0 %v1274
    %v1313 = vpop.f32.mrb[0].mxu0
    %v1314 = vadd.f32 0.0, %v1313
    %v1315 = vpop.f32.mrb[0].mxu0
    %v1316 = vpop.f32.mrb[0].mxu0
    %v1317 = vpop.f32.mrb[0].mxu0
    %1318 = vdwg.mxu0
    %v1319 = vpack.c.bf16 %v1314, %v1314
    %v1321 = vsel %vm323, %v1319, 0
    %1323 = vmatprep.subr.bf16.mxu0 0
    %1324 = vmatpush1.bf16.msra.mxu0 %v753
    %1325 = vmatprep.subr.bf16.mxu0 0
    %1326 = vmatpush1.bf16.msra.mxu0 0
    %1327 = vmatprep.subr.bf16.mxu0 0
    %1328 = vmatpush1.bf16.msra.mxu0 0
    %1329 = vmatprep.subr.bf16.mxu0 0
    %1330 = vmatpush1.bf16.msra.mxu0 0
    %1331 = vmatprep.subr.bf16.mxu0 0
    %1332 = vmatpush1.bf16.msra.mxu0 0
    %1333 = vmatprep.subr.bf16.mxu0 0
    %1334 = vmatpush1.bf16.msra.mxu0 0
    %1335 = vmatprep.subr.bf16.mxu0 0
    %1336 = vmatpush1.bf16.msra.mxu0 0
    %1337 = vmatprep.subr.bf16.mxu0 0
    %1338 = vmatpush1.bf16.msra.mxu0 0
    %1339 = vmatprep.subr.bf16.mxu0 0
    %1340 = vmatpush1.bf16.msra.mxu0 0
    %1341 = vmatprep.subr.bf16.mxu0 0
    %1342 = vmatpush1.bf16.msra.mxu0 0
    %1343 = vmatprep.subr.bf16.mxu0 0
    %1344 = vmatpush1.bf16.msra.mxu0 0
    %1345 = vmatprep.subr.bf16.mxu0 0
    %1346 = vmatpush1.bf16.msra.mxu0 0
    %1347 = vmatprep.subr.bf16.mxu0 0
    %1348 = vmatpush1.bf16.msra.mxu0 0
    %1349 = vmatprep.subr.bf16.mxu0 0
    %1350 = vmatpush1.bf16.msra.mxu0 0
    %1351 = vmatprep.subr.bf16.mxu0 0
    %1352 = vmatpush1.bf16.msra.mxu0 0
    %1353 = vmatprep.subr.bf16.mxu0 0
    %1354 = vmatpush1.bf16.msra.mxu0 0
    %1355 = vmatprep.mubr.bf16.mxu0 0
    %1356 = vmatmul.mubr.bf16.gmra.mrb[0].mxu0 %v1321
    %v1357 = vpop.f32.mrb[0].mxu0
    %v1358 = vadd.f32 0.0, %v1357
    %v1359 = vpop.f32.mrb[0].mxu0
    %v1360 = vpop.f32.mrb[0].mxu0
    %v1361 = vpop.f32.mrb[0].mxu0
    %1362 = vdwg.mxu0
    %v1364 = vsel %vm323, %v1089, 0
    %1366 = vmatprep.subr.bf16.mxu0 0
    %1367 = vmatpush1.bf16.msra.mxu0 %v802
    %1368 = vmatprep.subr.bf16.mxu0 0
    %1369 = vmatpush1.bf16.msra.mxu0 0
    %1370 = vmatprep.subr.bf16.mxu0 0
    %1371 = vmatpush1.bf16.msra.mxu0 0
    %1372 = vmatprep.subr.bf16.mxu0 0
    %1373 = vmatpush1.bf16.msra.mxu0 0
    %1374 = vmatprep.subr.bf16.mxu0 0
    %1375 = vmatpush1.bf16.msra.mxu0 0
    %1376 = vmatprep.subr.bf16.mxu0 0
    %1377 = vmatpush1.bf16.msra.mxu0 0
    %1378 = vmatprep.subr.bf16.mxu0 0
    %1379 = vmatpush1.bf16.msra.mxu0 0
    %1380 = vmatprep.subr.bf16.mxu0 0
    %1381 = vmatpush1.bf16.msra.mxu0 0
    %1382 = vmatprep.subr.bf16.mxu0 0
    %1383 = vmatpush1.bf16.msra.mxu0 0
    %1384 = vmatprep.subr.bf16.mxu0 0
    %1385 = vmatpush1.bf16.msra.mxu0 0
    %1386 = vmatprep.subr.bf16.mxu0 0
    %1387 = vmatpush1.bf16.msra.mxu0 0
    %1388 = vmatprep.subr.bf16.mxu0 0
    %1389 = vmatpush1.bf16.msra.mxu0 0
    %1390 = vmatprep.subr.bf16.mxu0 0
    %1391 = vmatpush1.bf16.msra.mxu0 0
    %1392 = vmatprep.subr.bf16.mxu0 0
    %1393 = vmatpush1.bf16.msra.mxu0 0
    %1394 = vmatprep.subr.bf16.mxu0 0
    %1395 = vmatpush1.bf16.msra.mxu0 0
    %1396 = vmatprep.subr.bf16.mxu0 0
    %1397 = vmatpush1.bf16.msra.mxu0 0
    %1398 = vmatprep.mubr.bf16.mxu0 0
    %1399 = vmatmul.mubr.bf16.gmra.mrb[0].mxu0 %v1364
    %v1400 = vpop.f32.mrb[0].mxu0
    %v1401 = vadd.f32 %v1358, %v1400
    %v1402 = vpop.f32.mrb[0].mxu0
    %v1403 = vpop.f32.mrb[0].mxu0
    %v1404 = vpop.f32.mrb[0].mxu0
    %1405 = vdwg.mxu0
    %v1406 = vld [vmem:[%s11] sm:$0x1]
    %v1408 = vlaneseq
    %v1409 = vshrl.u32 %v1408, 7
    %v1410 = vsub.s32 0, %v1409
    %v1411 = vrot.slane %v1406, %v1410
    %v1413 = vadd.f32 %v842, %v1411
    %v1414 = vadd.f32 %v1401, %v1411
    %v1415 = vadd.f32 %v119, %v1413
    %v1416 = vadd.f32 %v120, %v1414
    %v1417 = vld [vmem:[%s12] sm:$0x1]
    %v1418 = vld [vmem:[%s13] sm:$0x1]
    %v1419 = vsel %vm77, %v1415, 0.0
    %1420 = vadd.xlane.f32.xlu0 %v1419
    %v1421 = vpop.xlane.xlu0 %1420
    %v1422 = vsel %vm77, %v1416, 0.0
    %1423 = vadd.xlane.f32.xlu0 %v1422
    %v1424 = vpop.xlane.xlu0 %1423
    %v1425 = vmul.f32 %v1421, %v84
    %v1426 = vmul.f32 %v1424, %v84
    %v1427 = vsub.f32 %v1415, %v1425
    %v1428 = vsub.f32 %v1416, %v1426
    %v1429 = vmul.f32 %v1427, %v1427
    %v1430 = vmul.f32 %v1428, %v1428
    %v1431 = vsel %vm77, %v1429, 0.0
    %1432 = vadd.xlane.f32.xlu0 %v1431
    %v1433 = vpop.xlane.xlu0 %1432
    %v1434 = vsel %vm77, %v1430, 0.0
    %1435 = vadd.xlane.f32.xlu0 %v1434
    %v1436 = vpop.xlane.xlu0 %1435
    %v1437 = vmul.f32 %v1433, %v84
    %v1438 = vmul.f32 %v1436, %v84
    %v1439 = vadd.f32 %v1437, 1e-12
    %v1440 = vadd.f32 %v1438, 1e-12
    %v1441 = vrsqrt.pop %v1439
    %v1442 = vrsqrt.pop %v1440
    %v1443 = vmul.f32 %v1427, %v1441
    %v1444 = vmul.f32 %v1428, %v1442
    %v1446 = vlaneseq
    %v1447 = vshrl.u32 %v1446, 7
    %v1448 = vsub.s32 0, %v1447
    %v1449 = vrot.slane %v1417, %v1448
    %v1451 = vmul.f32 %v1443, %v1449
    %v1452 = vmul.f32 %v1444, %v1449
    %v1454 = vlaneseq
    %v1455 = vshrl.u32 %v1454, 7
    %v1456 = vsub.s32 0, %v1455
    %v1457 = vrot.slane %v1418, %v1456
    %v1459 = vadd.f32 %v1451, %v1457
    %v1460 = vadd.f32 %v1452, %v1457
    %v1461 = vpack.c.bf16 %v1460, %v1459
    %v1462 = vld [vmem:[%s14] sm:$0xf]
    %v1463 = vld [vmem:[%s14 + $0x4] sm:$0xf]
    %v1464 = vld [vmem:[%s14 + $0x8] sm:$0xf]
    %v1465 = vld [vmem:[%s14 + $0xc] sm:$0xf]
    %v1466 = vld [vmem:[%s15] sm:$0x1]
    %v1468 = vlaneseq
    %v1469 = vshrl.u32 %v1468, 7
    %v1470 = vsub.s32 0, %v1469
    %v1471 = vrot.slane %v1466, %v1470
    %v1477 = vunpack.c.l.b16 %v1462
    %v1478 = vunpack.c.l.b16 %v1463
    %v1479 = vunpack.c.l.b16 %v1464
    %v1480 = vunpack.c.l.b16 %v1465
    %v1481 = vpack.c.b16 %v1478, %v1477
    %v1482 = vpack.c.b16 %v1480, %v1479
    %v1486 = vsel %vm77, %v1461, 0
    %1488 = vmatprep.subr.bf16.mxu0 0
    %1489 = vmatpush1.bf16.msra.mxu0 %v1481
    %1490 = vmatprep.subr.bf16.mxu0 0
    %1491 = vmatpush1.bf16.msra.mxu0 %v1482
    %1492 = vmatprep.subr.bf16.mxu0 0
    %1493 = vmatpush1.bf16.msra.mxu0 0
    %1494 = vmatprep.subr.bf16.mxu0 0
    %1495 = vmatpush1.bf16.msra.mxu0 0
    %1496 = vmatprep.subr.bf16.mxu0 0
    %1497 = vmatpush1.bf16.msra.mxu0 0
    %1498 = vmatprep.subr.bf16.mxu0 0
    %1499 = vmatpush1.bf16.msra.mxu0 0
    %1500 = vmatprep.subr.bf16.mxu0 0
    %1501 = vmatpush1.bf16.msra.mxu0 0
    %1502 = vmatprep.subr.bf16.mxu0 0
    %1503 = vmatpush1.bf16.msra.mxu0 0
    %1504 = vmatprep.subr.bf16.mxu0 0
    %1505 = vmatpush1.bf16.msra.mxu0 0
    %1506 = vmatprep.subr.bf16.mxu0 0
    %1507 = vmatpush1.bf16.msra.mxu0 0
    %1508 = vmatprep.subr.bf16.mxu0 0
    %1509 = vmatpush1.bf16.msra.mxu0 0
    %1510 = vmatprep.subr.bf16.mxu0 0
    %1511 = vmatpush1.bf16.msra.mxu0 0
    %1512 = vmatprep.subr.bf16.mxu0 0
    %1513 = vmatpush1.bf16.msra.mxu0 0
    %1514 = vmatprep.subr.bf16.mxu0 0
    %1515 = vmatpush1.bf16.msra.mxu0 0
    %1516 = vmatprep.subr.bf16.mxu0 0
    %1517 = vmatpush1.bf16.msra.mxu0 0
    %1518 = vmatprep.subr.bf16.mxu0 0
    %1519 = vmatpush1.bf16.msra.mxu0 0
    %1520 = vmatprep.mubr.bf16.mxu0 0
    %1521 = vmatmul.mubr.bf16.gmra.mrb[0].mxu0 %v1486
    %v1522 = vpop.f32.mrb[0].mxu0
    %v1523 = vadd.f32 %v1471, %v1522
    %v1524 = vpop.f32.mrb[0].mxu0
    %v1525 = vpop.f32.mrb[0].mxu0
    %v1526 = vadd.f32 %v1471, %v1525
    %v1527 = vpop.f32.mrb[0].mxu0
    %1528 = vdwg.mxu0
    %v1529 = vmul.f32 %v1523, %v1523
    %v1530 = vmul.f32 %v1526, %v1526
    %v1531 = vmul.f32 %v1523, %v1529
    %v1532 = vmul.f32 %v1526, %v1530
    %v1533 = vmul.f32 %v1531, 0.044715
    %v1534 = vmul.f32 %v1532, 0.044715
    %v1535 = vadd.f32 %v1523, %v1533
    %v1536 = vadd.f32 %v1526, %v1534
    %v1537 = vmul.f32 %v1535, 0.7978846
    %v1538 = vmul.f32 %v1536, 0.7978846
    %v1539 = vtanh.pop %v1537
    %v1540 = vtanh.pop %v1538
    %v1541 = vadd.f32 %v1539, 1.0
    %v1542 = vadd.f32 %v1540, 1.0
    %v1543 = vmul.f32 %v1541, 0.5
    %v1544 = vmul.f32 %v1542, 0.5
    %v1545 = vmul.f32 %v1523, %v1543
    %v1546 = vmul.f32 %v1526, %v1544
    %v1547 = vpack.c.bf16 %v1546, %v1545
    %v1548 = vld [vmem:[%s16] sm:$0xf]
    %v1549 = vld [vmem:[%s16 + $0x4] sm:$0xf]
    %v1550 = vld [vmem:[%s16 + $0x8] sm:$0xf]
    %v1551 = vld [vmem:[%s16 + $0xc] sm:$0xf]
    %v1552 = vld [vmem:[%s16 + $0x10] sm:$0xf]
    %v1553 = vld [vmem:[%s16 + $0x14] sm:$0xf]
    %v1554 = vld [vmem:[%s16 + $0x18] sm:$0xf]
    %v1555 = vld [vmem:[%s16 + $0x1c] sm:$0xf]
    %v1556 = vld [vmem:[%s17] sm:$0x1]
    %v1558 = vlaneseq
    %v1559 = vshrl.u32 %v1558, 7
    %v1560 = vsub.s32 0, %v1559
    %v1561 = vrot.slane %v1556, %v1560
    %v1571 = vunpack.c.l.b16 %v1548
    %v1572 = vunpack.c.l.b16 %v1549
    %v1573 = vunpack.c.l.b16 %v1550
    %v1574 = vunpack.c.l.b16 %v1551
    %v1575 = vunpack.c.l.b16 %v1552
    %v1576 = vunpack.c.l.b16 %v1553
    %v1577 = vunpack.c.l.b16 %v1554
    %v1578 = vunpack.c.l.b16 %v1555
    %v1579 = vpack.c.b16 %v1572, %v1571
    %v1580 = vpack.c.b16 %v1574, %v1573
    %v1581 = vpack.c.b16 %v1576, %v1575
    %v1582 = vpack.c.b16 %v1578, %v1577
    %vm1587 = vcmask 523264
    %v1589 = vsel %vm1587, %v1547, 0
    %1591 = vmatprep.subr.bf16.mxu0 0
    %1592 = vmatpush1.bf16.msra.mxu0 %v1579
    %1593 = vmatprep.subr.bf16.mxu0 0
    %1594 = vmatpush1.bf16.msra.mxu0 %v1580
    %1595 = vmatprep.subr.bf16.mxu0 0
    %1596 = vmatpush1.bf16.msra.mxu0 %v1581
    %1597 = vmatprep.subr.bf16.mxu0 0
    %1598 = vmatpush1.bf16.msra.mxu0 %v1582
    %1599 = vmatprep.subr.bf16.mxu0 0
    %1600 = vmatpush1.bf16.msra.mxu0 0
    %1601 = vmatprep.subr.bf16.mxu0 0
    %1602 = vmatpush1.bf16.msra.mxu0 0
    %1603 = vmatprep.subr.bf16.mxu0 0
    %1604 = vmatpush1.bf16.msra.mxu0 0
    %1605 = vmatprep.subr.bf16.mxu0 0
    %1606 = vmatpush1.bf16.msra.mxu0 0
    %1607 = vmatprep.subr.bf16.mxu0 0
    %1608 = vmatpush1.bf16.msra.mxu0 0
    %1609 = vmatprep.subr.bf16.mxu0 0
    %1610 = vmatpush1.bf16.msra.mxu0 0
    %1611 = vmatprep.subr.bf16.mxu0 0
    %1612 = vmatpush1.bf16.msra.mxu0 0
    %1613 = vmatprep.subr.bf16.mxu0 0
    %1614 = vmatpush1.bf16.msra.mxu0 0
    %1615 = vmatprep.subr.bf16.mxu0 0
    %1616 = vmatpush1.bf16.msra.mxu0 0
    %1617 = vmatprep.subr.bf16.mxu0 0
    %1618 = vmatpush1.bf16.msra.mxu0 0
    %1619 = vmatprep.subr.bf16.mxu0 0
    %1620 = vmatpush1.bf16.msra.mxu0 0
    %1621 = vmatprep.subr.bf16.mxu0 0
    %1622 = vmatpush1.bf16.msra.mxu0 0
    %1623 = vmatprep.mubr.bf16.mxu0 0
    %1624 = vmatmul.mubr.bf16.gmra.mrb[0].mxu0 %v1589
    %v1625 = vpop.f32.mrb[0].mxu0
    %v1626 = vadd.f32 %v1561, %v1625
    %v1627 = vpop.f32.mrb[0].mxu0
    %v1628 = vpop.f32.mrb[0].mxu0
    %v1629 = vadd.f32 %v1561, %v1628
    %v1630 = vpop.f32.mrb[0].mxu0
    %1631 = vdwg.mxu0
    %v1632 = vadd.f32 %v1459, %v1626
    %v1633 = vadd.f32 %v1460, %v1629
    %v1634 = vld [vmem:[%s18] sm:$0x1]
    %v1635 = vld [vmem:[%s19] sm:$0x1]
    %v1636 = vsel %vm77, %v1632, 0.0
    %1637 = vadd.xlane.f32.xlu0 %v1636
    %v1638 = vpop.xlane.xlu0 %1637
    %v1639 = vsel %vm77, %v1633, 0.0
    %1640 = vadd.xlane.f32.xlu0 %v1639
    %v1641 = vpop.xlane.xlu0 %1640
    %v1642 = vmul.f32 %v1638, %v84
    %v1643 = vmul.f32 %v1641, %v84
    %v1644 = vsub.f32 %v1632, %v1642
    %v1645 = vsub.f32 %v1633, %v1643
    %v1646 = vmul.f32 %v1644, %v1644
    %v1647 = vmul.f32 %v1645, %v1645
    %v1648 = vsel %vm77, %v1646, 0.0
    %1649 = vadd.xlane.f32.xlu0 %v1648
    %v1650 = vpop.xlane.xlu0 %1649
    %v1651 = vsel %vm77, %v1647, 0.0
    %1652 = vadd.xlane.f32.xlu0 %v1651
    %v1653 = vpop.xlane.xlu0 %1652
    %v1654 = vmul.f32 %v1650, %v84
    %v1655 = vmul.f32 %v1653, %v84
    %v1656 = vadd.f32 %v1654, 1e-12
    %v1657 = vadd.f32 %v1655, 1e-12
    %v1658 = vrsqrt.pop %v1656
    %v1659 = vrsqrt.pop %v1657
    %v1660 = vmul.f32 %v1644, %v1658
    %v1661 = vmul.f32 %v1645, %v1659
    %v1663 = vlaneseq
    %v1664 = vshrl.u32 %v1663, 7
    %v1665 = vsub.s32 0, %v1664
    %v1666 = vrot.slane %v1634, %v1665
    %v1668 = vmul.f32 %v1660, %v1666
    %v1669 = vmul.f32 %v1661, %v1666
    %v1671 = vlaneseq
    %v1672 = vshrl.u32 %v1671, 7
    %v1673 = vsub.s32 0, %v1672
    %v1674 = vrot.slane %v1635, %v1673
    %v1676 = vadd.f32 %v1668, %v1674
    %v1677 = vadd.f32 %v1669, %v1674
    %v1678 = vpack.c.bf16 %v1677, %v1676
    %s1679 = scalar_lea.vmem %s4, 32
    %v1680 = vld [vmem:[%s1679] sm:$0xf]
    %v1681 = vld [vmem:[%s1679 + $0x4] sm:$0xf]
    %v1682 = vld [vmem:[%s1679 + $0x8] sm:$0xf]
    %v1683 = vld [vmem:[%s1679 + $0xc] sm:$0xf]
    %s1684 = scalar_lea.vmem %s7, 2
    %v1685 = vld [vmem:[%s1684] sm:$0x1]
    %v1687 = vlaneseq
    %v1688 = vshrl.u32 %v1687, 7
    %v1689 = vsub.s32 0, %v1688
    %v1690 = vrot.slane %v1685, %v1689
    %v1696 = vunpack.c.l.b16 %v1680
    %v1697 = vunpack.c.l.b16 %v1681
    %v1698 = vunpack.c.l.b16 %v1682
    %v1699 = vunpack.c.l.b16 %v1683
    %v1700 = vpack.c.b16 %v1697, %v1696
    %v1701 = vpack.c.b16 %v1699, %v1698
    %v1705 = vsel %vm77, %v1678, 0
    %1707 = vmatprep.subr.bf16.mxu0 0
    %1708 = vmatpush1.bf16.msra.mxu0 %v1700
    %1709 = vmatprep.subr.bf16.mxu0 0
    %1710 = vmatpush1.bf16.msra.mxu0 %v1701
    %1711 = vmatprep.subr.bf16.mxu0 0
    %1712 = vmatpush1.bf16.msra.mxu0 0
    %1713 = vmatprep.subr.bf16.mxu0 0
    %1714 = vmatpush1.bf16.msra.mxu0 0
    %1715 = vmatprep.subr.bf16.mxu0 0
    %1716 = vmatpush1.bf16.msra.mxu0 0
    %1717 = vmatprep.subr.bf16.mxu0 0
    %1718 = vmatpush1.bf16.msra.mxu0 0
    %1719 = vmatprep.subr.bf16.mxu0 0
    %1720 = vmatpush1.bf16.msra.mxu0 0
    %1721 = vmatprep.subr.bf16.mxu0 0
    %1722 = vmatpush1.bf16.msra.mxu0 0
    %1723 = vmatprep.subr.bf16.mxu0 0
    %1724 = vmatpush1.bf16.msra.mxu0 0
    %1725 = vmatprep.subr.bf16.mxu0 0
    %1726 = vmatpush1.bf16.msra.mxu0 0
    %1727 = vmatprep.subr.bf16.mxu0 0
    %1728 = vmatpush1.bf16.msra.mxu0 0
    %1729 = vmatprep.subr.bf16.mxu0 0
    %1730 = vmatpush1.bf16.msra.mxu0 0
    %1731 = vmatprep.subr.bf16.mxu0 0
    %1732 = vmatpush1.bf16.msra.mxu0 0
    %1733 = vmatprep.subr.bf16.mxu0 0
    %1734 = vmatpush1.bf16.msra.mxu0 0
    %1735 = vmatprep.subr.bf16.mxu0 0
    %1736 = vmatpush1.bf16.msra.mxu0 0
    %1737 = vmatprep.subr.bf16.mxu0 0
    %1738 = vmatpush1.bf16.msra.mxu0 0
    %1739 = vmatprep.mubr.bf16.mxu0 0
    %1740 = vmatmul.mubr.bf16.gmra.mrb[0].mxu0 %v1705
    %v1741 = vpop.f32.mrb[0].mxu0
    %v1742 = vadd.f32 %v1690, %v1741
    %v1743 = vpop.f32.mrb[0].mxu0
    %v1744 = vpop.f32.mrb[0].mxu0
    %v1745 = vpop.f32.mrb[0].mxu0
    %1746 = vdwg.mxu0
    %s1747 = scalar_lea.vmem %s5, 32
    %v1748 = vld [vmem:[%s1747] sm:$0xf]
    %v1749 = vld [vmem:[%s1747 + $0x4] sm:$0xf]
    %v1750 = vld [vmem:[%s1747 + $0x8] sm:$0xf]
    %v1751 = vld [vmem:[%s1747 + $0xc] sm:$0xf]
    %s1752 = scalar_lea.vmem %s8, 2
    %v1753 = vld [vmem:[%s1752] sm:$0x1]
    %v1755 = vlaneseq
    %v1756 = vshrl.u32 %v1755, 7
    %v1757 = vsub.s32 0, %v1756
    %v1758 = vrot.slane %v1753, %v1757
    %v1764 = vunpack.c.l.b16 %v1748
    %v1765 = vunpack.c.l.b16 %v1749
    %v1766 = vunpack.c.l.b16 %v1750
    %v1767 = vunpack.c.l.b16 %v1751
    %v1768 = vpack.c.b16 %v1765, %v1764
    %v1769 = vpack.c.b16 %v1767, %v1766
    %1772 = vmatprep.subr.bf16.mxu0 0
    %1773 = vmatpush1.bf16.msra.mxu0 %v1768
    %1774 = vmatprep.subr.bf16.mxu0 0
    %1775 = vmatpush1.bf16.msra.mxu0 %v1769
    %1776 = vmatprep.subr.bf16.mxu0 0
    %1777 = vmatpush1.bf16.msra.mxu0 0
    %1778 = vmatprep.subr.bf16.mxu0 0
    %1779 = vmatpush1.bf16.msra.mxu0 0
    %1780 = vmatprep.subr.bf16.mxu0 0
    %1781 = vmatpush1.bf16.msra.mxu0 0
    %1782 = vmatprep.subr.bf16.mxu0 0
    %1783 = vmatpush1.bf16.msra.mxu0 0
    %1784 = vmatprep.subr.bf16.mxu0 0
    %1785 = vmatpush1.bf16.msra.mxu0 0
    %1786 = vmatprep.subr.bf16.mxu0 0
    %1787 = vmatpush1.bf16.msra.mxu0 0
    %1788 = vmatprep.subr.bf16.mxu0 0
    %1789 = vmatpush1.bf16.msra.mxu0 0
    %1790 = vmatprep.subr.bf16.mxu0 0
    %1791 = vmatpush1.bf16.msra.mxu0 0
    %1792 = vmatprep.subr.bf16.mxu0 0
    %1793 = vmatpush1.bf16.msra.mxu0 0
    %1794 = vmatprep.subr.bf16.mxu0 0
    %1795 = vmatpush1.bf16.msra.mxu0 0
    %1796 = vmatprep.subr.bf16.mxu0 0
    %1797 = vmatpush1.bf16.msra.mxu0 0
    %1798 = vmatprep.subr.bf16.mxu0 0
    %1799 = vmatpush1.bf16.msra.mxu0 0
    %1800 = vmatprep.subr.bf16.mxu0 0
    %1801 = vmatpush1.bf16.msra.mxu0 0
    %1802 = vmatprep.subr.bf16.mxu0 0
    %1803 = vmatpush1.bf16.msra.mxu0 0
    %1804 = vmatprep.mubr.bf16.mxu0 0
    %1805 = vmatmul.mubr.bf16.gmra.mrb[0].mxu0 %v1705
    %v1806 = vpop.f32.mrb[0].mxu0
    %v1807 = vadd.f32 %v1758, %v1806
    %v1808 = vpop.f32.mrb[0].mxu0
    %v1809 = vpop.f32.mrb[0].mxu0
    %v1810 = vpop.f32.mrb[0].mxu0
    %1811 = vdwg.mxu0
    %s1812 = scalar_lea.vmem %s6, 32
    %v1813 = vld [vmem:[%s1812] sm:$0xf]
    %v1814 = vld [vmem:[%s1812 + $0x4] sm:$0xf]
    %v1815 = vld [vmem:[%s1812 + $0x8] sm:$0xf]
    %v1816 = vld [vmem:[%s1812 + $0xc] sm:$0xf]
    %s1817 = scalar_lea.vmem %s9, 2
    %v1818 = vld [vmem:[%s1817] sm:$0x1]
    %v1820 = vlaneseq
    %v1821 = vshrl.u32 %v1820, 7
    %v1822 = vsub.s32 0, %v1821
    %v1823 = vrot.slane %v1818, %v1822
    %v1829 = vunpack.c.l.b16 %v1813
    %v1830 = vunpack.c.l.b16 %v1814
    %v1831 = vunpack.c.l.b16 %v1815
    %v1832 = vunpack.c.l.b16 %v1816
    %v1833 = vpack.c.b16 %v1830, %v1829
    %v1834 = vpack.c.b16 %v1832, %v1831
    %1837 = vmatprep.subr.bf16.mxu0 0
    %1838 = vmatpush1.bf16.msra.mxu0 %v1833
    %1839 = vmatprep.subr.bf16.mxu0 0
    %1840 = vmatpush1.bf16.msra.mxu0 %v1834
    %1841 = vmatprep.subr.bf16.mxu0 0
    %1842 = vmatpush1.bf16.msra.mxu0 0
    %1843 = vmatprep.subr.bf16.mxu0 0
    %1844 = vmatpush1.bf16.msra.mxu0 0
    %1845 = vmatprep.subr.bf16.mxu0 0
    %1846 = vmatpush1.bf16.msra.mxu0 0
    %1847 = vmatprep.subr.bf16.mxu0 0
    %1848 = vmatpush1.bf16.msra.mxu0 0
    %1849 = vmatprep.subr.bf16.mxu0 0
    %1850 = vmatpush1.bf16.msra.mxu0 0
    %1851 = vmatprep.subr.bf16.mxu0 0
    %1852 = vmatpush1.bf16.msra.mxu0 0
    %1853 = vmatprep.subr.bf16.mxu0 0
    %1854 = vmatpush1.bf16.msra.mxu0 0
    %1855 = vmatprep.subr.bf16.mxu0 0
    %1856 = vmatpush1.bf16.msra.mxu0 0
    %1857 = vmatprep.subr.bf16.mxu0 0
    %1858 = vmatpush1.bf16.msra.mxu0 0
    %1859 = vmatprep.subr.bf16.mxu0 0
    %1860 = vmatpush1.bf16.msra.mxu0 0
    %1861 = vmatprep.subr.bf16.mxu0 0
    %1862 = vmatpush1.bf16.msra.mxu0 0
    %1863 = vmatprep.subr.bf16.mxu0 0
    %1864 = vmatpush1.bf16.msra.mxu0 0
    %1865 = vmatprep.subr.bf16.mxu0 0
    %1866 = vmatpush1.bf16.msra.mxu0 0
    %1867 = vmatprep.subr.bf16.mxu0 0
    %1868 = vmatpush1.bf16.msra.mxu0 0
    %1869 = vmatprep.mubr.bf16.mxu0 0
    %1870 = vmatmul.mubr.bf16.gmra.mrb[0].mxu0 %v1705
    %v1871 = vpop.f32.mrb[0].mxu0
    %v1872 = vadd.f32 %v1823, %v1871
    %v1873 = vpop.f32.mrb[0].mxu0
    %v1874 = vpop.f32.mrb[0].mxu0
    %v1875 = vpop.f32.mrb[0].mxu0
    %1876 = vdwg.mxu0
    %v1877 = vpack.c.bf16 %v1872, %v1872
    %v1878 = vpack.c.bf16 %v1742, %v1742
    %v1879 = vpack.c.bf16 %v1807, %v1807
    %v1881 = vsel %vm323, %v1878, 0
    %v1884 = vsel %vm323, %v1879, 0
    %1886 = vmatprep.subr.bf16.mxu0 0
    %1887 = vmatpush1.bf16.xpose.msra.mxu0 %v1884
    %1888 = vmatprep.subr.bf16.mxu0 0
    %1889 = vmatpush1.bf16.xpose.msra.mxu0 0
    %1890 = vmatprep.subr.bf16.mxu0 0
    %1891 = vmatpush1.bf16.xpose.msra.mxu0 0
    %1892 = vmatprep.subr.bf16.mxu0 0
    %1893 = vmatpush1.bf16.xpose.msra.mxu0 0
    %1894 = vmatprep.subr.bf16.mxu0 0
    %1895 = vmatpush1.bf16.xpose.msra.mxu0 0
    %1896 = vmatprep.subr.bf16.mxu0 0
    %1897 = vmatpush1.bf16.xpose.msra.mxu0 0
    %1898 = vmatprep.subr.bf16.mxu0 0
    %1899 = vmatpush1.bf16.xpose.msra.mxu0 0
    %1900 = vmatprep.subr.bf16.mxu0 0
    %1901 = vmatpush1.bf16.xpose.msra.mxu0 0
    %1902 = vmatprep.subr.bf16.mxu0 0
    %1903 = vmatpush1.bf16.xpose.msra.mxu0 0
    %1904 = vmatprep.subr.bf16.mxu0 0
    %1905 = vmatpush1.bf16.xpose.msra.mxu0 0
    %1906 = vmatprep.subr.bf16.mxu0 0
    %1907 = vmatpush1.bf16.xpose.msra.mxu0 0
    %1908 = vmatprep.subr.bf16.mxu0 0
    %1909 = vmatpush1.bf16.xpose.msra.mxu0 0
    %1910 = vmatprep.subr.bf16.mxu0 0
    %1911 = vmatpush1.bf16.xpose.msra.mxu0 0
    %1912 = vmatprep.subr.bf16.mxu0 0
    %1913 = vmatpush1.bf16.xpose.msra.mxu0 0
    %1914 = vmatprep.subr.bf16.mxu0 0
    %1915 = vmatpush1.bf16.xpose.msra.mxu0 0
    %1916 = vmatprep.subr.bf16.mxu0 0
    %1917 = vmatpush1.bf16.xpose.msra.mxu0 0
    %1918 = vmatprep.mubr.bf16.mxu0 0
    %1919 = vmatmul.mubr.bf16.gmra.mrb[0].mxu0 %v1881
    %v1920 = vpop.f32.mrb[0].mxu0
    %v1921 = vadd.f32 0.0, %v1920
    %v1922 = vpop.f32.mrb[0].mxu0
    %v1923 = vpop.f32.mrb[0].mxu0
    %v1924 = vpop.f32.mrb[0].mxu0
    %1925 = vdwg.mxu0
    %v1926 = vmul.f32 %v1921, 0.25
    %v1927 = vadd.f32 %v1926, %v375
    %v1928 = vsel %vm378, %v1927, -inf
    %1929 = vmax.xlane.f32.xlu0 %v1928
    %v1930 = vpop.xlane.xlu0 %1929
    %v1931 = vsub.f32 %v1927, %v1930
    %v1932 = vmul.f32 %v1931, 1.442695
    %v1933 = vpow.pop %v1932
    %v1934 = vsel %vm378, %v1933, 0.0
    %1935 = vadd.xlane.f32.xlu0 %v1934
    %v1936 = vpop.xlane.xlu0 %1935
    %v1937 = vrcp.pop %v1936
    %v1938 = vmul.f32 %v1933, %v1937
    %v1939 = vpack.c.bf16 %v1938, %v1938
    %v1941 = vsel %vm378, %v1939, 0
    %v1944 = vsel %vm394, %v1877, 0
    %1946 = vmatprep.subr.bf16.mxu0 0
    %1947 = vmatpush1.bf16.msra.mxu0 %v1944
    %1948 = vmatprep.subr.bf16.mxu0 0
    %1949 = vmatpush1.bf16.msra.mxu0 0
    %1950 = vmatprep.subr.bf16.mxu0 0
    %1951 = vmatpush1.bf16.msra.mxu0 0
    %1952 = vmatprep.subr.bf16.mxu0 0
    %1953 = vmatpush1.bf16.msra.mxu0 0
    %1954 = vmatprep.subr.bf16.mxu0 0
    %1955 = vmatpush1.bf16.msra.mxu0 0
    %1956 = vmatprep.subr.bf16.mxu0 0
    %1957 = vmatpush1.bf16.msra.mxu0 0
    %1958 = vmatprep.subr.bf16.mxu0 0
    %1959 = vmatpush1.bf16.msra.mxu0 0
    %1960 = vmatprep.subr.bf16.mxu0 0
    %1961 = vmatpush1.bf16.msra.mxu0 0
    %1962 = vmatprep.subr.bf16.mxu0 0
    %1963 = vmatpush1.bf16.msra.mxu0 0
    %1964 = vmatprep.subr.bf16.mxu0 0
    %1965 = vmatpush1.bf16.msra.mxu0 0
    %1966 = vmatprep.subr.bf16.mxu0 0
    %1967 = vmatpush1.bf16.msra.mxu0 0
    %1968 = vmatprep.subr.bf16.mxu0 0
    %1969 = vmatpush1.bf16.msra.mxu0 0
    %1970 = vmatprep.subr.bf16.mxu0 0
    %1971 = vmatpush1.bf16.msra.mxu0 0
    %1972 = vmatprep.subr.bf16.mxu0 0
    %1973 = vmatpush1.bf16.msra.mxu0 0
    %1974 = vmatprep.subr.bf16.mxu0 0
    %1975 = vmatpush1.bf16.msra.mxu0 0
    %1976 = vmatprep.subr.bf16.mxu0 0
    %1977 = vmatpush1.bf16.msra.mxu0 0
    %1978 = vmatprep.mubr.bf16.mxu0 0
    %1979 = vmatmul.mubr.bf16.gmra.mrb[0].mxu0 %v1941
    %v1980 = vpop.f32.mrb[0].mxu0
    %v1981 = vadd.f32 0.0, %v1980
    %v1982 = vpop.f32.mrb[0].mxu0
    %v1983 = vpop.f32.mrb[0].mxu0
    %v1984 = vpop.f32.mrb[0].mxu0
    %1985 = vdwg.mxu0
    %v1986 = vpack.c.bf16 %v1981, %v1981
    %s1987 = scalar_lea.vmem %s10, 16
    %v1988 = vld [vmem:[%s1987] sm:$0xf]
    %v1989 = vld [vmem:[%s1987 + $0x4] sm:$0xf]
    %s1990 = scalar_lea.vmem %s4, 48
    %v1991 = vld [vmem:[%s1990] sm:$0xf]
    %v1992 = vld [vmem:[%s1990 + $0x4] sm:$0xf]
    %v1993 = vld [vmem:[%s1990 + $0x8] sm:$0xf]
    %v1994 = vld [vmem:[%s1990 + $0xc] sm:$0xf]
    %s1995 = scalar_lea.vmem %s7, 3
    %v1996 = vld [vmem:[%s1995] sm:$0x1]
    %v1998 = vlaneseq
    %v1999 = vshrl.u32 %v1998, 7
    %v2000 = vsub.s32 0, %v1999
    %v2001 = vrot.slane %v1996, %v2000
    %v2007 = vunpack.c.l.b16 %v1991
    %v2008 = vunpack.c.l.b16 %v1992
    %v2009 = vunpack.c.l.b16 %v1993
    %v2010 = vunpack.c.l.b16 %v1994
    %v2011 = vpack.c.b16 %v2008, %v2007
    %v2012 = vpack.c.b16 %v2010, %v2009
    %2015 = vmatprep.subr.bf16.mxu0 0
    %2016 = vmatpush1.bf16.msra.mxu0 %v2011
    %2017 = vmatprep.subr.bf16.mxu0 0
    %2018 = vmatpush1.bf16.msra.mxu0 %v2012
    %2019 = vmatprep.subr.bf16.mxu0 0
    %2020 = vmatpush1.bf16.msra.mxu0 0
    %2021 = vmatprep.subr.bf16.mxu0 0
    %2022 = vmatpush1.bf16.msra.mxu0 0
    %2023 = vmatprep.subr.bf16.mxu0 0
    %2024 = vmatpush1.bf16.msra.mxu0 0
    %2025 = vmatprep.subr.bf16.mxu0 0
    %2026 = vmatpush1.bf16.msra.mxu0 0
    %2027 = vmatprep.subr.bf16.mxu0 0
    %2028 = vmatpush1.bf16.msra.mxu0 0
    %2029 = vmatprep.subr.bf16.mxu0 0
    %2030 = vmatpush1.bf16.msra.mxu0 0
    %2031 = vmatprep.subr.bf16.mxu0 0
    %2032 = vmatpush1.bf16.msra.mxu0 0
    %2033 = vmatprep.subr.bf16.mxu0 0
    %2034 = vmatpush1.bf16.msra.mxu0 0
    %2035 = vmatprep.subr.bf16.mxu0 0
    %2036 = vmatpush1.bf16.msra.mxu0 0
    %2037 = vmatprep.subr.bf16.mxu0 0
    %2038 = vmatpush1.bf16.msra.mxu0 0
    %2039 = vmatprep.subr.bf16.mxu0 0
    %2040 = vmatpush1.bf16.msra.mxu0 0
    %2041 = vmatprep.subr.bf16.mxu0 0
    %2042 = vmatpush1.bf16.msra.mxu0 0
    %2043 = vmatprep.subr.bf16.mxu0 0
    %2044 = vmatpush1.bf16.msra.mxu0 0
    %2045 = vmatprep.subr.bf16.mxu0 0
    %2046 = vmatpush1.bf16.msra.mxu0 0
    %2047 = vmatprep.mubr.bf16.mxu0 0
    %2048 = vmatmul.mubr.bf16.gmra.mrb[0].mxu0 %v1705
    %v2049 = vpop.f32.mrb[0].mxu0
    %v2050 = vadd.f32 %v2001, %v2049
    %v2051 = vpop.f32.mrb[0].mxu0
    %v2052 = vpop.f32.mrb[0].mxu0
    %v2053 = vpop.f32.mrb[0].mxu0
    %2054 = vdwg.mxu0
    %s2055 = scalar_lea.vmem %s5, 48
    %v2056 = vld [vmem:[%s2055] sm:$0xf]
    %v2057 = vld [vmem:[%s2055 + $0x4] sm:$0xf]
    %v2058 = vld [vmem:[%s2055 + $0x8] sm:$0xf]
    %v2059 = vld [vmem:[%s2055 + $0xc] sm:$0xf]
    %s2060 = scalar_lea.vmem %s8, 3
    %v2061 = vld [vmem:[%s2060] sm:$0x1]
    %v2063 = vlaneseq
    %v2064 = vshrl.u32 %v2063, 7
    %v2065 = vsub.s32 0, %v2064
    %v2066 = vrot.slane %v2061, %v2065
    %v2072 = vunpack.c.l.b16 %v2056
    %v2073 = vunpack.c.l.b16 %v2057
    %v2074 = vunpack.c.l.b16 %v2058
    %v2075 = vunpack.c.l.b16 %v2059
    %v2076 = vpack.c.b16 %v2073, %v2072
    %v2077 = vpack.c.b16 %v2075, %v2074
    %2080 = vmatprep.subr.bf16.mxu0 0
    %2081 = vmatpush1.bf16.msra.mxu0 %v2076
    %2082 = vmatprep.subr.bf16.mxu0 0
    %2083 = vmatpush1.bf16.msra.mxu0 %v2077
    %2084 = vmatprep.subr.bf16.mxu0 0
    %2085 = vmatpush1.bf16.msra.mxu0 0
    %2086 = vmatprep.subr.bf16.mxu0 0
    %2087 = vmatpush1.bf16.msra.mxu0 0
    %2088 = vmatprep.subr.bf16.mxu0 0
    %2089 = vmatpush1.bf16.msra.mxu0 0
    %2090 = vmatprep.subr.bf16.mxu0 0
    %2091 = vmatpush1.bf16.msra.mxu0 0
    %2092 = vmatprep.subr.bf16.mxu0 0
    %2093 = vmatpush1.bf16.msra.mxu0 0
    %2094 = vmatprep.subr.bf16.mxu0 0
    %2095 = vmatpush1.bf16.msra.mxu0 0
    %2096 = vmatprep.subr.bf16.mxu0 0
    %2097 = vmatpush1.bf16.msra.mxu0 0
    %2098 = vmatprep.subr.bf16.mxu0 0
    %2099 = vmatpush1.bf16.msra.mxu0 0
    %2100 = vmatprep.subr.bf16.mxu0 0
    %2101 = vmatpush1.bf16.msra.mxu0 0
    %2102 = vmatprep.subr.bf16.mxu0 0
    %2103 = vmatpush1.bf16.msra.mxu0 0
    %2104 = vmatprep.subr.bf16.mxu0 0
    %2105 = vmatpush1.bf16.msra.mxu0 0
    %2106 = vmatprep.subr.bf16.mxu0 0
    %2107 = vmatpush1.bf16.msra.mxu0 0
    %2108 = vmatprep.subr.bf16.mxu0 0
    %2109 = vmatpush1.bf16.msra.mxu0 0
    %2110 = vmatprep.subr.bf16.mxu0 0
    %2111 = vmatpush1.bf16.msra.mxu0 0
    %2112 = vmatprep.mubr.bf16.mxu0 0
    %2113 = vmatmul.mubr.bf16.gmra.mrb[0].mxu0 %v1705
    %v2114 = vpop.f32.mrb[0].mxu0
    %v2115 = vadd.f32 %v2066, %v2114
    %v2116 = vpop.f32.mrb[0].mxu0
    %v2117 = vpop.f32.mrb[0].mxu0
    %v2118 = vpop.f32.mrb[0].mxu0
    %2119 = vdwg.mxu0
    %s2120 = scalar_lea.vmem %s6, 48
    %v2121 = vld [vmem:[%s2120] sm:$0xf]
    %v2122 = vld [vmem:[%s2120 + $0x4] sm:$0xf]
    %v2123 = vld [vmem:[%s2120 + $0x8] sm:$0xf]
    %v2124 = vld [vmem:[%s2120 + $0xc] sm:$0xf]
    %s2125 = scalar_lea.vmem %s9, 3
    %v2126 = vld [vmem:[%s2125] sm:$0x1]
    %v2128 = vlaneseq
    %v2129 = vshrl.u32 %v2128, 7
    %v2130 = vsub.s32 0, %v2129
    %v2131 = vrot.slane %v2126, %v2130
    %v2137 = vunpack.c.l.b16 %v2121
    %v2138 = vunpack.c.l.b16 %v2122
    %v2139 = vunpack.c.l.b16 %v2123
    %v2140 = vunpack.c.l.b16 %v2124
    %v2141 = vpack.c.b16 %v2138, %v2137
    %v2142 = vpack.c.b16 %v2140, %v2139
    %2145 = vmatprep.subr.bf16.mxu0 0
    %2146 = vmatpush1.bf16.msra.mxu0 %v2141
    %2147 = vmatprep.subr.bf16.mxu0 0
    %2148 = vmatpush1.bf16.msra.mxu0 %v2142
    %2149 = vmatprep.subr.bf16.mxu0 0
    %2150 = vmatpush1.bf16.msra.mxu0 0
    %2151 = vmatprep.subr.bf16.mxu0 0
    %2152 = vmatpush1.bf16.msra.mxu0 0
    %2153 = vmatprep.subr.bf16.mxu0 0
    %2154 = vmatpush1.bf16.msra.mxu0 0
    %2155 = vmatprep.subr.bf16.mxu0 0
    %2156 = vmatpush1.bf16.msra.mxu0 0
    %2157 = vmatprep.subr.bf16.mxu0 0
    %2158 = vmatpush1.bf16.msra.mxu0 0
    %2159 = vmatprep.subr.bf16.mxu0 0
    %2160 = vmatpush1.bf16.msra.mxu0 0
    %2161 = vmatprep.subr.bf16.mxu0 0
    %2162 = vmatpush1.bf16.msra.mxu0 0
    %2163 = vmatprep.subr.bf16.mxu0 0
    %2164 = vmatpush1.bf16.msra.mxu0 0
    %2165 = vmatprep.subr.bf16.mxu0 0
    %2166 = vmatpush1.bf16.msra.mxu0 0
    %2167 = vmatprep.subr.bf16.mxu0 0
    %2168 = vmatpush1.bf16.msra.mxu0 0
    %2169 = vmatprep.subr.bf16.mxu0 0
    %2170 = vmatpush1.bf16.msra.mxu0 0
    %2171 = vmatprep.subr.bf16.mxu0 0
    %2172 = vmatpush1.bf16.msra.mxu0 0
    %2173 = vmatprep.subr.bf16.mxu0 0
    %2174 = vmatpush1.bf16.msra.mxu0 0
    %2175 = vmatprep.subr.bf16.mxu0 0
    %2176 = vmatpush1.bf16.msra.mxu0 0
    %2177 = vmatprep.mubr.bf16.mxu0 0
    %2178 = vmatmul.mubr.bf16.gmra.mrb[0].mxu0 %v1705
    %v2179 = vpop.f32.mrb[0].mxu0
    %v2180 = vadd.f32 %v2131, %v2179
    %v2181 = vpop.f32.mrb[0].mxu0
    %v2182 = vpop.f32.mrb[0].mxu0
    %v2183 = vpop.f32.mrb[0].mxu0
    %2184 = vdwg.mxu0
    %v2185 = vpack.c.bf16 %v2180, %v2180
    %v2186 = vpack.c.bf16 %v2050, %v2050
    %v2187 = vpack.c.bf16 %v2115, %v2115
    %v2189 = vsel %vm323, %v2186, 0
    %v2192 = vsel %vm323, %v2187, 0
    %2194 = vmatprep.subr.bf16.mxu0 0
    %2195 = vmatpush1.bf16.xpose.msra.mxu0 %v2192
    %2196 = vmatprep.subr.bf16.mxu0 0
    %2197 = vmatpush1.bf16.xpose.msra.mxu0 0
    %2198 = vmatprep.subr.bf16.mxu0 0
    %2199 = vmatpush1.bf16.xpose.msra.mxu0 0
    %2200 = vmatprep.subr.bf16.mxu0 0
    %2201 = vmatpush1.bf16.xpose.msra.mxu0 0
    %2202 = vmatprep.subr.bf16.mxu0 0
    %2203 = vmatpush1.bf16.xpose.msra.mxu0 0
    %2204 = vmatprep.subr.bf16.mxu0 0
    %2205 = vmatpush1.bf16.xpose.msra.mxu0 0
    %2206 = vmatprep.subr.bf16.mxu0 0
    %2207 = vmatpush1.bf16.xpose.msra.mxu0 0
    %2208 = vmatprep.subr.bf16.mxu0 0
    %2209 = vmatpush1.bf16.xpose.msra.mxu0 0
    %2210 = vmatprep.subr.bf16.mxu0 0
    %2211 = vmatpush1.bf16.xpose.msra.mxu0 0
    %2212 = vmatprep.subr.bf16.mxu0 0
    %2213 = vmatpush1.bf16.xpose.msra.mxu0 0
    %2214 = vmatprep.subr.bf16.mxu0 0
    %2215 = vmatpush1.bf16.xpose.msra.mxu0 0
    %2216 = vmatprep.subr.bf16.mxu0 0
    %2217 = vmatpush1.bf16.xpose.msra.mxu0 0
    %2218 = vmatprep.subr.bf16.mxu0 0
    %2219 = vmatpush1.bf16.xpose.msra.mxu0 0
    %2220 = vmatprep.subr.bf16.mxu0 0
    %2221 = vmatpush1.bf16.xpose.msra.mxu0 0
    %2222 = vmatprep.subr.bf16.mxu0 0
    %2223 = vmatpush1.bf16.xpose.msra.mxu0 0
    %2224 = vmatprep.subr.bf16.mxu0 0
    %2225 = vmatpush1.bf16.xpose.msra.mxu0 0
    %2226 = vmatprep.mubr.bf16.mxu0 0
    %2227 = vmatmul.mubr.bf16.gmra.mrb[0].mxu0 %v2189
    %v2228 = vpop.f32.mrb[0].mxu0
    %v2229 = vadd.f32 0.0, %v2228
    %v2230 = vpop.f32.mrb[0].mxu0
    %v2231 = vpop.f32.mrb[0].mxu0
    %v2232 = vpop.f32.mrb[0].mxu0
    %2233 = vdwg.mxu0
    %v2234 = vmul.f32 %v2229, 0.25
    %v2235 = vadd.f32 %v2234, %v375
    %v2236 = vsel %vm378, %v2235, -inf
    %2237 = vmax.xlane.f32.xlu0 %v2236
    %v2238 = vpop.xlane.xlu0 %2237
    %v2239 = vsub.f32 %v2235, %v2238
    %v2240 = vmul.f32 %v2239, 1.442695
    %v2241 = vpow.pop %v2240
    %v2242 = vsel %vm378, %v2241, 0.0
    %2243 = vadd.xlane.f32.xlu0 %v2242
    %v2244 = vpop.xlane.xlu0 %2243
    %v2245 = vrcp.pop %v2244
    %v2246 = vmul.f32 %v2241, %v2245
    %v2247 = vpack.c.bf16 %v2246, %v2246
    %v2249 = vsel %vm378, %v2247, 0
    %v2252 = vsel %vm394, %v2185, 0
    %2254 = vmatprep.subr.bf16.mxu0 0
    %2255 = vmatpush1.bf16.msra.mxu0 %v2252
    %2256 = vmatprep.subr.bf16.mxu0 0
    %2257 = vmatpush1.bf16.msra.mxu0 0
    %2258 = vmatprep.subr.bf16.mxu0 0
    %2259 = vmatpush1.bf16.msra.mxu0 0
    %2260 = vmatprep.subr.bf16.mxu0 0
    %2261 = vmatpush1.bf16.msra.mxu0 0
    %2262 = vmatprep.subr.bf16.mxu0 0
    %2263 = vmatpush1.bf16.msra.mxu0 0
    %2264 = vmatprep.subr.bf16.mxu0 0
    %2265 = vmatpush1.bf16.msra.mxu0 0
    %2266 = vmatprep.subr.bf16.mxu0 0
    %2267 = vmatpush1.bf16.msra.mxu0 0
    %2268 = vmatprep.subr.bf16.mxu0 0
    %2269 = vmatpush1.bf16.msra.mxu0 0
    %2270 = vmatprep.subr.bf16.mxu0 0
    %2271 = vmatpush1.bf16.msra.mxu0 0
    %2272 = vmatprep.subr.bf16.mxu0 0
    %2273 = vmatpush1.bf16.msra.mxu0 0
    %2274 = vmatprep.subr.bf16.mxu0 0
    %2275 = vmatpush1.bf16.msra.mxu0 0
    %2276 = vmatprep.subr.bf16.mxu0 0
    %2277 = vmatpush1.bf16.msra.mxu0 0
    %2278 = vmatprep.subr.bf16.mxu0 0
    %2279 = vmatpush1.bf16.msra.mxu0 0
    %2280 = vmatprep.subr.bf16.mxu0 0
    %2281 = vmatpush1.bf16.msra.mxu0 0
    %2282 = vmatprep.subr.bf16.mxu0 0
    %2283 = vmatpush1.bf16.msra.mxu0 0
    %2284 = vmatprep.subr.bf16.mxu0 0
    %2285 = vmatpush1.bf16.msra.mxu0 0
    %2286 = vmatprep.mubr.bf16.mxu0 0
    %2287 = vmatmul.mubr.bf16.gmra.mrb[0].mxu0 %v2249
    %v2288 = vpop.f32.mrb[0].mxu0
    %v2289 = vadd.f32 0.0, %v2288
    %v2290 = vpop.f32.mrb[0].mxu0
    %v2291 = vpop.f32.mrb[0].mxu0
    %v2292 = vpop.f32.mrb[0].mxu0
    %2293 = vdwg.mxu0
    %v2294 = vpack.c.bf16 %v2289, %v2289
    %s2295 = scalar_lea.vmem %s10, 24
    %v2296 = vld [vmem:[%s2295] sm:$0xf]
    %v2297 = vld [vmem:[%s2295 + $0x4] sm:$0xf]
    %v2300 = vunpack.c.l.b16 %v2296
    %v2301 = vunpack.c.l.b16 %v2297
    %v2302 = vpack.c.b16 %v2301, %v2300
    %v2305 = vsel %vm323, %v2294, 0
    %2307 = vmatprep.subr.bf16.mxu0 0
    %2308 = vmatpush1.bf16.msra.mxu0 %v2302
    %2309 = vmatprep.subr.bf16.mxu0 0
    %2310 = vmatpush1.bf16.msra.mxu0 0
    %2311 = vmatprep.subr.bf16.mxu0 0
    %2312 = vmatpush1.bf16.msra.mxu0 0
    %2313 = vmatprep.subr.bf16.mxu0 0
    %2314 = vmatpush1.bf16.msra.mxu0 0
    %2315 = vmatprep.subr.bf16.mxu0 0
    %2316 = vmatpush1.bf16.msra.mxu0 0
    %2317 = vmatprep.subr.bf16.mxu0 0
    %2318 = vmatpush1.bf16.msra.mxu0 0
    %2319 = vmatprep.subr.bf16.mxu0 0
    %2320 = vmatpush1.bf16.msra.mxu0 0
    %2321 = vmatprep.subr.bf16.mxu0 0
    %2322 = vmatpush1.bf16.msra.mxu0 0
    %2323 = vmatprep.subr.bf16.mxu0 0
    %2324 = vmatpush1.bf16.msra.mxu0 0
    %2325 = vmatprep.subr.bf16.mxu0 0
    %2326 = vmatpush1.bf16.msra.mxu0 0
    %2327 = vmatprep.subr.bf16.mxu0 0
    %2328 = vmatpush1.bf16.msra.mxu0 0
    %2329 = vmatprep.subr.bf16.mxu0 0
    %2330 = vmatpush1.bf16.msra.mxu0 0
    %2331 = vmatprep.subr.bf16.mxu0 0
    %2332 = vmatpush1.bf16.msra.mxu0 0
    %2333 = vmatprep.subr.bf16.mxu0 0
    %2334 = vmatpush1.bf16.msra.mxu0 0
    %2335 = vmatprep.subr.bf16.mxu0 0
    %2336 = vmatpush1.bf16.msra.mxu0 0
    %2337 = vmatprep.subr.bf16.mxu0 0
    %2338 = vmatpush1.bf16.msra.mxu0 0
    %2339 = vmatprep.mubr.bf16.mxu0 0
    %2340 = vmatmul.mubr.bf16.gmra.mrb[0].mxu0 %v2305
    %v2341 = vpop.f32.mrb[0].mxu0
    %v2342 = vadd.f32 0.0, %v2341
    %v2343 = vpop.f32.mrb[0].mxu0
    %v2344 = vpop.f32.mrb[0].mxu0
    %v2345 = vpop.f32.mrb[0].mxu0
    %2346 = vdwg.mxu0
    %v2349 = vunpack.c.l.b16 %v1988
    %v2350 = vunpack.c.l.b16 %v1989
    %v2351 = vpack.c.b16 %v2350, %v2349
    %v2354 = vsel %vm323, %v1986, 0
    %2356 = vmatprep.subr.bf16.mxu0 0
    %2357 = vmatpush1.bf16.msra.mxu0 %v2351
    %2358 = vmatprep.subr.bf16.mxu0 0
    %2359 = vmatpush1.bf16.msra.mxu0 0
    %2360 = vmatprep.subr.bf16.mxu0 0
    %2361 = vmatpush1.bf16.msra.mxu0 0
    %2362 = vmatprep.subr.bf16.mxu0 0
    %2363 = vmatpush1.bf16.msra.mxu0 0
    %2364 = vmatprep.subr.bf16.mxu0 0
    %2365 = vmatpush1.bf16.msra.mxu0 0
    %2366 = vmatprep.subr.bf16.mxu0 0
    %2367 = vmatpush1.bf16.msra.mxu0 0
    %2368 = vmatprep.subr.bf16.mxu0 0
    %2369 = vmatpush1.bf16.msra.mxu0 0
    %2370 = vmatprep.subr.bf16.mxu0 0
    %2371 = vmatpush1.bf16.msra.mxu0 0
    %2372 = vmatprep.subr.bf16.mxu0 0
    %2373 = vmatpush1.bf16.msra.mxu0 0
    %2374 = vmatprep.subr.bf16.mxu0 0
    %2375 = vmatpush1.bf16.msra.mxu0 0
    %2376 = vmatprep.subr.bf16.mxu0 0
    %2377 = vmatpush1.bf16.msra.mxu0 0
    %2378 = vmatprep.subr.bf16.mxu0 0
    %2379 = vmatpush1.bf16.msra.mxu0 0
    %2380 = vmatprep.subr.bf16.mxu0 0
    %2381 = vmatpush1.bf16.msra.mxu0 0
    %2382 = vmatprep.subr.bf16.mxu0 0
    %2383 = vmatpush1.bf16.msra.mxu0 0
    %2384 = vmatprep.subr.bf16.mxu0 0
    %2385 = vmatpush1.bf16.msra.mxu0 0
    %2386 = vmatprep.subr.bf16.mxu0 0
    %2387 = vmatpush1.bf16.msra.mxu0 0
    %2388 = vmatprep.mubr.bf16.mxu0 0
    %2389 = vmatmul.mubr.bf16.gmra.mrb[0].mxu0 %v2354
    %v2390 = vpop.f32.mrb[0].mxu0
    %v2391 = vadd.f32 %v2342, %v2390
    %v2392 = vpop.f32.mrb[0].mxu0
    %v2393 = vpop.f32.mrb[0].mxu0
    %v2394 = vpop.f32.mrb[0].mxu0
    %2395 = vdwg.mxu0
    %v2397 = vrot.slane %v1678, 4
    %v2399 = vsel %vm77, %v2397, 0
    %2401 = vmatprep.subr.bf16.mxu0 0
    %2402 = vmatpush1.bf16.msra.mxu0 %v1700
    %2403 = vmatprep.subr.bf16.mxu0 0
    %2404 = vmatpush1.bf16.msra.mxu0 %v1701
    %2405 = vmatprep.subr.bf16.mxu0 0
    %2406 = vmatpush1.bf16.msra.mxu0 0
    %2407 = vmatprep.subr.bf16.mxu0 0
    %2408 = vmatpush1.bf16.msra.mxu0 0
    %2409 = vmatprep.subr.bf16.mxu0 0
    %2410 = vmatpush1.bf16.msra.mxu0 0
    %2411 = vmatprep.subr.bf16.mxu0 0
    %2412 = vmatpush1.bf16.msra.mxu0 0
    %2413 = vmatprep.subr.bf16.mxu0 0
    %2414 = vmatpush1.bf16.msra.mxu0 0
    %2415 = vmatprep.subr.bf16.mxu0 0
    %2416 = vmatpush1.bf16.msra.mxu0 0
    %2417 = vmatprep.subr.bf16.mxu0 0
    %2418 = vmatpush1.bf16.msra.mxu0 0
    %2419 = vmatprep.subr.bf16.mxu0 0
    %2420 = vmatpush1.bf16.msra.mxu0 0
    %2421 = vmatprep.subr.bf16.mxu0 0
    %2422 = vmatpush1.bf16.msra.mxu0 0
    %2423 = vmatprep.subr.bf16.mxu0 0
    %2424 = vmatpush1.bf16.msra.mxu0 0
    %2425 = vmatprep.subr.bf16.mxu0 0
    %2426 = vmatpush1.bf16.msra.mxu0 0
    %2427 = vmatprep.subr.bf16.mxu0 0
    %2428 = vmatpush1.bf16.msra.mxu0 0
    %2429 = vmatprep.subr.bf16.mxu0 0
    %2430 = vmatpush1.bf16.msra.mxu0 0
    %2431 = vmatprep.subr.bf16.mxu0 0
    %2432 = vmatpush1.bf16.msra.mxu0 0
    %2433 = vmatprep.mubr.bf16.mxu0 0
    %2434 = vmatmul.mubr.bf16.gmra.mrb[0].mxu0 %v2399
    %v2435 = vpop.f32.mrb[0].mxu0
    %v2436 = vadd.f32 %v1690, %v2435
    %v2437 = vpop.f32.mrb[0].mxu0
    %v2438 = vpop.f32.mrb[0].mxu0
    %v2439 = vpop.f32.mrb[0].mxu0
    %2440 = vdwg.mxu0
    %2441 = vmatprep.subr.bf16.mxu0 0
    %2442 = vmatpush1.bf16.msra.mxu0 %v1768
    %2443 = vmatprep.subr.bf16.mxu0 0
    %2444 = vmatpush1.bf16.msra.mxu0 %v1769
    %2445 = vmatprep.subr.bf16.mxu0 0
    %2446 = vmatpush1.bf16.msra.mxu0 0
    %2447 = vmatprep.subr.bf16.mxu0 0
    %2448 = vmatpush1.bf16.msra.mxu0 0
    %2449 = vmatprep.subr.bf16.mxu0 0
    %2450 = vmatpush1.bf16.msra.mxu0 0
    %2451 = vmatprep.subr.bf16.mxu0 0
    %2452 = vmatpush1.bf16.msra.mxu0 0
    %2453 = vmatprep.subr.bf16.mxu0 0
    %2454 = vmatpush1.bf16.msra.mxu0 0
    %2455 = vmatprep.subr.bf16.mxu0 0
    %2456 = vmatpush1.bf16.msra.mxu0 0
    %2457 = vmatprep.subr.bf16.mxu0 0
    %2458 = vmatpush1.bf16.msra.mxu0 0
    %2459 = vmatprep.subr.bf16.mxu0 0
    %2460 = vmatpush1.bf16.msra.mxu0 0
    %2461 = vmatprep.subr.bf16.mxu0 0
    %2462 = vmatpush1.bf16.msra.mxu0 0
    %2463 = vmatprep.subr.bf16.mxu0 0
    %2464 = vmatpush1.bf16.msra.mxu0 0
    %2465 = vmatprep.subr.bf16.mxu0 0
    %2466 = vmatpush1.bf16.msra.mxu0 0
    %2467 = vmatprep.subr.bf16.mxu0 0
    %2468 = vmatpush1.bf16.msra.mxu0 0
    %2469 = vmatprep.subr.bf16.mxu0 0
    %2470 = vmatpush1.bf16.msra.mxu0 0
    %2471 = vmatprep.subr.bf16.mxu0 0
    %2472 = vmatpush1.bf16.msra.mxu0 0
    %2473 = vmatprep.mubr.bf16.mxu0 0
    %2474 = vmatmul.mubr.bf16.gmra.mrb[0].mxu0 %v2399
    %v2475 = vpop.f32.mrb[0].mxu0
    %v2476 = vadd.f32 %v1758, %v2475
    %v2477 = vpop.f32.mrb[0].mxu0
    %v2478 = vpop.f32.mrb[0].mxu0
    %v2479 = vpop.f32.mrb[0].mxu0
    %2480 = vdwg.mxu0
    %2481 = vmatprep.subr.bf16.mxu0 0
    %2482 = vmatpush1.bf16.msra.mxu0 %v1833
    %2483 = vmatprep.subr.bf16.mxu0 0
    %2484 = vmatpush1.bf16.msra.mxu0 %v1834
    %2485 = vmatprep.subr.bf16.mxu0 0
    %2486 = vmatpush1.bf16.msra.mxu0 0
    %2487 = vmatprep.subr.bf16.mxu0 0
    %2488 = vmatpush1.bf16.msra.mxu0 0
    %2489 = vmatprep.subr.bf16.mxu0 0
    %2490 = vmatpush1.bf16.msra.mxu0 0
    %2491 = vmatprep.subr.bf16.mxu0 0
    %2492 = vmatpush1.bf16.msra.mxu0 0
    %2493 = vmatprep.subr.bf16.mxu0 0
    %2494 = vmatpush1.bf16.msra.mxu0 0
    %2495 = vmatprep.subr.bf16.mxu0 0
    %2496 = vmatpush1.bf16.msra.mxu0 0
    %2497 = vmatprep.subr.bf16.mxu0 0
    %2498 = vmatpush1.bf16.msra.mxu0 0
    %2499 = vmatprep.subr.bf16.mxu0 0
    %2500 = vmatpush1.bf16.msra.mxu0 0
    %2501 = vmatprep.subr.bf16.mxu0 0
    %2502 = vmatpush1.bf16.msra.mxu0 0
    %2503 = vmatprep.subr.bf16.mxu0 0
    %2504 = vmatpush1.bf16.msra.mxu0 0
    %2505 = vmatprep.subr.bf16.mxu0 0
    %2506 = vmatpush1.bf16.msra.mxu0 0
    %2507 = vmatprep.subr.bf16.mxu0 0
    %2508 = vmatpush1.bf16.msra.mxu0 0
    %2509 = vmatprep.subr.bf16.mxu0 0
    %2510 = vmatpush1.bf16.msra.mxu0 0
    %2511 = vmatprep.subr.bf16.mxu0 0
    %2512 = vmatpush1.bf16.msra.mxu0 0
    %2513 = vmatprep.mubr.bf16.mxu0 0
    %2514 = vmatmul.mubr.bf16.gmra.mrb[0].mxu0 %v2399
    %v2515 = vpop.f32.mrb[0].mxu0
    %v2516 = vadd.f32 %v1823, %v2515
    %v2517 = vpop.f32.mrb[0].mxu0
    %v2518 = vpop.f32.mrb[0].mxu0
    %v2519 = vpop.f32.mrb[0].mxu0
    %2520 = vdwg.mxu0
    %v2521 = vpack.c.bf16 %v2516, %v2516
    %v2522 = vpack.c.bf16 %v2436, %v2436
    %v2523 = vpack.c.bf16 %v2476, %v2476
    %v2525 = vsel %vm323, %v2522, 0
    %v2528 = vsel %vm323, %v2523, 0
    %2530 = vmatprep.subr.bf16.mxu0 0
    %2531 = vmatpush1.bf16.xpose.msra.mxu0 %v2528
    %2532 = vmatprep.subr.bf16.mxu0 0
    %2533 = vmatpush1.bf16.xpose.msra.mxu0 0
    %2534 = vmatprep.subr.bf16.mxu0 0
    %2535 = vmatpush1.bf16.xpose.msra.mxu0 0
    %2536 = vmatprep.subr.bf16.mxu0 0
    %2537 = vmatpush1.bf16.xpose.msra.mxu0 0
    %2538 = vmatprep.subr.bf16.mxu0 0
    %2539 = vmatpush1.bf16.xpose.msra.mxu0 0
    %2540 = vmatprep.subr.bf16.mxu0 0
    %2541 = vmatpush1.bf16.xpose.msra.mxu0 0
    %2542 = vmatprep.subr.bf16.mxu0 0
    %2543 = vmatpush1.bf16.xpose.msra.mxu0 0
    %2544 = vmatprep.subr.bf16.mxu0 0
    %2545 = vmatpush1.bf16.xpose.msra.mxu0 0
    %2546 = vmatprep.subr.bf16.mxu0 0
    %2547 = vmatpush1.bf16.xpose.msra.mxu0 0
    %2548 = vmatprep.subr.bf16.mxu0 0
    %2549 = vmatpush1.bf16.xpose.msra.mxu0 0
    %2550 = vmatprep.subr.bf16.mxu0 0
    %2551 = vmatpush1.bf16.xpose.msra.mxu0 0
    %2552 = vmatprep.subr.bf16.mxu0 0
    %2553 = vmatpush1.bf16.xpose.msra.mxu0 0
    %2554 = vmatprep.subr.bf16.mxu0 0
    %2555 = vmatpush1.bf16.xpose.msra.mxu0 0
    %2556 = vmatprep.subr.bf16.mxu0 0
    %2557 = vmatpush1.bf16.xpose.msra.mxu0 0
    %2558 = vmatprep.subr.bf16.mxu0 0
    %2559 = vmatpush1.bf16.xpose.msra.mxu0 0
    %2560 = vmatprep.subr.bf16.mxu0 0
    %2561 = vmatpush1.bf16.xpose.msra.mxu0 0
    %2562 = vmatprep.mubr.bf16.mxu0 0
    %2563 = vmatmul.mubr.bf16.gmra.mrb[0].mxu0 %v2525
    %v2564 = vpop.f32.mrb[0].mxu0
    %v2565 = vadd.f32 0.0, %v2564
    %v2566 = vpop.f32.mrb[0].mxu0
    %v2567 = vpop.f32.mrb[0].mxu0
    %v2568 = vpop.f32.mrb[0].mxu0
    %2569 = vdwg.mxu0
    %v2570 = vmul.f32 %v2565, 0.25
    %v2571 = vadd.f32 %v2570, %v1028
    %v2572 = vsel %vm378, %v2571, -inf
    %2573 = vmax.xlane.f32.xlu0 %v2572
    %v2574 = vpop.xlane.xlu0 %2573
    %v2575 = vsub.f32 %v2571, %v2574
    %v2576 = vmul.f32 %v2575, 1.442695
    %v2577 = vpow.pop %v2576
    %v2578 = vsel %vm378, %v2577, 0.0
    %2579 = vadd.xlane.f32.xlu0 %v2578
    %v2580 = vpop.xlane.xlu0 %2579
    %v2581 = vrcp.pop %v2580
    %v2582 = vmul.f32 %v2577, %v2581
    %v2583 = vpack.c.bf16 %v2582, %v2582
    %v2585 = vsel %vm378, %v2583, 0
    %v2588 = vsel %vm394, %v2521, 0
    %2590 = vmatprep.subr.bf16.mxu0 0
    %2591 = vmatpush1.bf16.msra.mxu0 %v2588
    %2592 = vmatprep.subr.bf16.mxu0 0
    %2593 = vmatpush1.bf16.msra.mxu0 0
    %2594 = vmatprep.subr.bf16.mxu0 0
    %2595 = vmatpush1.bf16.msra.mxu0 0
    %2596 = vmatprep.subr.bf16.mxu0 0
    %2597 = vmatpush1.bf16.msra.mxu0 0
    %2598 = vmatprep.subr.bf16.mxu0 0
    %2599 = vmatpush1.bf16.msra.mxu0 0
    %2600 = vmatprep.subr.bf16.mxu0 0
    %2601 = vmatpush1.bf16.msra.mxu0 0
    %2602 = vmatprep.subr.bf16.mxu0 0
    %2603 = vmatpush1.bf16.msra.mxu0 0
    %2604 = vmatprep.subr.bf16.mxu0 0
    %2605 = vmatpush1.bf16.msra.mxu0 0
    %2606 = vmatprep.subr.bf16.mxu0 0
    %2607 = vmatpush1.bf16.msra.mxu0 0
    %2608 = vmatprep.subr.bf16.mxu0 0
    %2609 = vmatpush1.bf16.msra.mxu0 0
    %2610 = vmatprep.subr.bf16.mxu0 0
    %2611 = vmatpush1.bf16.msra.mxu0 0
    %2612 = vmatprep.subr.bf16.mxu0 0
    %2613 = vmatpush1.bf16.msra.mxu0 0
    %2614 = vmatprep.subr.bf16.mxu0 0
    %2615 = vmatpush1.bf16.msra.mxu0 0
    %2616 = vmatprep.subr.bf16.mxu0 0
    %2617 = vmatpush1.bf16.msra.mxu0 0
    %2618 = vmatprep.subr.bf16.mxu0 0
    %2619 = vmatpush1.bf16.msra.mxu0 0
    %2620 = vmatprep.subr.bf16.mxu0 0
    %2621 = vmatpush1.bf16.msra.mxu0 0
    %2622 = vmatprep.mubr.bf16.mxu0 0
    %2623 = vmatmul.mubr.bf16.gmra.mrb[0].mxu0 %v2585
    %v2624 = vpop.f32.mrb[0].mxu0
    %v2625 = vadd.f32 0.0, %v2624
    %v2626 = vpop.f32.mrb[0].mxu0
    %v2627 = vpop.f32.mrb[0].mxu0
    %v2628 = vpop.f32.mrb[0].mxu0
    %2629 = vdwg.mxu0
    %v2630 = vpack.c.bf16 %v2625, %v2625
    %2631 = vmatprep.subr.bf16.mxu0 0
    %2632 = vmatpush1.bf16.msra.mxu0 %v2011
    %2633 = vmatprep.subr.bf16.mxu0 0
    %2634 = vmatpush1.bf16.msra.mxu0 %v2012
    %2635 = vmatprep.subr.bf16.mxu0 0
    %2636 = vmatpush1.bf16.msra.mxu0 0
    %2637 = vmatprep.subr.bf16.mxu0 0
    %2638 = vmatpush1.bf16.msra.mxu0 0
    %2639 = vmatprep.subr.bf16.mxu0 0
    %2640 = vmatpush1.bf16.msra.mxu0 0
    %2641 = vmatprep.subr.bf16.mxu0 0
    %2642 = vmatpush1.bf16.msra.mxu0 0
    %2643 = vmatprep.subr.bf16.mxu0 0
    %2644 = vmatpush1.bf16.msra.mxu0 0
    %2645 = vmatprep.subr.bf16.mxu0 0
    %2646 = vmatpush1.bf16.msra.mxu0 0
    %2647 = vmatprep.subr.bf16.mxu0 0
    %2648 = vmatpush1.bf16.msra.mxu0 0
    %2649 = vmatprep.subr.bf16.mxu0 0
    %2650 = vmatpush1.bf16.msra.mxu0 0
    %2651 = vmatprep.subr.bf16.mxu0 0
    %2652 = vmatpush1.bf16.msra.mxu0 0
    %2653 = vmatprep.subr.bf16.mxu0 0
    %2654 = vmatpush1.bf16.msra.mxu0 0
    %2655 = vmatprep.subr.bf16.mxu0 0
    %2656 = vmatpush1.bf16.msra.mxu0 0
    %2657 = vmatprep.subr.bf16.mxu0 0
    %2658 = vmatpush1.bf16.msra.mxu0 0
    %2659 = vmatprep.subr.bf16.mxu0 0
    %2660 = vmatpush1.bf16.msra.mxu0 0
    %2661 = vmatprep.subr.bf16.mxu0 0
    %2662 = vmatpush1.bf16.msra.mxu0 0
    %2663 = vmatprep.mubr.bf16.mxu0 0
    %2664 = vmatmul.mubr.bf16.gmra.mrb[0].mxu0 %v2399
    %v2665 = vpop.f32.mrb[0].mxu0
    %v2666 = vadd.f32 %v2001, %v2665
    %v2667 = vpop.f32.mrb[0].mxu0
    %v2668 = vpop.f32.mrb[0].mxu0
    %v2669 = vpop.f32.mrb[0].mxu0
    %2670 = vdwg.mxu0
    %2671 = vmatprep.subr.bf16.mxu0 0
    %2672 = vmatpush1.bf16.msra.mxu0 %v2076
    %2673 = vmatprep.subr.bf16.mxu0 0
    %2674 = vmatpush1.bf16.msra.mxu0 %v2077
    %2675 = vmatprep.subr.bf16.mxu0 0
    %2676 = vmatpush1.bf16.msra.mxu0 0
    %2677 = vmatprep.subr.bf16.mxu0 0
    %2678 = vmatpush1.bf16.msra.mxu0 0
    %2679 = vmatprep.subr.bf16.mxu0 0
    %2680 = vmatpush1.bf16.msra.mxu0 0
    %2681 = vmatprep.subr.bf16.mxu0 0
    %2682 = vmatpush1.bf16.msra.mxu0 0
    %2683 = vmatprep.subr.bf16.mxu0 0
    %2684 = vmatpush1.bf16.msra.mxu0 0
    %2685 = vmatprep.subr.bf16.mxu0 0
    %2686 = vmatpush1.bf16.msra.mxu0 0
    %2687 = vmatprep.subr.bf16.mxu0 0
    %2688 = vmatpush1.bf16.msra.mxu0 0
    %2689 = vmatprep.subr.bf16.mxu0 0
    %2690 = vmatpush1.bf16.msra.mxu0 0
    %2691 = vmatprep.subr.bf16.mxu0 0
    %2692 = vmatpush1.bf16.msra.mxu0 0
    %2693 = vmatprep.subr.bf16.mxu0 0
    %2694 = vmatpush1.bf16.msra.mxu0 0
    %2695 = vmatprep.subr.bf16.mxu0 0
    %2696 = vmatpush1.bf16.msra.mxu0 0
    %2697 = vmatprep.subr.bf16.mxu0 0
    %2698 = vmatpush1.bf16.msra.mxu0 0
    %2699 = vmatprep.subr.bf16.mxu0 0
    %2700 = vmatpush1.bf16.msra.mxu0 0
    %2701 = vmatprep.subr.bf16.mxu0 0
    %2702 = vmatpush1.bf16.msra.mxu0 0
    %2703 = vmatprep.mubr.bf16.mxu0 0
    %2704 = vmatmul.mubr.bf16.gmra.mrb[0].mxu0 %v2399
    %v2705 = vpop.f32.mrb[0].mxu0
    %v2706 = vadd.f32 %v2066, %v2705
    %v2707 = vpop.f32.mrb[0].mxu0
    %v2708 = vpop.f32.mrb[0].mxu0
    %v2709 = vpop.f32.mrb[0].mxu0
    %2710 = vdwg.mxu0
    %2711 = vmatprep.subr.bf16.mxu0 0
    %2712 = vmatpush1.bf16.msra.mxu0 %v2141
    %2713 = vmatprep.subr.bf16.mxu0 0
    %2714 = vmatpush1.bf16.msra.mxu0 %v2142
    %2715 = vmatprep.subr.bf16.mxu0 0
    %2716 = vmatpush1.bf16.msra.mxu0 0
    %2717 = vmatprep.subr.bf16.mxu0 0
    %2718 = vmatpush1.bf16.msra.mxu0 0
    %2719 = vmatprep.subr.bf16.mxu0 0
    %2720 = vmatpush1.bf16.msra.mxu0 0
    %2721 = vmatprep.subr.bf16.mxu0 0
    %2722 = vmatpush1.bf16.msra.mxu0 0
    %2723 = vmatprep.subr.bf16.mxu0 0
    %2724 = vmatpush1.bf16.msra.mxu0 0
    %2725 = vmatprep.subr.bf16.mxu0 0
    %2726 = vmatpush1.bf16.msra.mxu0 0
    %2727 = vmatprep.subr.bf16.mxu0 0
    %2728 = vmatpush1.bf16.msra.mxu0 0
    %2729 = vmatprep.subr.bf16.mxu0 0
    %2730 = vmatpush1.bf16.msra.mxu0 0
    %2731 = vmatprep.subr.bf16.mxu0 0
    %2732 = vmatpush1.bf16.msra.mxu0 0
    %2733 = vmatprep.subr.bf16.mxu0 0
    %2734 = vmatpush1.bf16.msra.mxu0 0
    %2735 = vmatprep.subr.bf16.mxu0 0
    %2736 = vmatpush1.bf16.msra.mxu0 0
    %2737 = vmatprep.subr.bf16.mxu0 0
    %2738 = vmatpush1.bf16.msra.mxu0 0
    %2739 = vmatprep.subr.bf16.mxu0 0
    %2740 = vmatpush1.bf16.msra.mxu0 0
    %2741 = vmatprep.subr.bf16.mxu0 0
    %2742 = vmatpush1.bf16.msra.mxu0 0
    %2743 = vmatprep.mubr.bf16.mxu0 0
    %2744 = vmatmul.mubr.bf16.gmra.mrb[0].mxu0 %v2399
    %v2745 = vpop.f32.mrb[0].mxu0
    %v2746 = vadd.f32 %v2131, %v2745
    %v2747 = vpop.f32.mrb[0].mxu0
    %v2748 = vpop.f32.mrb[0].mxu0
    %v2749 = vpop.f32.mrb[0].mxu0
    %2750 = vdwg.mxu0
    %v2751 = vpack.c.bf16 %v2746, %v2746
    %v2752 = vpack.c.bf16 %v2666, %v2666
    %v2753 = vpack.c.bf16 %v2706, %v2706
    %v2755 = vsel %vm323, %v2752, 0
    %v2758 = vsel %vm323, %v2753, 0
    %2760 = vmatprep.subr.bf16.mxu0 0
    %2761 = vmatpush1.bf16.xpose.msra.mxu0 %v2758
    %2762 = vmatprep.subr.bf16.mxu0 0
    %2763 = vmatpush1.bf16.xpose.msra.mxu0 0
    %2764 = vmatprep.subr.bf16.mxu0 0
    %2765 = vmatpush1.bf16.xpose.msra.mxu0 0
    %2766 = vmatprep.subr.bf16.mxu0 0
    %2767 = vmatpush1.bf16.xpose.msra.mxu0 0
    %2768 = vmatprep.subr.bf16.mxu0 0
    %2769 = vmatpush1.bf16.xpose.msra.mxu0 0
    %2770 = vmatprep.subr.bf16.mxu0 0
    %2771 = vmatpush1.bf16.xpose.msra.mxu0 0
    %2772 = vmatprep.subr.bf16.mxu0 0
    %2773 = vmatpush1.bf16.xpose.msra.mxu0 0
    %2774 = vmatprep.subr.bf16.mxu0 0
    %2775 = vmatpush1.bf16.xpose.msra.mxu0 0
    %2776 = vmatprep.subr.bf16.mxu0 0
    %2777 = vmatpush1.bf16.xpose.msra.mxu0 0
    %2778 = vmatprep.subr.bf16.mxu0 0
    %2779 = vmatpush1.bf16.xpose.msra.mxu0 0
    %2780 = vmatprep.subr.bf16.mxu0 0
    %2781 = vmatpush1.bf16.xpose.msra.mxu0 0
    %2782 = vmatprep.subr.bf16.mxu0 0
    %2783 = vmatpush1.bf16.xpose.msra.mxu0 0
    %2784 = vmatprep.subr.bf16.mxu0 0
    %2785 = vmatpush1.bf16.xpose.msra.mxu0 0
    %2786 = vmatprep.subr.bf16.mxu0 0
    %2787 = vmatpush1.bf16.xpose.msra.mxu0 0
    %2788 = vmatprep.subr.bf16.mxu0 0
    %2789 = vmatpush1.bf16.xpose.msra.mxu0 0
    %2790 = vmatprep.subr.bf16.mxu0 0
    %2791 = vmatpush1.bf16.xpose.msra.mxu0 0
    %2792 = vmatprep.mubr.bf16.mxu0 0
    %2793 = vmatmul.mubr.bf16.gmra.mrb[0].mxu0 %v2755
    %v2794 = vpop.f32.mrb[0].mxu0
    %v2795 = vadd.f32 0.0, %v2794
    %v2796 = vpop.f32.mrb[0].mxu0
    %v2797 = vpop.f32.mrb[0].mxu0
    %v2798 = vpop.f32.mrb[0].mxu0
    %2799 = vdwg.mxu0
    %v2800 = vmul.f32 %v2795, 0.25
    %v2801 = vadd.f32 %v2800, %v1028
    %v2802 = vsel %vm378, %v2801, -inf
    %2803 = vmax.xlane.f32.xlu0 %v2802
    %v2804 = vpop.xlane.xlu0 %2803
    %v2805 = vsub.f32 %v2801, %v2804
    %v2806 = vmul.f32 %v2805, 1.442695
    %v2807 = vpow.pop %v2806
    %v2808 = vsel %vm378, %v2807, 0.0
    %2809 = vadd.xlane.f32.xlu0 %v2808
    %v2810 = vpop.xlane.xlu0 %2809
    %v2811 = vrcp.pop %v2810
    %v2812 = vmul.f32 %v2807, %v2811
    %v2813 = vpack.c.bf16 %v2812, %v2812
    %v2815 = vsel %vm378, %v2813, 0
    %v2818 = vsel %vm394, %v2751, 0
    %2820 = vmatprep.subr.bf16.mxu0 0
    %2821 = vmatpush1.bf16.msra.mxu0 %v2818
    %2822 = vmatprep.subr.bf16.mxu0 0
    %2823 = vmatpush1.bf16.msra.mxu0 0
    %2824 = vmatprep.subr.bf16.mxu0 0
    %2825 = vmatpush1.bf16.msra.mxu0 0
    %2826 = vmatprep.subr.bf16.mxu0 0
    %2827 = vmatpush1.bf16.msra.mxu0 0
    %2828 = vmatprep.subr.bf16.mxu0 0
    %2829 = vmatpush1.bf16.msra.mxu0 0
    %2830 = vmatprep.subr.bf16.mxu0 0
    %2831 = vmatpush1.bf16.msra.mxu0 0
    %2832 = vmatprep.subr.bf16.mxu0 0
    %2833 = vmatpush1.bf16.msra.mxu0 0
    %2834 = vmatprep.subr.bf16.mxu0 0
    %2835 = vmatpush1.bf16.msra.mxu0 0
    %2836 = vmatprep.subr.bf16.mxu0 0
    %2837 = vmatpush1.bf16.msra.mxu0 0
    %2838 = vmatprep.subr.bf16.mxu0 0
    %2839 = vmatpush1.bf16.msra.mxu0 0
    %2840 = vmatprep.subr.bf16.mxu0 0
    %2841 = vmatpush1.bf16.msra.mxu0 0
    %2842 = vmatprep.subr.bf16.mxu0 0
    %2843 = vmatpush1.bf16.msra.mxu0 0
    %2844 = vmatprep.subr.bf16.mxu0 0
    %2845 = vmatpush1.bf16.msra.mxu0 0
    %2846 = vmatprep.subr.bf16.mxu0 0
    %2847 = vmatpush1.bf16.msra.mxu0 0
    %2848 = vmatprep.subr.bf16.mxu0 0
    %2849 = vmatpush1.bf16.msra.mxu0 0
    %2850 = vmatprep.subr.bf16.mxu0 0
    %2851 = vmatpush1.bf16.msra.mxu0 0
    %2852 = vmatprep.mubr.bf16.mxu0 0
    %2853 = vmatmul.mubr.bf16.gmra.mrb[0].mxu0 %v2815
    %v2854 = vpop.f32.mrb[0].mxu0
    %v2855 = vadd.f32 0.0, %v2854
    %v2856 = vpop.f32.mrb[0].mxu0
    %v2857 = vpop.f32.mrb[0].mxu0
    %v2858 = vpop.f32.mrb[0].mxu0
    %2859 = vdwg.mxu0
    %v2860 = vpack.c.bf16 %v2855, %v2855
    %v2862 = vsel %vm323, %v2860, 0
    %2864 = vmatprep.subr.bf16.mxu0 0
    %2865 = vmatpush1.bf16.msra.mxu0 %v2302
    %2866 = vmatprep.subr.bf16.mxu0 0
    %2867 = vmatpush1.bf16.msra.mxu0 0
    %2868 = vmatprep.subr.bf16.mxu0 0
    %2869 = vmatpush1.bf16.msra.mxu0 0
    %2870 = vmatprep.subr.bf16.mxu0 0
    %2871 = vmatpush1.bf16.msra.mxu0 0
    %2872 = vmatprep.subr.bf16.mxu0 0
    %2873 = vmatpush1.bf16.msra.mxu0 0
    %2874 = vmatprep.subr.bf16.mxu0 0
    %2875 = vmatpush1.bf16.msra.mxu0 0
    %2876 = vmatprep.subr.bf16.mxu0 0
    %2877 = vmatpush1.bf16.msra.mxu0 0
    %2878 = vmatprep.subr.bf16.mxu0 0
    %2879 = vmatpush1.bf16.msra.mxu0 0
    %2880 = vmatprep.subr.bf16.mxu0 0
    %2881 = vmatpush1.bf16.msra.mxu0 0
    %2882 = vmatprep.subr.bf16.mxu0 0
    %2883 = vmatpush1.bf16.msra.mxu0 0
    %2884 = vmatprep.subr.bf16.mxu0 0
    %2885 = vmatpush1.bf16.msra.mxu0 0
    %2886 = vmatprep.subr.bf16.mxu0 0
    %2887 = vmatpush1.bf16.msra.mxu0 0
    %2888 = vmatprep.subr.bf16.mxu0 0
    %2889 = vmatpush1.bf16.msra.mxu0 0
    %2890 = vmatprep.subr.bf16.mxu0 0
    %2891 = vmatpush1.bf16.msra.mxu0 0
    %2892 = vmatprep.subr.bf16.mxu0 0
    %2893 = vmatpush1.bf16.msra.mxu0 0
    %2894 = vmatprep.subr.bf16.mxu0 0
    %2895 = vmatpush1.bf16.msra.mxu0 0
    %2896 = vmatprep.mubr.bf16.mxu0 0
    %2897 = vmatmul.mubr.bf16.gmra.mrb[0].mxu0 %v2862
    %v2898 = vpop.f32.mrb[0].mxu0
    %v2899 = vadd.f32 0.0, %v2898
    %v2900 = vpop.f32.mrb[0].mxu0
    %v2901 = vpop.f32.mrb[0].mxu0
    %v2902 = vpop.f32.mrb[0].mxu0
    %2903 = vdwg.mxu0
    %v2905 = vsel %vm323, %v2630, 0
    %2907 = vmatprep.subr.bf16.mxu0 0
    %2908 = vmatpush1.bf16.msra.mxu0 %v2351
    %2909 = vmatprep.subr.bf16.mxu0 0
    %2910 = vmatpush1.bf16.msra.mxu0 0
    %2911 = vmatprep.subr.bf16.mxu0 0
    %2912 = vmatpush1.bf16.msra.mxu0 0
    %2913 = vmatprep.subr.bf16.mxu0 0
    %2914 = vmatpush1.bf16.msra.mxu0 0
    %2915 = vmatprep.subr.bf16.mxu0 0
    %2916 = vmatpush1.bf16.msra.mxu0 0
    %2917 = vmatprep.subr.bf16.mxu0 0
    %2918 = vmatpush1.bf16.msra.mxu0 0
    %2919 = vmatprep.subr.bf16.mxu0 0
    %2920 = vmatpush1.bf16.msra.mxu0 0
    %2921 = vmatprep.subr.bf16.mxu0 0
    %2922 = vmatpush1.bf16.msra.mxu0 0
    %2923 = vmatprep.subr.bf16.mxu0 0
    %2924 = vmatpush1.bf16.msra.mxu0 0
    %2925 = vmatprep.subr.bf16.mxu0 0
    %2926 = vmatpush1.bf16.msra.mxu0 0
    %2927 = vmatprep.subr.bf16.mxu0 0
    %2928 = vmatpush1.bf16.msra.mxu0 0
    %2929 = vmatprep.subr.bf16.mxu0 0
    %2930 = vmatpush1.bf16.msra.mxu0 0
    %2931 = vmatprep.subr.bf16.mxu0 0
    %2932 = vmatpush1.bf16.msra.mxu0 0
    %2933 = vmatprep.subr.bf16.mxu0 0
    %2934 = vmatpush1.bf16.msra.mxu0 0
    %2935 = vmatprep.subr.bf16.mxu0 0
    %2936 = vmatpush1.bf16.msra.mxu0 0
    %2937 = vmatprep.subr.bf16.mxu0 0
    %2938 = vmatpush1.bf16.msra.mxu0 0
    %2939 = vmatprep.mubr.bf16.mxu0 0
    %2940 = vmatmul.mubr.bf16.gmra.mrb[0].mxu0 %v2905
    %v2941 = vpop.f32.mrb[0].mxu0
    %v2942 = vadd.f32 %v2899, %v2941
    %v2943 = vpop.f32.mrb[0].mxu0
    %v2944 = vpop.f32.mrb[0].mxu0
    %v2945 = vpop.f32.mrb[0].mxu0
    %2946 = vdwg.mxu0
    %s2947 = scalar_lea.vmem %s11, 1
    %v2948 = vld [vmem:[%s2947] sm:$0x1]
    %v2950 = vlaneseq
    %v2951 = vshrl.u32 %v2950, 7
    %v2952 = vsub.s32 0, %v2951
    %v2953 = vrot.slane %v2948, %v2952
    %v2955 = vadd.f32 %v2391, %v2953
    %v2956 = vadd.f32 %v2942, %v2953
    %v2957 = vadd.f32 %v1676, %v2955
    %v2958 = vadd.f32 %v1677, %v2956
    %s2959 = scalar_lea.vmem %s12, 1
    %v2960 = vld [vmem:[%s2959] sm:$0x1]
    %s2961 = scalar_lea.vmem %s13, 1
    %v2962 = vld [vmem:[%s2961] sm:$0x1]
    %v2963 = vsel %vm77, %v2957, 0.0
    %2964 = vadd.xlane.f32.xlu0 %v2963
    %v2965 = vpop.xlane.xlu0 %2964
    %v2966 = vsel %vm77, %v2958, 0.0
    %2967 = vadd.xlane.f32.xlu0 %v2966
    %v2968 = vpop.xlane.xlu0 %2967
    %v2969 = vmul.f32 %v2965, %v84
    %v2970 = vmul.f32 %v2968, %v84
    %v2971 = vsub.f32 %v2957, %v2969
    %v2972 = vsub.f32 %v2958, %v2970
    %v2973 = vmul.f32 %v2971, %v2971
    %v2974 = vmul.f32 %v2972, %v2972
    %v2975 = vsel %vm77, %v2973, 0.0
    %2976 = vadd.xlane.f32.xlu0 %v2975
    %v2977 = vpop.xlane.xlu0 %2976
    %v2978 = vsel %vm77, %v2974, 0.0
    %2979 = vadd.xlane.f32.xlu0 %v2978
    %v2980 = vpop.xlane.xlu0 %2979
    %v2981 = vmul.f32 %v2977, %v84
    %v2982 = vmul.f32 %v2980, %v84
    %v2983 = vadd.f32 %v2981, 1e-12
    %v2984 = vadd.f32 %v2982, 1e-12
    %v2985 = vrsqrt.pop %v2983
    %v2986 = vrsqrt.pop %v2984
    %v2987 = vmul.f32 %v2971, %v2985
    %v2988 = vmul.f32 %v2972, %v2986
    %v2990 = vlaneseq
    %v2991 = vshrl.u32 %v2990, 7
    %v2992 = vsub.s32 0, %v2991
    %v2993 = vrot.slane %v2960, %v2992
    %v2995 = vmul.f32 %v2987, %v2993
    %v2996 = vmul.f32 %v2988, %v2993
    %v2998 = vlaneseq
    %v2999 = vshrl.u32 %v2998, 7
    %v3000 = vsub.s32 0, %v2999
    %v3001 = vrot.slane %v2962, %v3000
    %v3003 = vadd.f32 %v2995, %v3001
    %v3004 = vadd.f32 %v2996, %v3001
    %v3005 = vpack.c.bf16 %v3004, %v3003
    %s3006 = scalar_lea.vmem %s14, 16
    %v3007 = vld [vmem:[%s3006] sm:$0xf]
    %v3008 = vld [vmem:[%s3006 + $0x4] sm:$0xf]
    %v3009 = vld [vmem:[%s3006 + $0x8] sm:$0xf]
    %v3010 = vld [vmem:[%s3006 + $0xc] sm:$0xf]
    %s3011 = scalar_lea.vmem %s15, 1
    %v3012 = vld [vmem:[%s3011] sm:$0x1]
    %v3014 = vlaneseq
    %v3015 = vshrl.u32 %v3014, 7
    %v3016 = vsub.s32 0, %v3015
    %v3017 = vrot.slane %v3012, %v3016
    %v3023 = vunpack.c.l.b16 %v3007
    %v3024 = vunpack.c.l.b16 %v3008
    %v3025 = vunpack.c.l.b16 %v3009
    %v3026 = vunpack.c.l.b16 %v3010
    %v3027 = vpack.c.b16 %v3024, %v3023
    %v3028 = vpack.c.b16 %v3026, %v3025
    %v3032 = vsel %vm77, %v3005, 0
    %3034 = vmatprep.subr.bf16.mxu0 0
    %3035 = vmatpush1.bf16.msra.mxu0 %v3027
    %3036 = vmatprep.subr.bf16.mxu0 0
    %3037 = vmatpush1.bf16.msra.mxu0 %v3028
    %3038 = vmatprep.subr.bf16.mxu0 0
    %3039 = vmatpush1.bf16.msra.mxu0 0
    %3040 = vmatprep.subr.bf16.mxu0 0
    %3041 = vmatpush1.bf16.msra.mxu0 0
    %3042 = vmatprep.subr.bf16.mxu0 0
    %3043 = vmatpush1.bf16.msra.mxu0 0
    %3044 = vmatprep.subr.bf16.mxu0 0
    %3045 = vmatpush1.bf16.msra.mxu0 0
    %3046 = vmatprep.subr.bf16.mxu0 0
    %3047 = vmatpush1.bf16.msra.mxu0 0
    %3048 = vmatprep.subr.bf16.mxu0 0
    %3049 = vmatpush1.bf16.msra.mxu0 0
    %3050 = vmatprep.subr.bf16.mxu0 0
    %3051 = vmatpush1.bf16.msra.mxu0 0
    %3052 = vmatprep.subr.bf16.mxu0 0
    %3053 = vmatpush1.bf16.msra.mxu0 0
    %3054 = vmatprep.subr.bf16.mxu0 0
    %3055 = vmatpush1.bf16.msra.mxu0 0
    %3056 = vmatprep.subr.bf16.mxu0 0
    %3057 = vmatpush1.bf16.msra.mxu0 0
    %3058 = vmatprep.subr.bf16.mxu0 0
    %3059 = vmatpush1.bf16.msra.mxu0 0
    %3060 = vmatprep.subr.bf16.mxu0 0
    %3061 = vmatpush1.bf16.msra.mxu0 0
    %3062 = vmatprep.subr.bf16.mxu0 0
    %3063 = vmatpush1.bf16.msra.mxu0 0
    %3064 = vmatprep.subr.bf16.mxu0 0
    %3065 = vmatpush1.bf16.msra.mxu0 0
    %3066 = vmatprep.mubr.bf16.mxu0 0
    %3067 = vmatmul.mubr.bf16.gmra.mrb[0].mxu0 %v3032
    %v3068 = vpop.f32.mrb[0].mxu0
    %v3069 = vadd.f32 %v3017, %v3068
    %v3070 = vpop.f32.mrb[0].mxu0
    %v3071 = vpop.f32.mrb[0].mxu0
    %v3072 = vadd.f32 %v3017, %v3071
    %v3073 = vpop.f32.mrb[0].mxu0
    %3074 = vdwg.mxu0
    %v3075 = vmul.f32 %v3069, %v3069
    %v3076 = vmul.f32 %v3072, %v3072
    %v3077 = vmul.f32 %v3069, %v3075
    %v3078 = vmul.f32 %v3072, %v3076
    %v3079 = vmul.f32 %v3077, 0.044715
    %v3080 = vmul.f32 %v3078, 0.044715
    %v3081 = vadd.f32 %v3069, %v3079
    %v3082 = vadd.f32 %v3072, %v3080
    %v3083 = vmul.f32 %v3081, 0.7978846
    %v3084 = vmul.f32 %v3082, 0.7978846
    %v3085 = vtanh.pop %v3083
    %v3086 = vtanh.pop %v3084
    %v3087 = vadd.f32 %v3085, 1.0
    %v3088 = vadd.f32 %v3086, 1.0
    %v3089 = vmul.f32 %v3087, 0.5
    %v3090 = vmul.f32 %v3088, 0.5
    %v3091 = vmul.f32 %v3069, %v3089
    %v3092 = vmul.f32 %v3072, %v3090
    %v3093 = vpack.c.bf16 %v3092, %v3091
    %s3094 = scalar_lea.vmem %s16, 32
    %v3095 = vld [vmem:[%s3094] sm:$0xf]
    %v3096 = vld [vmem:[%s3094 + $0x4] sm:$0xf]
    %v3097 = vld [vmem:[%s3094 + $0x8] sm:$0xf]
    %v3098 = vld [vmem:[%s3094 + $0xc] sm:$0xf]
    %v3099 = vld [vmem:[%s3094 + $0x10] sm:$0xf]
    %v3100 = vld [vmem:[%s3094 + $0x14] sm:$0xf]
    %v3101 = vld [vmem:[%s3094 + $0x18] sm:$0xf]
    %v3102 = vld [vmem:[%s3094 + $0x1c] sm:$0xf]
    %s3103 = scalar_lea.vmem %s17, 1
    %v3104 = vld [vmem:[%s3103] sm:$0x1]
    %v3106 = vlaneseq
    %v3107 = vshrl.u32 %v3106, 7
    %v3108 = vsub.s32 0, %v3107
    %v3109 = vrot.slane %v3104, %v3108
    %v3119 = vunpack.c.l.b16 %v3095
    %v3120 = vunpack.c.l.b16 %v3096
    %v3121 = vunpack.c.l.b16 %v3097
    %v3122 = vunpack.c.l.b16 %v3098
    %v3123 = vunpack.c.l.b16 %v3099
    %v3124 = vunpack.c.l.b16 %v3100
    %v3125 = vunpack.c.l.b16 %v3101
    %v3126 = vunpack.c.l.b16 %v3102
    %v3127 = vpack.c.b16 %v3120, %v3119
    %v3128 = vpack.c.b16 %v3122, %v3121
    %v3129 = vpack.c.b16 %v3124, %v3123
    %v3130 = vpack.c.b16 %v3126, %v3125
    %v3136 = vsel %vm1587, %v3093, 0
    %3138 = vmatprep.subr.bf16.mxu0 0
    %3139 = vmatpush1.bf16.msra.mxu0 %v3127
    %3140 = vmatprep.subr.bf16.mxu0 0
    %3141 = vmatpush1.bf16.msra.mxu0 %v3128
    %3142 = vmatprep.subr.bf16.mxu0 0
    %3143 = vmatpush1.bf16.msra.mxu0 %v3129
    %3144 = vmatprep.subr.bf16.mxu0 0
    %3145 = vmatpush1.bf16.msra.mxu0 %v3130
    %3146 = vmatprep.subr.bf16.mxu0 0
    %3147 = vmatpush1.bf16.msra.mxu0 0
    %3148 = vmatprep.subr.bf16.mxu0 0
    %3149 = vmatpush1.bf16.msra.mxu0 0
    %3150 = vmatprep.subr.bf16.mxu0 0
    %3151 = vmatpush1.bf16.msra.mxu0 0
    %3152 = vmatprep.subr.bf16.mxu0 0
    %3153 = vmatpush1.bf16.msra.mxu0 0
    %3154 = vmatprep.subr.bf16.mxu0 0
    %3155 = vmatpush1.bf16.msra.mxu0 0
    %3156 = vmatprep.subr.bf16.mxu0 0
    %3157 = vmatpush1.bf16.msra.mxu0 0
    %3158 = vmatprep.subr.bf16.mxu0 0
    %3159 = vmatpush1.bf16.msra.mxu0 0
    %3160 = vmatprep.subr.bf16.mxu0 0
    %3161 = vmatpush1.bf16.msra.mxu0 0
    %3162 = vmatprep.subr.bf16.mxu0 0
    %3163 = vmatpush1.bf16.msra.mxu0 0
    %3164 = vmatprep.subr.bf16.mxu0 0
    %3165 = vmatpush1.bf16.msra.mxu0 0
    %3166 = vmatprep.subr.bf16.mxu0 0
    %3167 = vmatpush1.bf16.msra.mxu0 0
    %3168 = vmatprep.subr.bf16.mxu0 0
    %3169 = vmatpush1.bf16.msra.mxu0 0
    %3170 = vmatprep.mubr.bf16.mxu0 0
    %3171 = vmatmul.mubr.bf16.gmra.mrb[0].mxu0 %v3136
    %v3172 = vpop.f32.mrb[0].mxu0
    %v3173 = vadd.f32 %v3109, %v3172
    %v3174 = vpop.f32.mrb[0].mxu0
    %v3175 = vpop.f32.mrb[0].mxu0
    %v3176 = vadd.f32 %v3109, %v3175
    %v3177 = vpop.f32.mrb[0].mxu0
    %3178 = vdwg.mxu0
    %v3179 = vadd.f32 %v3003, %v3173
    %v3180 = vadd.f32 %v3004, %v3176
    %s3181 = scalar_lea.vmem %s18, 1
    %v3182 = vld [vmem:[%s3181] sm:$0x1]
    %s3183 = scalar_lea.vmem %s19, 1
    %v3184 = vld [vmem:[%s3183] sm:$0x1]
    %v3185 = vsel %vm77, %v3179, 0.0
    %3186 = vadd.xlane.f32.xlu0 %v3185
    %v3187 = vpop.xlane.xlu0 %3186
    %v3188 = vsel %vm77, %v3180, 0.0
    %3189 = vadd.xlane.f32.xlu0 %v3188
    %v3190 = vpop.xlane.xlu0 %3189
    %v3191 = vmul.f32 %v3187, %v84
    %v3192 = vmul.f32 %v3190, %v84
    %v3193 = vsub.f32 %v3179, %v3191
    %v3194 = vsub.f32 %v3180, %v3192
    %v3195 = vmul.f32 %v3193, %v3193
    %v3196 = vmul.f32 %v3194, %v3194
    %v3197 = vsel %vm77, %v3195, 0.0
    %3198 = vadd.xlane.f32.xlu0 %v3197
    %v3199 = vpop.xlane.xlu0 %3198
    %v3200 = vsel %vm77, %v3196, 0.0
    %3201 = vadd.xlane.f32.xlu0 %v3200
    %v3202 = vpop.xlane.xlu0 %3201
    %v3203 = vmul.f32 %v3199, %v84
    %v3204 = vmul.f32 %v3202, %v84
    %v3205 = vadd.f32 %v3203, 1e-12
    %v3206 = vadd.f32 %v3204, 1e-12
    %v3207 = vrsqrt.pop %v3205
    %v3208 = vrsqrt.pop %v3206
    %v3209 = vmul.f32 %v3193, %v3207
    %v3210 = vmul.f32 %v3194, %v3208
    %v3212 = vlaneseq
    %v3213 = vshrl.u32 %v3212, 7
    %v3214 = vsub.s32 0, %v3213
    %v3215 = vrot.slane %v3182, %v3214
    %v3217 = vmul.f32 %v3209, %v3215
    %v3218 = vmul.f32 %v3210, %v3215
    %v3220 = vlaneseq
    %v3221 = vshrl.u32 %v3220, 7
    %v3222 = vsub.s32 0, %v3221
    %v3223 = vrot.slane %v3184, %v3222
    %v3225 = vadd.f32 %v3217, %v3223
    %v3226 = vadd.f32 %v3218, %v3223
    %v3228 = vrot.slane %v3226, 7
    %vm3230 = vcmask 1040384
    %v3231 = vsel %vm3230, %v3225, %v3228
    %v3232 = vld [vmem:[%s20] sm:$0xff]
    %v3233 = vld [vmem:[%s20 + $0x8] sm:$0xff]
    %v3234 = vld [vmem:[%s20 + $0x10] sm:$0xff]
    %v3235 = vld [vmem:[%s20 + $0x18] sm:$0xff]
    %v3236 = vld [vmem:[%s21] sm:$0x1]
    %v3238 = vlaneseq
    %v3239 = vshrl.u32 %v3238, 7
    %v3240 = vsub.s32 0, %v3239
    %v3241 = vrot.slane %v3236, %v3240
    %v3244 = vsel %vm77, %v3231, 0
    %3246 = vmatprep.subr.mxu0 0.0
    %3247 = vmatpush1.msra.mxu0 %v3232
    %3248 = vmatprep.subr.mxu0 0.0
    %3249 = vmatpush1.msra.mxu0 %v3233
    %3250 = vmatprep.subr.mxu0 0.0
    %3251 = vmatpush1.msra.mxu0 %v3234
    %3252 = vmatprep.subr.mxu0 0.0
    %3253 = vmatpush1.msra.mxu0 %v3235
    %3254 = vmatprep.subr.mxu0 0.0
    %3255 = vmatpush1.msra.mxu0 0.0
    %3256 = vmatprep.subr.mxu0 0.0
    %3257 = vmatpush1.msra.mxu0 0.0
    %3258 = vmatprep.subr.mxu0 0.0
    %3259 = vmatpush1.msra.mxu0 0.0
    %3260 = vmatprep.subr.mxu0 0.0
    %3261 = vmatpush1.msra.mxu0 0.0
    %3262 = vmatprep.subr.mxu0 0.0
    %3263 = vmatpush1.msra.mxu0 0.0
    %3264 = vmatprep.subr.mxu0 0.0
    %3265 = vmatpush1.msra.mxu0 0.0
    %3266 = vmatprep.subr.mxu0 0.0
    %3267 = vmatpush1.msra.mxu0 0.0
    %3268 = vmatprep.subr.mxu0 0.0
    %3269 = vmatpush1.msra.mxu0 0.0
    %3270 = vmatprep.subr.mxu0 0.0
    %3271 = vmatpush1.msra.mxu0 0.0
    %3272 = vmatprep.subr.mxu0 0.0
    %3273 = vmatpush1.msra.mxu0 0.0
    %3274 = vmatprep.subr.mxu0 0.0
    %3275 = vmatpush1.msra.mxu0 0.0
    %3276 = vmatprep.subr.mxu0 0.0
    %3277 = vmatpush1.msra.mxu0 0.0
    %3278 = vmatprep.subr.mxu0 0.0
    %3279 = vmatpush1.msra.mxu0 0.0
    %3280 = vmatprep.subr.mxu0 0.0
    %3281 = vmatpush1.msra.mxu0 0.0
    %3282 = vmatprep.subr.mxu0 0.0
    %3283 = vmatpush1.msra.mxu0 0.0
    %3284 = vmatprep.subr.mxu0 0.0
    %3285 = vmatpush1.msra.mxu0 0.0
    %3286 = vmatprep.subr.mxu0 0.0
    %3287 = vmatpush1.msra.mxu0 0.0
    %3288 = vmatprep.subr.mxu0 0.0
    %3289 = vmatpush1.msra.mxu0 0.0
    %3290 = vmatprep.subr.mxu0 0.0
    %3291 = vmatpush1.msra.mxu0 0.0
    %3292 = vmatprep.subr.mxu0 0.0
    %3293 = vmatpush1.msra.mxu0 0.0
    %3294 = vmatprep.subr.mxu0 0.0
    %3295 = vmatpush1.msra.mxu0 0.0
    %3296 = vmatprep.subr.mxu0 0.0
    %3297 = vmatpush1.msra.mxu0 0.0
    %3298 = vmatprep.subr.mxu0 0.0
    %3299 = vmatpush1.msra.mxu0 0.0
    %3300 = vmatprep.subr.mxu0 0.0
    %3301 = vmatpush1.msra.mxu0 0.0
    %3302 = vmatprep.subr.mxu0 0.0
    %3303 = vmatpush1.msra.mxu0 0.0
    %3304 = vmatprep.subr.mxu0 0.0
    %3305 = vmatpush1.msra.mxu0 0.0
    %3306 = vmatprep.subr.mxu0 0.0
    %3307 = vmatpush1.msra.mxu0 0.0
    %3308 = vmatprep.subr.mxu0 0.0
    %3309 = vmatpush1.msra.mxu0 0.0
    %3310 = vmatprep.mubr.f32.mxu0 0.0
    %3311 = vmatmul.mubr.f32.gmra.mrb[0].mxu0 %v3244
    %v3312 = vpop.f32.mrb[0].mxu0
    %v3313 = vadd.f32 %v3241, %v3312
    %v3314 = vpop.f32.mrb[0].mxu0
    %3315 = vdwg.mxu0
    %vm3316 = vcmask 9216
    %3317 = vst.msk [vmem:[#allocation2] sm:$0x3] %vm3316, %v3313
    // Predicated region
    $region90: #{bert_pairwise_cls_forward.1} parent=1 // pred_check
      _
    $region91: #{bert_pairwise_cls_forward.1} parent=1 // pred_check_branch
      %3319 = sbr.rel (0) target = $region93
    $region92: #{bert_pairwise_cls_forward.1} parent=1 // pred_region
      %s3321 = ssub.s32 32, 32
      %3322 = vsyncadd [#allocation3], %s3321
      %s3324 = sshll.u32 [#allocation2], 4
      %s3325 = int_to_ptr.vmem [resolvable:$true] %s3324
      %3327 = dma.vmem_to_hbm [thread:$0]  %s3325, 32, %s22, [#allocation3]
    $region93: #{bert_pairwise_cls_forward.1} parent=1 // pred_fallthru
      _
    // Predicated region
    $region94: #{bert_pairwise_cls_forward.1} parent=1 // pred_check
      _
    $region95: #{bert_pairwise_cls_forward.1} parent=1 // pred_check_branch
      %3329 = sbr.rel (0) target = $region97
    $region96: #{bert_pairwise_cls_forward.1} parent=1 // pred_region
      %3330 = dma.done [#allocation3], 32
    $region97: #{bert_pairwise_cls_forward.1} parent=1 // pred_fallthru
      _
    %3331 = vsyncpa [#allocation3], 1

</llo_original>
